<compile_context>
chip_gen: v7x
topology: tpu7x:2x2x1
jax: 0.10.0
libtpu: 0.0.40
codegen_flags: <defaults>
</compile_context>

<pallas_src>
import functools

import jax
import jax.numpy as jnp
from jax import lax
from jax.experimental import pallas as pl
from jax.experimental.pallas import tpu as pltpu


def decoder_kernel(enc_ref, w1hc_ref, w1e_ref, b1_ref, w2_ref,
                   wih_ref, whh_ref, blstm_ref,
                   wfc_ctx_ref, wff_h_ref, wff_ctx_ref,
                   wfc_y_ref, bfc_ref, bff_ref,
                   out_ref, *, skip_softmax_max, attn_tanh_dtype):
    enc = enc_ref[...]                       # (B, T, E) batch block
    B, T, E = enc.shape
    D = whh_ref.shape[0]

    # Only tiny (<= 1 vreg) operands are hoisted.  The two large weights
    # (w1hc: 32 vregs, whh: 64 vregs) are read at their point of use inside
    # step() to keep vreg pressure / spills down under the full T unroll.
    w2b = w2_ref[...].reshape(1, 1, E)       # (1, 1, E) attn Linear2 (E -> 1)
    wih = wih_ref[...]                       # (1, 4D)   LSTM input weights (input dim 1)
    blstm = blstm_ref[...]                   # (1, 4D)   b_ih + b_hh
    wfc_ctx = wfc_ctx_ref[...]               # (1, E)    fc weight, context part
    wfc_y = wfc_y_ref[0]                     # fc weight, y_tilde part (SMEM scalar)
    bfc = bfc_ref[0]                         # fc bias (SMEM scalar)

    # Loop-invariant attention term (computed once): enc @ W1_enc + b1.
    enc2d = enc.reshape(B * T, E)
    enc_part = (jnp.dot(enc2d, w1e_ref[...], preferred_element_type=jnp.float32)
                .reshape(B, T, E)
                + b1_ref[...].reshape(1, 1, E))                                  # (B, T, E)

    def step(_, carry):
        hidden, cell, context, y_tilde = carry

        # LSTM recurrent matmul depends only on the carried hidden -> issue it
        # first so the MXU push overlaps the attention tanh/softmax chain.
        g_h = jnp.dot(hidden, whh_ref[...],
                      preferred_element_type=jnp.float32)                        # (B, 4D)

        # attn_layer Linear1 on cat(hidden, cell) -- single fused K=2D matmul,
        # weight streamed from VMEM (not held live across the unrolled loop).
        hc = jnp.dot(jnp.concatenate([hidden, cell], axis=1), w1hc_ref[...],
                     preferred_element_type=jnp.float32)                         # (B, E)

        # Dominant transcendental block: (B,T,E) tanh (bf16 on v6e/v7x).
        zin = hc[:, None, :] + enc_part
        z = jnp.tanh(zin.astype(attn_tanh_dtype)).astype(jnp.float32)            # (B, T, E)
        # attn Linear2; its bias b2 is omitted (constant shift cancels in softmax).
        score = jnp.sum(z * w2b, axis=2)                                         # (B, T)

        # softmax over T.  z is tanh-bounded so |score| <= ||w2||_1; when that
        # bound is small (checked in the wrapper) the max-subtract is skipped.
        if skip_softmax_max:
            e = jnp.exp(score)
        else:
            e = jnp.exp(score - jnp.max(score, axis=1, keepdims=True))
        attn = e * pl.reciprocal(jnp.sum(e, axis=1, keepdims=True), approx=True)

        # context = bmm(attn, enc)
        context = jnp.sum(attn[:, :, None] * enc, axis=1)                        # (B, E)

        # y_tilde = fc(cat(context, y_tilde))   (fc_dropout is identity, p=0)
        y_tilde = (jnp.sum(context * wfc_ctx, axis=1, keepdims=True)
                   + y_tilde * wfc_y + bfc)                                      # (B, 1)

        # single-step LSTM (PyTorch gate order: i, f, g, o).
        gates = y_tilde * wih + g_h + blstm                                      # (B, 4D)
        i_g = jax.nn.sigmoid(gates[:, 0:D])
        f_g = jax.nn.sigmoid(gates[:, D:2 * D])
        g_g = jnp.tanh(gates[:, 2 * D:3 * D])
        o_g = jax.nn.sigmoid(gates[:, 3 * D:4 * D])
        cell = f_g * cell + i_g * g_g
        hidden = o_g * jnp.tanh(cell)
        return hidden, cell, context, y_tilde

    init = (jnp.zeros((B, D), jnp.float32), jnp.zeros((B, D), jnp.float32),
            jnp.zeros((B, E), jnp.float32), jnp.zeros((B, 1), jnp.float32))
    # T is a short static trip count: fully unroll for LLO scheduler visibility.
    hidden, cell, context, y_tilde = lax.fori_loop(0, T, step, init, unroll=True)

    # fc_final(cat(hidden[0], context))   (fc_final_dropout is identity, p=0)
    out = (jnp.sum(hidden * wff_h_ref[...], axis=1, keepdims=True)
           + jnp.sum(context * wff_ctx_ref[...], axis=1, keepdims=True)
           + bff_ref[0])                                                         # (B, 1)
    out_ref[...] = out.astype(out_ref.dtype)


def _attn_tanh_dtype():
    """bf16 tanh only where the EUP supports bf16 (v6e / v7x); f32 elsewhere."""
    try:
        kind = jax.devices()[0].device_kind.lower()
    except Exception:
        return jnp.float32
    if any(tag in kind for tag in ("v6", "v7", "7x")):
        return jnp.bfloat16
    return jnp.float32


def decoder_forward(input_encoded, params):
    (w1h, w1c, w1e, b1, w2, b2, wih, whh, blstm,
     wfc_ctx, wfc_y, bfc, wff_h, wff_ctx, bff) = params
    del b2  # uniform shift before softmax -- exactly cancels, not needed in-kernel
    B, T, E = input_encoded.shape

    # Fuse the hidden/cell halves of attn Linear1 into one (2D, E) weight so the
    # per-step attention matmul is a single K=2D MXU push.
    w1hc = jnp.concatenate([w1h, w1c], axis=0)

    # Softmax max-subtract can be skipped iff exp(score) cannot overflow f32:
    # z is tanh-bounded, so |score| <= ||w2||_1.  Fall back if the weights are
    # traced (e.g. under jit) or the bound is large.
    try:
        skip_softmax_max = float(jnp.sum(jnp.abs(w2))) < 60.0
    except Exception:
        skip_softmax_max = False

    attn_tanh_dtype = _attn_tanh_dtype()

    # Batch-parallel grid: 2 blocks when B >= 16 (uses both TCs on v7x via
    # dimension_semantics=("parallel",)); single block otherwise (at B=8 a
    # split would just under-fill the 8-sublane f32 tile).
    nb = 2 if (B >= 16 and B % 2 == 0 and (B // 2) % 8 == 0) else 1
    bb = B // nb

    vmem_weights = (w1hc, w1e, b1, w2, wih, whh, blstm, wfc_ctx, wff_h, wff_ctx)
    smem_args = (wfc_y.reshape(1), bfc.reshape(1), bff.reshape(1))

    whole_vmem = lambda: pl.BlockSpec(memory_space=pltpu.MemorySpace.VMEM)
    whole_smem = lambda: pl.BlockSpec(memory_space=pltpu.MemorySpace.SMEM)

    in_specs = ([pl.BlockSpec((bb, T, E), lambda i: (i, 0, 0))]
                + [whole_vmem() for _ in vmem_weights]
                + [whole_smem() for _ in smem_args])
    out_spec = pl.BlockSpec((bb, 1), lambda i: (i, 0))

    kernel = functools.partial(decoder_kernel,
                               skip_softmax_max=skip_softmax_max,
                               attn_tanh_dtype=attn_tanh_dtype)

    return pl.pallas_call(
        kernel,
        out_shape=jax.ShapeDtypeStruct((B, 1), jnp.float32),
        grid=(nb,),
        in_specs=in_specs,
        out_specs=out_spec,
        compiler_params=pltpu.CompilerParams(
            dimension_semantics=("parallel",)),
    )(input_encoded, *vmem_weights, *smem_args)


def decoder_ref(enc, params):
    """Plain-JAX reference mirroring the PyTorch forward (keeps b2)."""
    (w1h, w1c, w1e, b1, w2, b2, wih, whh, blstm,
     wfc_ctx, wfc_y, bfc, wff_h, wff_ctx, bff) = params
    B, T, E = enc.shape
    D = w1h.shape[0]
    hidden = jnp.zeros((B, D), jnp.float32)
    cell = jnp.zeros((B, D), jnp.float32)
    context = jnp.zeros((B, E), jnp.float32)
    y_tilde = jnp.zeros((B, 1), jnp.float32)
    for _ in range(T):
        hc = hidden @ w1h + cell @ w1c
        z = jnp.tanh(hc[:, None, :] + jnp.einsum('bte,ef->btf', enc, w1e) + b1[None])
        score = jnp.einsum('bte,e->bt', z, w2[0]) + b2[0, 0]
        attn = jax.nn.softmax(score, axis=1)
        context = jnp.einsum('bt,bte->be', attn, enc)
        y_tilde = context @ wfc_ctx[0][:, None] + y_tilde * wfc_y[0, 0] + bfc[0, 0]
        gates = y_tilde @ wih + hidden @ whh + blstm
        i = jax.nn.sigmoid(gates[:, :D])
        f = jax.nn.sigmoid(gates[:, D:2 * D])
        g = jnp.tanh(gates[:, 2 * D:3 * D])
        o = jax.nn.sigmoid(gates[:, 3 * D:])
        cell = f * cell + i * g
        hidden = o * jnp.tanh(cell)
    return hidden @ wff_h[0][:, None] + context @ wff_ctx[0][:, None] + bff[0, 0]


def make_params(key, E, D):
    # Deterministic synthetic initialization (shapes follow the PyTorch module).
    ks = jax.random.split(key, 15)
    n = lambda k, shape, scale: (scale * jax.random.normal(k, shape)).astype(jnp.float32)
    inv = lambda fan: 1.0 / jnp.sqrt(fan)
    w1h = n(ks[0], (D, E), inv(2 * D + E))      # attn Linear1 split: [hidden | cell | enc]
    w1c = n(ks[1], (D, E), inv(2 * D + E))
    w1e = n(ks[2], (E, E), inv(2 * D + E))
    b1 = n(ks[3], (1, E), inv(2 * D + E))
    w2 = n(ks[4], (1, E), inv(E))               # attn Linear2 (E -> 1)
    b2 = n(ks[5], (1, 1), inv(E))
    wih = n(ks[6], (1, 4 * D), inv(D))          # LSTM W_ih^T (input size 1)
    whh = n(ks[7], (D, 4 * D), inv(D))          # LSTM W_hh^T
    blstm = n(ks[8], (1, 4 * D), inv(D))        # b_ih + b_hh
    wfc_ctx = n(ks[9], (1, E), 1.0)             # fc.weight.data.normal_()
    wfc_y = n(ks[10], (1, 1), 1.0)
    bfc = n(ks[11], (1, 1), inv(E + 1))
    wff_h = n(ks[12], (1, D), inv(D + E))       # fc_final split: [hidden | context]
    wff_ctx = n(ks[13], (1, E), inv(D + E))
    bff = n(ks[14], (1, 1), inv(D + E))
    return (w1h, w1c, w1e, b1, w2, b2, wih, whh, blstm,
            wfc_ctx, wfc_y, bfc, wff_h, wff_ctx, bff)


def _check(out, ref, B):
    assert out.shape == (B, 1), out.shape
    assert bool(jnp.all(jnp.isfinite(out)))
    tol = 1e-2 * (1.0 + jnp.max(jnp.abs(ref)))
    assert bool(jnp.max(jnp.abs(out - ref)) < tol), "kernel/reference mismatch"


if __name__ == "__main__":
    T, E, D = 8, 128, 128   # time steps, encoder hidden, decoder hidden
    key = jax.random.PRNGKey(0)
    k_in, k_p, k_in2 = jax.random.split(key, 3)
    params = make_params(k_p, E, D)

    # B=8: single batch block (grid=(1,)).
    B = 8
    input_encoded = (0.1 * jax.random.normal(k_in, (B, T, E))).astype(jnp.float32)
    out = jax.block_until_ready(decoder_forward(input_encoded, params))
    _check(out, decoder_ref(input_encoded, params), B)

    # B=16: exercises the batch-parallel grid path (grid=(2,), "parallel").
    B2 = 16
    input_encoded2 = (0.1 * jax.random.normal(k_in2, (B2, T, E))).astype(jnp.float32)
    out2 = jax.block_until_ready(decoder_forward(input_encoded2, params))
    _check(out2, decoder_ref(input_encoded2, params), B2)

    print("KERNEL_OK")
</pallas_src>

<mosaic_0001>
module attributes {stable_mosaic.version = 11 : i64} {
  func.func @decoder_kernel(%arg0: i32, %arg1: memref<8x8x128xf32, #tpu.memory_space<vmem>>, %arg2: memref<256x128xf32, #tpu.memory_space<vmem>>, %arg3: memref<128x128xf32, #tpu.memory_space<vmem>>, %arg4: memref<1x128xf32, #tpu.memory_space<vmem>>, %arg5: memref<1x128xf32, #tpu.memory_space<vmem>>, %arg6: memref<1x512xf32, #tpu.memory_space<vmem>>, %arg7: memref<128x512xf32, #tpu.memory_space<vmem>>, %arg8: memref<1x512xf32, #tpu.memory_space<vmem>>, %arg9: memref<1x128xf32, #tpu.memory_space<vmem>>, %arg10: memref<1x128xf32, #tpu.memory_space<vmem>>, %arg11: memref<1x128xf32, #tpu.memory_space<vmem>>, %arg12: memref<1xf32, #tpu.memory_space<smem>>, %arg13: memref<1xf32, #tpu.memory_space<smem>>, %arg14: memref<1xf32, #tpu.memory_space<smem>>, %arg15: memref<8x1xf32, #tpu.memory_space<vmem>>) attributes {dimension_semantics = [#tpu.dimension_semantics<parallel>], iteration_bounds = array<i64: 1>, scalar_prefetch = 0 : i64, scratch_operands = 0 : i64, tpu.core_type = #tpu.core_type<tc>, window_params = [{transform_indices = @transform_0, window_bounds = array<i64: 8, 8, 128>}, {pipeline_mode = #tpu.pipeline_mode<synchronous>, transform_indices = @transform_1, window_bounds = array<i64: 256, 128>}, {pipeline_mode = #tpu.pipeline_mode<synchronous>, transform_indices = @transform_2, window_bounds = array<i64: 128, 128>}, {pipeline_mode = #tpu.pipeline_mode<synchronous>, transform_indices = @transform_3, window_bounds = array<i64: 1, 128>}, {pipeline_mode = #tpu.pipeline_mode<synchronous>, transform_indices = @transform_4, window_bounds = array<i64: 1, 128>}, {pipeline_mode = #tpu.pipeline_mode<synchronous>, transform_indices = @transform_5, window_bounds = array<i64: 1, 512>}, {pipeline_mode = #tpu.pipeline_mode<synchronous>, transform_indices = @transform_6, window_bounds = array<i64: 128, 512>}, {pipeline_mode = #tpu.pipeline_mode<synchronous>, transform_indices = @transform_7, window_bounds = array<i64: 1, 512>}, {pipeline_mode = #tpu.pipeline_mode<synchronous>, transform_indices = @transform_8, window_bounds = array<i64: 1, 128>}, {pipeline_mode = #tpu.pipeline_mode<synchronous>, transform_indices = @transform_9, window_bounds = array<i64: 1, 128>}, {pipeline_mode = #tpu.pipeline_mode<synchronous>, transform_indices = @transform_10, window_bounds = array<i64: 1, 128>}, {transform_indices = @transform_11, window_bounds = array<i64: 1>}, {transform_indices = @transform_12, window_bounds = array<i64: 1>}, {transform_indices = @transform_13, window_bounds = array<i64: 1>}, {transform_indices = @transform_14, window_bounds = array<i64: 8, 1>}]} {
    %c0 = arith.constant 0 : index
    %c0_0 = arith.constant 0 : index
    %c0_1 = arith.constant 0 : index
    %0 = vector.load %arg1[%c0, %c0_0, %c0_1] : memref<8x8x128xf32, #tpu.memory_space<vmem>>, vector<8x8x128xf32>
    %c0_2 = arith.constant 0 : index
    %c0_3 = arith.constant 0 : index
    %1 = vector.load %arg5[%c0_2, %c0_3] : memref<1x128xf32, #tpu.memory_space<vmem>>, vector<1x128xf32>
    %2 = vector.shape_cast %1 : vector<1x128xf32> to vector<1x1x128xf32>
    %c0_4 = arith.constant 0 : index
    %c0_5 = arith.constant 0 : index
    %3 = vector.load %arg6[%c0_4, %c0_5] : memref<1x512xf32, #tpu.memory_space<vmem>>, vector<1x512xf32>
    %c0_6 = arith.constant 0 : index
    %c0_7 = arith.constant 0 : index
    %4 = vector.load %arg8[%c0_6, %c0_7] : memref<1x512xf32, #tpu.memory_space<vmem>>, vector<1x512xf32>
    %c0_8 = arith.constant 0 : index
    %c0_9 = arith.constant 0 : index
    %5 = vector.load %arg9[%c0_8, %c0_9] : memref<1x128xf32, #tpu.memory_space<vmem>>, vector<1x128xf32>
    %c0_10 = arith.constant 0 : index
    %6 = memref.load %arg12[%c0_10] : memref<1xf32, #tpu.memory_space<smem>>
    %c0_11 = arith.constant 0 : index
    %7 = memref.load %arg13[%c0_11] : memref<1xf32, #tpu.memory_space<smem>>
    %8 = vector.shape_cast %0 : vector<8x8x128xf32> to vector<64x128xf32>
    %c0_12 = arith.constant 0 : index
    %c0_13 = arith.constant 0 : index
    %9 = vector.load %arg3[%c0_12, %c0_13] : memref<128x128xf32, #tpu.memory_space<vmem>>, vector<128x128xf32>
    %cst = arith.constant dense<0.000000e+00> : vector<64x128xf32>
    %10 = tpu.matmul %8, %9, %cst {dimension_numbers = #tpu.dot_dimension_numbers<[1], [0], [0], [1], [0, 0, 1, 1], [], []>} : vector<64x128xf32>, vector<128x128xf32>, vector<64x128xf32> -> vector<64x128xf32>
    %11 = vector.shape_cast %10 : vector<64x128xf32> to vector<8x8x128xf32>
    %c0_14 = arith.constant 0 : index
    %c0_15 = arith.constant 0 : index
    %12 = vector.load %arg4[%c0_14, %c0_15] : memref<1x128xf32, #tpu.memory_space<vmem>>, vector<1x128xf32>
    %13 = vector.shape_cast %12 : vector<1x128xf32> to vector<1x1x128xf32>
    %14 = vector.broadcast %13 : vector<1x1x128xf32> to vector<8x8x128xf32>
    %15 = arith.addf %11, %14 : vector<8x8x128xf32>
    %cst_16 = arith.constant 0.000000e+00 : f32
    %16 = vector.broadcast %cst_16 : f32 to vector<8x128xf32>
    %cst_17 = arith.constant 0.000000e+00 : f32
    %17 = vector.broadcast %cst_17 : f32 to vector<8x128xf32>
    %cst_18 = arith.constant 0.000000e+00 : f32
    %18 = vector.broadcast %cst_18 : f32 to vector<8x128xf32>
    %cst_19 = arith.constant 0.000000e+00 : f32
    %19 = vector.broadcast %cst_19 : f32 to vector<8x1xf32>
    %c0_i32 = arith.constant 0 : i32
    %c0_20 = arith.constant 0 : index
    %c0_21 = arith.constant 0 : index
    %20 = vector.load %arg7[%c0_20, %c0_21] : memref<128x512xf32, #tpu.memory_space<vmem>>, vector<128x512xf32>
    %cst_22 = arith.constant dense<0.000000e+00> : vector<8x512xf32>
    %21 = tpu.matmul %16, %20, %cst_22 {dimension_numbers = #tpu.dot_dimension_numbers<[1], [0], [0], [1], [0, 0, 1, 1], [], []>} : vector<8x128xf32>, vector<128x512xf32>, vector<8x512xf32> -> vector<8x512xf32>
    %22 = tpu.concatenate %16, %17 in 1 : vector<8x128xf32>, vector<8x128xf32> -> vector<8x256xf32>
    %c0_23 = arith.constant 0 : index
    %c0_24 = arith.constant 0 : index
    %23 = vector.load %arg2[%c0_23, %c0_24] : memref<256x128xf32, #tpu.memory_space<vmem>>, vector<256x128xf32>
    %cst_25 = arith.constant dense<0.000000e+00> : vector<8x128xf32>
    %24 = tpu.matmul %22, %23, %cst_25 {dimension_numbers = #tpu.dot_dimension_numbers<[1], [0], [0], [1], [0, 0, 1, 1], [], []>} : vector<8x256xf32>, vector<256x128xf32>, vector<8x128xf32> -> vector<8x128xf32>
    %25 = vector.shape_cast %24 : vector<8x128xf32> to vector<8x1x128xf32>
    %26 = vector.broadcast %25 : vector<8x1x128xf32> to vector<8x8x128xf32>
    %27 = arith.addf %26, %15 : vector<8x8x128xf32>
    %28 = math.tanh %27 : vector<8x8x128xf32>
    %29 = vector.broadcast %2 : vector<1x1x128xf32> to vector<8x8x128xf32>
    %30 = arith.mulf %28, %29 : vector<8x8x128xf32>
    %cst_26 = arith.constant dense<0.000000e+00> : vector<8x8xf32>
    %31 = vector.multi_reduction <add>, %30, %cst_26 [2] : vector<8x8x128xf32> to vector<8x8xf32>
    %32 = math.exp %31 : vector<8x8xf32>
    %cst_27 = arith.constant dense<0.000000e+00> : vector<8xf32>
    %33 = vector.multi_reduction <add>, %32, %cst_27 [1] : vector<8x8xf32> to vector<8xf32>
    %34 = vector.shape_cast %33 : vector<8xf32> to vector<8x1xf32>
    %35 = tpu.reciprocal %34 {approx = true} : vector<8x1xf32> -> vector<8x1xf32>
    %36 = vector.broadcast %35 : vector<8x1xf32> to vector<8x8xf32>
    %37 = arith.mulf %32, %36 : vector<8x8xf32>
    %38 = vector.shape_cast %37 : vector<8x8xf32> to vector<8x8x1xf32>
    %39 = vector.broadcast %38 : vector<8x8x1xf32> to vector<8x8x128xf32>
    %40 = arith.mulf %39, %0 : vector<8x8x128xf32>
    %cst_28 = arith.constant dense<0.000000e+00> : vector<8x128xf32>
    %41 = vector.multi_reduction <add>, %40, %cst_28 [1] : vector<8x8x128xf32> to vector<8x128xf32>
    %42 = vector.broadcast %5 : vector<1x128xf32> to vector<8x128xf32>
    %43 = arith.mulf %41, %42 : vector<8x128xf32>
    %cst_29 = arith.constant dense<0.000000e+00> : vector<8xf32>
    %44 = vector.multi_reduction <add>, %43, %cst_29 [1] : vector<8x128xf32> to vector<8xf32>
    %45 = vector.shape_cast %44 : vector<8xf32> to vector<8x1xf32>
    %46 = vector.broadcast %6 : f32 to vector<8x1xf32>
    %47 = arith.mulf %19, %46 : vector<8x1xf32>
    %48 = arith.addf %45, %47 : vector<8x1xf32>
    %49 = vector.broadcast %7 : f32 to vector<8x1xf32>
    %50 = arith.addf %48, %49 : vector<8x1xf32>
    %51 = vector.broadcast %50 : vector<8x1xf32> to vector<8x512xf32>
    %52 = vector.broadcast %3 : vector<1x512xf32> to vector<8x512xf32>
    %53 = arith.mulf %51, %52 : vector<8x512xf32>
    %54 = arith.addf %53, %21 : vector<8x512xf32>
    %55 = vector.broadcast %4 : vector<1x512xf32> to vector<8x512xf32>
    %56 = arith.addf %54, %55 : vector<8x512xf32>
    %57 = vector.extract_strided_slice %56 {offsets = [0, 0], sizes = [8, 128], strides = [1, 1]} : vector<8x512xf32> to vector<8x128xf32>
    %58 = arith.negf %57 : vector<8x128xf32>
    %59 = math.exp %58 : vector<8x128xf32>
    %cst_30 = arith.constant 1.000000e+00 : f32
    %60 = vector.broadcast %cst_30 : f32 to vector<8x128xf32>
    %61 = arith.addf %60, %59 : vector<8x128xf32>
    %62 = arith.divf %60, %61 : vector<8x128xf32>
    %63 = vector.extract_strided_slice %56 {offsets = [0, 128], sizes = [8, 128], strides = [1, 1]} : vector<8x512xf32> to vector<8x128xf32>
    %64 = arith.negf %63 : vector<8x128xf32>
    %65 = math.exp %64 : vector<8x128xf32>
    %cst_31 = arith.constant 1.000000e+00 : f32
    %66 = vector.broadcast %cst_31 : f32 to vector<8x128xf32>
    %67 = arith.addf %66, %65 : vector<8x128xf32>
    %68 = arith.divf %66, %67 : vector<8x128xf32>
    %69 = vector.extract_strided_slice %56 {offsets = [0, 256], sizes = [8, 128], strides = [1, 1]} : vector<8x512xf32> to vector<8x128xf32>
    %70 = math.tanh %69 : vector<8x128xf32>
    %71 = vector.extract_strided_slice %56 {offsets = [0, 384], sizes = [8, 128], strides = [1, 1]} : vector<8x512xf32> to vector<8x128xf32>
    %72 = arith.negf %71 : vector<8x128xf32>
    %73 = math.exp %72 : vector<8x128xf32>
    %cst_32 = arith.constant 1.000000e+00 : f32
    %74 = vector.broadcast %cst_32 : f32 to vector<8x128xf32>
    %75 = arith.addf %74, %73 : vector<8x128xf32>
    %76 = arith.divf %74, %75 : vector<8x128xf32>
    %77 = arith.mulf %68, %17 : vector<8x128xf32>
    %78 = arith.mulf %62, %70 : vector<8x128xf32>
    %79 = arith.addf %77, %78 : vector<8x128xf32>
    %80 = math.tanh %79 : vector<8x128xf32>
    %81 = arith.mulf %76, %80 : vector<8x128xf32>
    %c1_i32 = arith.constant 1 : i32
    %c0_33 = arith.constant 0 : index
    %c0_34 = arith.constant 0 : index
    %82 = vector.load %arg7[%c0_33, %c0_34] : memref<128x512xf32, #tpu.memory_space<vmem>>, vector<128x512xf32>
    %cst_35 = arith.constant dense<0.000000e+00> : vector<8x512xf32>
    %83 = tpu.matmul %81, %82, %cst_35 {dimension_numbers = #tpu.dot_dimension_numbers<[1], [0], [0], [1], [0, 0, 1, 1], [], []>} : vector<8x128xf32>, vector<128x512xf32>, vector<8x512xf32> -> vector<8x512xf32>
    %84 = tpu.concatenate %81, %79 in 1 : vector<8x128xf32>, vector<8x128xf32> -> vector<8x256xf32>
    %c0_36 = arith.constant 0 : index
    %c0_37 = arith.constant 0 : index
    %85 = vector.load %arg2[%c0_36, %c0_37] : memref<256x128xf32, #tpu.memory_space<vmem>>, vector<256x128xf32>
    %cst_38 = arith.constant dense<0.000000e+00> : vector<8x128xf32>
    %86 = tpu.matmul %84, %85, %cst_38 {dimension_numbers = #tpu.dot_dimension_numbers<[1], [0], [0], [1], [0, 0, 1, 1], [], []>} : vector<8x256xf32>, vector<256x128xf32>, vector<8x128xf32> -> vector<8x128xf32>
    %87 = vector.shape_cast %86 : vector<8x128xf32> to vector<8x1x128xf32>
    %88 = vector.broadcast %87 : vector<8x1x128xf32> to vector<8x8x128xf32>
    %89 = arith.addf %88, %15 : vector<8x8x128xf32>
    %90 = math.tanh %89 : vector<8x8x128xf32>
    %91 = vector.broadcast %2 : vector<1x1x128xf32> to vector<8x8x128xf32>
    %92 = arith.mulf %90, %91 : vector<8x8x128xf32>
    %cst_39 = arith.constant dense<0.000000e+00> : vector<8x8xf32>
    %93 = vector.multi_reduction <add>, %92, %cst_39 [2] : vector<8x8x128xf32> to vector<8x8xf32>
    %94 = math.exp %93 : vector<8x8xf32>
    %cst_40 = arith.constant dense<0.000000e+00> : vector<8xf32>
    %95 = vector.multi_reduction <add>, %94, %cst_40 [1] : vector<8x8xf32> to vector<8xf32>
    %96 = vector.shape_cast %95 : vector<8xf32> to vector<8x1xf32>
    %97 = tpu.reciprocal %96 {approx = true} : vector<8x1xf32> -> vector<8x1xf32>
    %98 = vector.broadcast %97 : vector<8x1xf32> to vector<8x8xf32>
    %99 = arith.mulf %94, %98 : vector<8x8xf32>
    %100 = vector.shape_cast %99 : vector<8x8xf32> to vector<8x8x1xf32>
    %101 = vector.broadcast %100 : vector<8x8x1xf32> to vector<8x8x128xf32>
    %102 = arith.mulf %101, %0 : vector<8x8x128xf32>
    %cst_41 = arith.constant dense<0.000000e+00> : vector<8x128xf32>
    %103 = vector.multi_reduction <add>, %102, %cst_41 [1] : vector<8x8x128xf32> to vector<8x128xf32>
    %104 = vector.broadcast %5 : vector<1x128xf32> to vector<8x128xf32>
    %105 = arith.mulf %103, %104 : vector<8x128xf32>
    %cst_42 = arith.constant dense<0.000000e+00> : vector<8xf32>
    %106 = vector.multi_reduction <add>, %105, %cst_42 [1] : vector<8x128xf32> to vector<8xf32>
    %107 = vector.shape_cast %106 : vector<8xf32> to vector<8x1xf32>
    %108 = vector.broadcast %6 : f32 to vector<8x1xf32>
    %109 = arith.mulf %50, %108 : vector<8x1xf32>
    %110 = arith.addf %107, %109 : vector<8x1xf32>
    %111 = vector.broadcast %7 : f32 to vector<8x1xf32>
    %112 = arith.addf %110, %111 : vector<8x1xf32>
    %113 = vector.broadcast %112 : vector<8x1xf32> to vector<8x512xf32>
    %114 = vector.broadcast %3 : vector<1x512xf32> to vector<8x512xf32>
    %115 = arith.mulf %113, %114 : vector<8x512xf32>
    %116 = arith.addf %115, %83 : vector<8x512xf32>
    %117 = vector.broadcast %4 : vector<1x512xf32> to vector<8x512xf32>
    %118 = arith.addf %116, %117 : vector<8x512xf32>
    %119 = vector.extract_strided_slice %118 {offsets = [0, 0], sizes = [8, 128], strides = [1, 1]} : vector<8x512xf32> to vector<8x128xf32>
    %120 = arith.negf %119 : vector<8x128xf32>
    %121 = math.exp %120 : vector<8x128xf32>
    %cst_43 = arith.constant 1.000000e+00 : f32
    %122 = vector.broadcast %cst_43 : f32 to vector<8x128xf32>
    %123 = arith.addf %122, %121 : vector<8x128xf32>
    %124 = arith.divf %122, %123 : vector<8x128xf32>
    %125 = vector.extract_strided_slice %118 {offsets = [0, 128], sizes = [8, 128], strides = [1, 1]} : vector<8x512xf32> to vector<8x128xf32>
    %126 = arith.negf %125 : vector<8x128xf32>
    %127 = math.exp %126 : vector<8x128xf32>
    %cst_44 = arith.constant 1.000000e+00 : f32
    %128 = vector.broadcast %cst_44 : f32 to vector<8x128xf32>
    %129 = arith.addf %128, %127 : vector<8x128xf32>
    %130 = arith.divf %128, %129 : vector<8x128xf32>
    %131 = vector.extract_strided_slice %118 {offsets = [0, 256], sizes = [8, 128], strides = [1, 1]} : vector<8x512xf32> to vector<8x128xf32>
    %132 = math.tanh %131 : vector<8x128xf32>
    %133 = vector.extract_strided_slice %118 {offsets = [0, 384], sizes = [8, 128], strides = [1, 1]} : vector<8x512xf32> to vector<8x128xf32>
    %134 = arith.negf %133 : vector<8x128xf32>
    %135 = math.exp %134 : vector<8x128xf32>
    %cst_45 = arith.constant 1.000000e+00 : f32
    %136 = vector.broadcast %cst_45 : f32 to vector<8x128xf32>
    %137 = arith.addf %136, %135 : vector<8x128xf32>
    %138 = arith.divf %136, %137 : vector<8x128xf32>
    %139 = arith.mulf %130, %79 : vector<8x128xf32>
    %140 = arith.mulf %124, %132 : vector<8x128xf32>
    %141 = arith.addf %139, %140 : vector<8x128xf32>
    %142 = math.tanh %141 : vector<8x128xf32>
    %143 = arith.mulf %138, %142 : vector<8x128xf32>
    %c2_i32 = arith.constant 2 : i32
    %c0_46 = arith.constant 0 : index
    %c0_47 = arith.constant 0 : index
    %144 = vector.load %arg7[%c0_46, %c0_47] : memref<128x512xf32, #tpu.memory_space<vmem>>, vector<128x512xf32>
    %cst_48 = arith.constant dense<0.000000e+00> : vector<8x512xf32>
    %145 = tpu.matmul %143, %144, %cst_48 {dimension_numbers = #tpu.dot_dimension_numbers<[1], [0], [0], [1], [0, 0, 1, 1], [], []>} : vector<8x128xf32>, vector<128x512xf32>, vector<8x512xf32> -> vector<8x512xf32>
    %146 = tpu.concatenate %143, %141 in 1 : vector<8x128xf32>, vector<8x128xf32> -> vector<8x256xf32>
    %c0_49 = arith.constant 0 : index
    %c0_50 = arith.constant 0 : index
    %147 = vector.load %arg2[%c0_49, %c0_50] : memref<256x128xf32, #tpu.memory_space<vmem>>, vector<256x128xf32>
    %cst_51 = arith.constant dense<0.000000e+00> : vector<8x128xf32>
    %148 = tpu.matmul %146, %147, %cst_51 {dimension_numbers = #tpu.dot_dimension_numbers<[1], [0], [0], [1], [0, 0, 1, 1], [], []>} : vector<8x256xf32>, vector<256x128xf32>, vector<8x128xf32> -> vector<8x128xf32>
    %149 = vector.shape_cast %148 : vector<8x128xf32> to vector<8x1x128xf32>
    %150 = vector.broadcast %149 : vector<8x1x128xf32> to vector<8x8x128xf32>
    %151 = arith.addf %150, %15 : vector<8x8x128xf32>
    %152 = math.tanh %151 : vector<8x8x128xf32>
    %153 = vector.broadcast %2 : vector<1x1x128xf32> to vector<8x8x128xf32>
    %154 = arith.mulf %152, %153 : vector<8x8x128xf32>
    %cst_52 = arith.constant dense<0.000000e+00> : vector<8x8xf32>
    %155 = vector.multi_reduction <add>, %154, %cst_52 [2] : vector<8x8x128xf32> to vector<8x8xf32>
    %156 = math.exp %155 : vector<8x8xf32>
    %cst_53 = arith.constant dense<0.000000e+00> : vector<8xf32>
    %157 = vector.multi_reduction <add>, %156, %cst_53 [1] : vector<8x8xf32> to vector<8xf32>
    %158 = vector.shape_cast %157 : vector<8xf32> to vector<8x1xf32>
    %159 = tpu.reciprocal %158 {approx = true} : vector<8x1xf32> -> vector<8x1xf32>
    %160 = vector.broadcast %159 : vector<8x1xf32> to vector<8x8xf32>
    %161 = arith.mulf %156, %160 : vector<8x8xf32>
    %162 = vector.shape_cast %161 : vector<8x8xf32> to vector<8x8x1xf32>
    %163 = vector.broadcast %162 : vector<8x8x1xf32> to vector<8x8x128xf32>
    %164 = arith.mulf %163, %0 : vector<8x8x128xf32>
    %cst_54 = arith.constant dense<0.000000e+00> : vector<8x128xf32>
    %165 = vector.multi_reduction <add>, %164, %cst_54 [1] : vector<8x8x128xf32> to vector<8x128xf32>
    %166 = vector.broadcast %5 : vector<1x128xf32> to vector<8x128xf32>
    %167 = arith.mulf %165, %166 : vector<8x128xf32>
    %cst_55 = arith.constant dense<0.000000e+00> : vector<8xf32>
    %168 = vector.multi_reduction <add>, %167, %cst_55 [1] : vector<8x128xf32> to vector<8xf32>
    %169 = vector.shape_cast %168 : vector<8xf32> to vector<8x1xf32>
    %170 = vector.broadcast %6 : f32 to vector<8x1xf32>
    %171 = arith.mulf %112, %170 : vector<8x1xf32>
    %172 = arith.addf %169, %171 : vector<8x1xf32>
    %173 = vector.broadcast %7 : f32 to vector<8x1xf32>
    %174 = arith.addf %172, %173 : vector<8x1xf32>
    %175 = vector.broadcast %174 : vector<8x1xf32> to vector<8x512xf32>
    %176 = vector.broadcast %3 : vector<1x512xf32> to vector<8x512xf32>
    %177 = arith.mulf %175, %176 : vector<8x512xf32>
    %178 = arith.addf %177, %145 : vector<8x512xf32>
    %179 = vector.broadcast %4 : vector<1x512xf32> to vector<8x512xf32>
    %180 = arith.addf %178, %179 : vector<8x512xf32>
    %181 = vector.extract_strided_slice %180 {offsets = [0, 0], sizes = [8, 128], strides = [1, 1]} : vector<8x512xf32> to vector<8x128xf32>
    %182 = arith.negf %181 : vector<8x128xf32>
    %183 = math.exp %182 : vector<8x128xf32>
    %cst_56 = arith.constant 1.000000e+00 : f32
    %184 = vector.broadcast %cst_56 : f32 to vector<8x128xf32>
    %185 = arith.addf %184, %183 : vector<8x128xf32>
    %186 = arith.divf %184, %185 : vector<8x128xf32>
    %187 = vector.extract_strided_slice %180 {offsets = [0, 128], sizes = [8, 128], strides = [1, 1]} : vector<8x512xf32> to vector<8x128xf32>
    %188 = arith.negf %187 : vector<8x128xf32>
    %189 = math.exp %188 : vector<8x128xf32>
    %cst_57 = arith.constant 1.000000e+00 : f32
    %190 = vector.broadcast %cst_57 : f32 to vector<8x128xf32>
    %191 = arith.addf %190, %189 : vector<8x128xf32>
    %192 = arith.divf %190, %191 : vector<8x128xf32>
    %193 = vector.extract_strided_slice %180 {offsets = [0, 256], sizes = [8, 128], strides = [1, 1]} : vector<8x512xf32> to vector<8x128xf32>
    %194 = math.tanh %193 : vector<8x128xf32>
    %195 = vector.extract_strided_slice %180 {offsets = [0, 384], sizes = [8, 128], strides = [1, 1]} : vector<8x512xf32> to vector<8x128xf32>
    %196 = arith.negf %195 : vector<8x128xf32>
    %197 = math.exp %196 : vector<8x128xf32>
    %cst_58 = arith.constant 1.000000e+00 : f32
    %198 = vector.broadcast %cst_58 : f32 to vector<8x128xf32>
    %199 = arith.addf %198, %197 : vector<8x128xf32>
    %200 = arith.divf %198, %199 : vector<8x128xf32>
    %201 = arith.mulf %192, %141 : vector<8x128xf32>
    %202 = arith.mulf %186, %194 : vector<8x128xf32>
    %203 = arith.addf %201, %202 : vector<8x128xf32>
    %204 = math.tanh %203 : vector<8x128xf32>
    %205 = arith.mulf %200, %204 : vector<8x128xf32>
    %c3_i32 = arith.constant 3 : i32
    %c0_59 = arith.constant 0 : index
    %c0_60 = arith.constant 0 : index
    %206 = vector.load %arg7[%c0_59, %c0_60] : memref<128x512xf32, #tpu.memory_space<vmem>>, vector<128x512xf32>
    %cst_61 = arith.constant dense<0.000000e+00> : vector<8x512xf32>
    %207 = tpu.matmul %205, %206, %cst_61 {dimension_numbers = #tpu.dot_dimension_numbers<[1], [0], [0], [1], [0, 0, 1, 1], [], []>} : vector<8x128xf32>, vector<128x512xf32>, vector<8x512xf32> -> vector<8x512xf32>
    %208 = tpu.concatenate %205, %203 in 1 : vector<8x128xf32>, vector<8x128xf32> -> vector<8x256xf32>
    %c0_62 = arith.constant 0 : index
    %c0_63 = arith.constant 0 : index
    %209 = vector.load %arg2[%c0_62, %c0_63] : memref<256x128xf32, #tpu.memory_space<vmem>>, vector<256x128xf32>
    %cst_64 = arith.constant dense<0.000000e+00> : vector<8x128xf32>
    %210 = tpu.matmul %208, %209, %cst_64 {dimension_numbers = #tpu.dot_dimension_numbers<[1], [0], [0], [1], [0, 0, 1, 1], [], []>} : vector<8x256xf32>, vector<256x128xf32>, vector<8x128xf32> -> vector<8x128xf32>
    %211 = vector.shape_cast %210 : vector<8x128xf32> to vector<8x1x128xf32>
    %212 = vector.broadcast %211 : vector<8x1x128xf32> to vector<8x8x128xf32>
    %213 = arith.addf %212, %15 : vector<8x8x128xf32>
    %214 = math.tanh %213 : vector<8x8x128xf32>
    %215 = vector.broadcast %2 : vector<1x1x128xf32> to vector<8x8x128xf32>
    %216 = arith.mulf %214, %215 : vector<8x8x128xf32>
    %cst_65 = arith.constant dense<0.000000e+00> : vector<8x8xf32>
    %217 = vector.multi_reduction <add>, %216, %cst_65 [2] : vector<8x8x128xf32> to vector<8x8xf32>
    %218 = math.exp %217 : vector<8x8xf32>
    %cst_66 = arith.constant dense<0.000000e+00> : vector<8xf32>
    %219 = vector.multi_reduction <add>, %218, %cst_66 [1] : vector<8x8xf32> to vector<8xf32>
    %220 = vector.shape_cast %219 : vector<8xf32> to vector<8x1xf32>
    %221 = tpu.reciprocal %220 {approx = true} : vector<8x1xf32> -> vector<8x1xf32>
    %222 = vector.broadcast %221 : vector<8x1xf32> to vector<8x8xf32>
    %223 = arith.mulf %218, %222 : vector<8x8xf32>
    %224 = vector.shape_cast %223 : vector<8x8xf32> to vector<8x8x1xf32>
    %225 = vector.broadcast %224 : vector<8x8x1xf32> to vector<8x8x128xf32>
    %226 = arith.mulf %225, %0 : vector<8x8x128xf32>
    %cst_67 = arith.constant dense<0.000000e+00> : vector<8x128xf32>
    %227 = vector.multi_reduction <add>, %226, %cst_67 [1] : vector<8x8x128xf32> to vector<8x128xf32>
    %228 = vector.broadcast %5 : vector<1x128xf32> to vector<8x128xf32>
    %229 = arith.mulf %227, %228 : vector<8x128xf32>
    %cst_68 = arith.constant dense<0.000000e+00> : vector<8xf32>
    %230 = vector.multi_reduction <add>, %229, %cst_68 [1] : vector<8x128xf32> to vector<8xf32>
    %231 = vector.shape_cast %230 : vector<8xf32> to vector<8x1xf32>
    %232 = vector.broadcast %6 : f32 to vector<8x1xf32>
    %233 = arith.mulf %174, %232 : vector<8x1xf32>
    %234 = arith.addf %231, %233 : vector<8x1xf32>
    %235 = vector.broadcast %7 : f32 to vector<8x1xf32>
    %236 = arith.addf %234, %235 : vector<8x1xf32>
    %237 = vector.broadcast %236 : vector<8x1xf32> to vector<8x512xf32>
    %238 = vector.broadcast %3 : vector<1x512xf32> to vector<8x512xf32>
    %239 = arith.mulf %237, %238 : vector<8x512xf32>
    %240 = arith.addf %239, %207 : vector<8x512xf32>
    %241 = vector.broadcast %4 : vector<1x512xf32> to vector<8x512xf32>
    %242 = arith.addf %240, %241 : vector<8x512xf32>
    %243 = vector.extract_strided_slice %242 {offsets = [0, 0], sizes = [8, 128], strides = [1, 1]} : vector<8x512xf32> to vector<8x128xf32>
    %244 = arith.negf %243 : vector<8x128xf32>
    %245 = math.exp %244 : vector<8x128xf32>
    %cst_69 = arith.constant 1.000000e+00 : f32
    %246 = vector.broadcast %cst_69 : f32 to vector<8x128xf32>
    %247 = arith.addf %246, %245 : vector<8x128xf32>
    %248 = arith.divf %246, %247 : vector<8x128xf32>
    %249 = vector.extract_strided_slice %242 {offsets = [0, 128], sizes = [8, 128], strides = [1, 1]} : vector<8x512xf32> to vector<8x128xf32>
    %250 = arith.negf %249 : vector<8x128xf32>
    %251 = math.exp %250 : vector<8x128xf32>
    %cst_70 = arith.constant 1.000000e+00 : f32
    %252 = vector.broadcast %cst_70 : f32 to vector<8x128xf32>
    %253 = arith.addf %252, %251 : vector<8x128xf32>
    %254 = arith.divf %252, %253 : vector<8x128xf32>
    %255 = vector.extract_strided_slice %242 {offsets = [0, 256], sizes = [8, 128], strides = [1, 1]} : vector<8x512xf32> to vector<8x128xf32>
    %256 = math.tanh %255 : vector<8x128xf32>
    %257 = vector.extract_strided_slice %242 {offsets = [0, 384], sizes = [8, 128], strides = [1, 1]} : vector<8x512xf32> to vector<8x128xf32>
    %258 = arith.negf %257 : vector<8x128xf32>
    %259 = math.exp %258 : vector<8x128xf32>
    %cst_71 = arith.constant 1.000000e+00 : f32
    %260 = vector.broadcast %cst_71 : f32 to vector<8x128xf32>
    %261 = arith.addf %260, %259 : vector<8x128xf32>
    %262 = arith.divf %260, %261 : vector<8x128xf32>
    %263 = arith.mulf %254, %203 : vector<8x128xf32>
    %264 = arith.mulf %248, %256 : vector<8x128xf32>
    %265 = arith.addf %263, %264 : vector<8x128xf32>
    %266 = math.tanh %265 : vector<8x128xf32>
    %267 = arith.mulf %262, %266 : vector<8x128xf32>
    %c4_i32 = arith.constant 4 : i32
    %c0_72 = arith.constant 0 : index
    %c0_73 = arith.constant 0 : index
    %268 = vector.load %arg7[%c0_72, %c0_73] : memref<128x512xf32, #tpu.memory_space<vmem>>, vector<128x512xf32>
    %cst_74 = arith.constant dense<0.000000e+00> : vector<8x512xf32>
    %269 = tpu.matmul %267, %268, %cst_74 {dimension_numbers = #tpu.dot_dimension_numbers<[1], [0], [0], [1], [0, 0, 1, 1], [], []>} : vector<8x128xf32>, vector<128x512xf32>, vector<8x512xf32> -> vector<8x512xf32>
    %270 = tpu.concatenate %267, %265 in 1 : vector<8x128xf32>, vector<8x128xf32> -> vector<8x256xf32>
    %c0_75 = arith.constant 0 : index
    %c0_76 = arith.constant 0 : index
    %271 = vector.load %arg2[%c0_75, %c0_76] : memref<256x128xf32, #tpu.memory_space<vmem>>, vector<256x128xf32>
    %cst_77 = arith.constant dense<0.000000e+00> : vector<8x128xf32>
    %272 = tpu.matmul %270, %271, %cst_77 {dimension_numbers = #tpu.dot_dimension_numbers<[1], [0], [0], [1], [0, 0, 1, 1], [], []>} : vector<8x256xf32>, vector<256x128xf32>, vector<8x128xf32> -> vector<8x128xf32>
    %273 = vector.shape_cast %272 : vector<8x128xf32> to vector<8x1x128xf32>
    %274 = vector.broadcast %273 : vector<8x1x128xf32> to vector<8x8x128xf32>
    %275 = arith.addf %274, %15 : vector<8x8x128xf32>
    %276 = math.tanh %275 : vector<8x8x128xf32>
    %277 = vector.broadcast %2 : vector<1x1x128xf32> to vector<8x8x128xf32>
    %278 = arith.mulf %276, %277 : vector<8x8x128xf32>
    %cst_78 = arith.constant dense<0.000000e+00> : vector<8x8xf32>
    %279 = vector.multi_reduction <add>, %278, %cst_78 [2] : vector<8x8x128xf32> to vector<8x8xf32>
    %280 = math.exp %279 : vector<8x8xf32>
    %cst_79 = arith.constant dense<0.000000e+00> : vector<8xf32>
    %281 = vector.multi_reduction <add>, %280, %cst_79 [1] : vector<8x8xf32> to vector<8xf32>
    %282 = vector.shape_cast %281 : vector<8xf32> to vector<8x1xf32>
    %283 = tpu.reciprocal %282 {approx = true} : vector<8x1xf32> -> vector<8x1xf32>
    %284 = vector.broadcast %283 : vector<8x1xf32> to vector<8x8xf32>
    %285 = arith.mulf %280, %284 : vector<8x8xf32>
    %286 = vector.shape_cast %285 : vector<8x8xf32> to vector<8x8x1xf32>
    %287 = vector.broadcast %286 : vector<8x8x1xf32> to vector<8x8x128xf32>
    %288 = arith.mulf %287, %0 : vector<8x8x128xf32>
    %cst_80 = arith.constant dense<0.000000e+00> : vector<8x128xf32>
    %289 = vector.multi_reduction <add>, %288, %cst_80 [1] : vector<8x8x128xf32> to vector<8x128xf32>
    %290 = vector.broadcast %5 : vector<1x128xf32> to vector<8x128xf32>
    %291 = arith.mulf %289, %290 : vector<8x128xf32>
    %cst_81 = arith.constant dense<0.000000e+00> : vector<8xf32>
    %292 = vector.multi_reduction <add>, %291, %cst_81 [1] : vector<8x128xf32> to vector<8xf32>
    %293 = vector.shape_cast %292 : vector<8xf32> to vector<8x1xf32>
    %294 = vector.broadcast %6 : f32 to vector<8x1xf32>
    %295 = arith.mulf %236, %294 : vector<8x1xf32>
    %296 = arith.addf %293, %295 : vector<8x1xf32>
    %297 = vector.broadcast %7 : f32 to vector<8x1xf32>
    %298 = arith.addf %296, %297 : vector<8x1xf32>
    %299 = vector.broadcast %298 : vector<8x1xf32> to vector<8x512xf32>
    %300 = vector.broadcast %3 : vector<1x512xf32> to vector<8x512xf32>
    %301 = arith.mulf %299, %300 : vector<8x512xf32>
    %302 = arith.addf %301, %269 : vector<8x512xf32>
    %303 = vector.broadcast %4 : vector<1x512xf32> to vector<8x512xf32>
    %304 = arith.addf %302, %303 : vector<8x512xf32>
    %305 = vector.extract_strided_slice %304 {offsets = [0, 0], sizes = [8, 128], strides = [1, 1]} : vector<8x512xf32> to vector<8x128xf32>
    %306 = arith.negf %305 : vector<8x128xf32>
    %307 = math.exp %306 : vector<8x128xf32>
    %cst_82 = arith.constant 1.000000e+00 : f32
    %308 = vector.broadcast %cst_82 : f32 to vector<8x128xf32>
    %309 = arith.addf %308, %307 : vector<8x128xf32>
    %310 = arith.divf %308, %309 : vector<8x128xf32>
    %311 = vector.extract_strided_slice %304 {offsets = [0, 128], sizes = [8, 128], strides = [1, 1]} : vector<8x512xf32> to vector<8x128xf32>
    %312 = arith.negf %311 : vector<8x128xf32>
    %313 = math.exp %312 : vector<8x128xf32>
    %cst_83 = arith.constant 1.000000e+00 : f32
    %314 = vector.broadcast %cst_83 : f32 to vector<8x128xf32>
    %315 = arith.addf %314, %313 : vector<8x128xf32>
    %316 = arith.divf %314, %315 : vector<8x128xf32>
    %317 = vector.extract_strided_slice %304 {offsets = [0, 256], sizes = [8, 128], strides = [1, 1]} : vector<8x512xf32> to vector<8x128xf32>
    %318 = math.tanh %317 : vector<8x128xf32>
    %319 = vector.extract_strided_slice %304 {offsets = [0, 384], sizes = [8, 128], strides = [1, 1]} : vector<8x512xf32> to vector<8x128xf32>
    %320 = arith.negf %319 : vector<8x128xf32>
    %321 = math.exp %320 : vector<8x128xf32>
    %cst_84 = arith.constant 1.000000e+00 : f32
    %322 = vector.broadcast %cst_84 : f32 to vector<8x128xf32>
    %323 = arith.addf %322, %321 : vector<8x128xf32>
    %324 = arith.divf %322, %323 : vector<8x128xf32>
    %325 = arith.mulf %316, %265 : vector<8x128xf32>
    %326 = arith.mulf %310, %318 : vector<8x128xf32>
    %327 = arith.addf %325, %326 : vector<8x128xf32>
    %328 = math.tanh %327 : vector<8x128xf32>
    %329 = arith.mulf %324, %328 : vector<8x128xf32>
    %c5_i32 = arith.constant 5 : i32
    %c0_85 = arith.constant 0 : index
    %c0_86 = arith.constant 0 : index
    %330 = vector.load %arg7[%c0_85, %c0_86] : memref<128x512xf32, #tpu.memory_space<vmem>>, vector<128x512xf32>
    %cst_87 = arith.constant dense<0.000000e+00> : vector<8x512xf32>
    %331 = tpu.matmul %329, %330, %cst_87 {dimension_numbers = #tpu.dot_dimension_numbers<[1], [0], [0], [1], [0, 0, 1, 1], [], []>} : vector<8x128xf32>, vector<128x512xf32>, vector<8x512xf32> -> vector<8x512xf32>
    %332 = tpu.concatenate %329, %327 in 1 : vector<8x128xf32>, vector<8x128xf32> -> vector<8x256xf32>
    %c0_88 = arith.constant 0 : index
    %c0_89 = arith.constant 0 : index
    %333 = vector.load %arg2[%c0_88, %c0_89] : memref<256x128xf32, #tpu.memory_space<vmem>>, vector<256x128xf32>
    %cst_90 = arith.constant dense<0.000000e+00> : vector<8x128xf32>
    %334 = tpu.matmul %332, %333, %cst_90 {dimension_numbers = #tpu.dot_dimension_numbers<[1], [0], [0], [1], [0, 0, 1, 1], [], []>} : vector<8x256xf32>, vector<256x128xf32>, vector<8x128xf32> -> vector<8x128xf32>
    %335 = vector.shape_cast %334 : vector<8x128xf32> to vector<8x1x128xf32>
    %336 = vector.broadcast %335 : vector<8x1x128xf32> to vector<8x8x128xf32>
    %337 = arith.addf %336, %15 : vector<8x8x128xf32>
    %338 = math.tanh %337 : vector<8x8x128xf32>
    %339 = vector.broadcast %2 : vector<1x1x128xf32> to vector<8x8x128xf32>
    %340 = arith.mulf %338, %339 : vector<8x8x128xf32>
    %cst_91 = arith.constant dense<0.000000e+00> : vector<8x8xf32>
    %341 = vector.multi_reduction <add>, %340, %cst_91 [2] : vector<8x8x128xf32> to vector<8x8xf32>
    %342 = math.exp %341 : vector<8x8xf32>
    %cst_92 = arith.constant dense<0.000000e+00> : vector<8xf32>
    %343 = vector.multi_reduction <add>, %342, %cst_92 [1] : vector<8x8xf32> to vector<8xf32>
    %344 = vector.shape_cast %343 : vector<8xf32> to vector<8x1xf32>
    %345 = tpu.reciprocal %344 {approx = true} : vector<8x1xf32> -> vector<8x1xf32>
    %346 = vector.broadcast %345 : vector<8x1xf32> to vector<8x8xf32>
    %347 = arith.mulf %342, %346 : vector<8x8xf32>
    %348 = vector.shape_cast %347 : vector<8x8xf32> to vector<8x8x1xf32>
    %349 = vector.broadcast %348 : vector<8x8x1xf32> to vector<8x8x128xf32>
    %350 = arith.mulf %349, %0 : vector<8x8x128xf32>
    %cst_93 = arith.constant dense<0.000000e+00> : vector<8x128xf32>
    %351 = vector.multi_reduction <add>, %350, %cst_93 [1] : vector<8x8x128xf32> to vector<8x128xf32>
    %352 = vector.broadcast %5 : vector<1x128xf32> to vector<8x128xf32>
    %353 = arith.mulf %351, %352 : vector<8x128xf32>
    %cst_94 = arith.constant dense<0.000000e+00> : vector<8xf32>
    %354 = vector.multi_reduction <add>, %353, %cst_94 [1] : vector<8x128xf32> to vector<8xf32>
    %355 = vector.shape_cast %354 : vector<8xf32> to vector<8x1xf32>
    %356 = vector.broadcast %6 : f32 to vector<8x1xf32>
    %357 = arith.mulf %298, %356 : vector<8x1xf32>
    %358 = arith.addf %355, %357 : vector<8x1xf32>
    %359 = vector.broadcast %7 : f32 to vector<8x1xf32>
    %360 = arith.addf %358, %359 : vector<8x1xf32>
    %361 = vector.broadcast %360 : vector<8x1xf32> to vector<8x512xf32>
    %362 = vector.broadcast %3 : vector<1x512xf32> to vector<8x512xf32>
    %363 = arith.mulf %361, %362 : vector<8x512xf32>
    %364 = arith.addf %363, %331 : vector<8x512xf32>
    %365 = vector.broadcast %4 : vector<1x512xf32> to vector<8x512xf32>
    %366 = arith.addf %364, %365 : vector<8x512xf32>
    %367 = vector.extract_strided_slice %366 {offsets = [0, 0], sizes = [8, 128], strides = [1, 1]} : vector<8x512xf32> to vector<8x128xf32>
    %368 = arith.negf %367 : vector<8x128xf32>
    %369 = math.exp %368 : vector<8x128xf32>
    %cst_95 = arith.constant 1.000000e+00 : f32
    %370 = vector.broadcast %cst_95 : f32 to vector<8x128xf32>
    %371 = arith.addf %370, %369 : vector<8x128xf32>
    %372 = arith.divf %370, %371 : vector<8x128xf32>
    %373 = vector.extract_strided_slice %366 {offsets = [0, 128], sizes = [8, 128], strides = [1, 1]} : vector<8x512xf32> to vector<8x128xf32>
    %374 = arith.negf %373 : vector<8x128xf32>
    %375 = math.exp %374 : vector<8x128xf32>
    %cst_96 = arith.constant 1.000000e+00 : f32
    %376 = vector.broadcast %cst_96 : f32 to vector<8x128xf32>
    %377 = arith.addf %376, %375 : vector<8x128xf32>
    %378 = arith.divf %376, %377 : vector<8x128xf32>
    %379 = vector.extract_strided_slice %366 {offsets = [0, 256], sizes = [8, 128], strides = [1, 1]} : vector<8x512xf32> to vector<8x128xf32>
    %380 = math.tanh %379 : vector<8x128xf32>
    %381 = vector.extract_strided_slice %366 {offsets = [0, 384], sizes = [8, 128], strides = [1, 1]} : vector<8x512xf32> to vector<8x128xf32>
    %382 = arith.negf %381 : vector<8x128xf32>
    %383 = math.exp %382 : vector<8x128xf32>
    %cst_97 = arith.constant 1.000000e+00 : f32
    %384 = vector.broadcast %cst_97 : f32 to vector<8x128xf32>
    %385 = arith.addf %384, %383 : vector<8x128xf32>
    %386 = arith.divf %384, %385 : vector<8x128xf32>
    %387 = arith.mulf %378, %327 : vector<8x128xf32>
    %388 = arith.mulf %372, %380 : vector<8x128xf32>
    %389 = arith.addf %387, %388 : vector<8x128xf32>
    %390 = math.tanh %389 : vector<8x128xf32>
    %391 = arith.mulf %386, %390 : vector<8x128xf32>
    %c6_i32 = arith.constant 6 : i32
    %c0_98 = arith.constant 0 : index
    %c0_99 = arith.constant 0 : index
    %392 = vector.load %arg7[%c0_98, %c0_99] : memref<128x512xf32, #tpu.memory_space<vmem>>, vector<128x512xf32>
    %cst_100 = arith.constant dense<0.000000e+00> : vector<8x512xf32>
    %393 = tpu.matmul %391, %392, %cst_100 {dimension_numbers = #tpu.dot_dimension_numbers<[1], [0], [0], [1], [0, 0, 1, 1], [], []>} : vector<8x128xf32>, vector<128x512xf32>, vector<8x512xf32> -> vector<8x512xf32>
    %394 = tpu.concatenate %391, %389 in 1 : vector<8x128xf32>, vector<8x128xf32> -> vector<8x256xf32>
    %c0_101 = arith.constant 0 : index
    %c0_102 = arith.constant 0 : index
    %395 = vector.load %arg2[%c0_101, %c0_102] : memref<256x128xf32, #tpu.memory_space<vmem>>, vector<256x128xf32>
    %cst_103 = arith.constant dense<0.000000e+00> : vector<8x128xf32>
    %396 = tpu.matmul %394, %395, %cst_103 {dimension_numbers = #tpu.dot_dimension_numbers<[1], [0], [0], [1], [0, 0, 1, 1], [], []>} : vector<8x256xf32>, vector<256x128xf32>, vector<8x128xf32> -> vector<8x128xf32>
    %397 = vector.shape_cast %396 : vector<8x128xf32> to vector<8x1x128xf32>
    %398 = vector.broadcast %397 : vector<8x1x128xf32> to vector<8x8x128xf32>
    %399 = arith.addf %398, %15 : vector<8x8x128xf32>
    %400 = math.tanh %399 : vector<8x8x128xf32>
    %401 = vector.broadcast %2 : vector<1x1x128xf32> to vector<8x8x128xf32>
    %402 = arith.mulf %400, %401 : vector<8x8x128xf32>
    %cst_104 = arith.constant dense<0.000000e+00> : vector<8x8xf32>
    %403 = vector.multi_reduction <add>, %402, %cst_104 [2] : vector<8x8x128xf32> to vector<8x8xf32>
    %404 = math.exp %403 : vector<8x8xf32>
    %cst_105 = arith.constant dense<0.000000e+00> : vector<8xf32>
    %405 = vector.multi_reduction <add>, %404, %cst_105 [1] : vector<8x8xf32> to vector<8xf32>
    %406 = vector.shape_cast %405 : vector<8xf32> to vector<8x1xf32>
    %407 = tpu.reciprocal %406 {approx = true} : vector<8x1xf32> -> vector<8x1xf32>
    %408 = vector.broadcast %407 : vector<8x1xf32> to vector<8x8xf32>
    %409 = arith.mulf %404, %408 : vector<8x8xf32>
    %410 = vector.shape_cast %409 : vector<8x8xf32> to vector<8x8x1xf32>
    %411 = vector.broadcast %410 : vector<8x8x1xf32> to vector<8x8x128xf32>
    %412 = arith.mulf %411, %0 : vector<8x8x128xf32>
    %cst_106 = arith.constant dense<0.000000e+00> : vector<8x128xf32>
    %413 = vector.multi_reduction <add>, %412, %cst_106 [1] : vector<8x8x128xf32> to vector<8x128xf32>
    %414 = vector.broadcast %5 : vector<1x128xf32> to vector<8x128xf32>
    %415 = arith.mulf %413, %414 : vector<8x128xf32>
    %cst_107 = arith.constant dense<0.000000e+00> : vector<8xf32>
    %416 = vector.multi_reduction <add>, %415, %cst_107 [1] : vector<8x128xf32> to vector<8xf32>
    %417 = vector.shape_cast %416 : vector<8xf32> to vector<8x1xf32>
    %418 = vector.broadcast %6 : f32 to vector<8x1xf32>
    %419 = arith.mulf %360, %418 : vector<8x1xf32>
    %420 = arith.addf %417, %419 : vector<8x1xf32>
    %421 = vector.broadcast %7 : f32 to vector<8x1xf32>
    %422 = arith.addf %420, %421 : vector<8x1xf32>
    %423 = vector.broadcast %422 : vector<8x1xf32> to vector<8x512xf32>
    %424 = vector.broadcast %3 : vector<1x512xf32> to vector<8x512xf32>
    %425 = arith.mulf %423, %424 : vector<8x512xf32>
    %426 = arith.addf %425, %393 : vector<8x512xf32>
    %427 = vector.broadcast %4 : vector<1x512xf32> to vector<8x512xf32>
    %428 = arith.addf %426, %427 : vector<8x512xf32>
    %429 = vector.extract_strided_slice %428 {offsets = [0, 0], sizes = [8, 128], strides = [1, 1]} : vector<8x512xf32> to vector<8x128xf32>
    %430 = arith.negf %429 : vector<8x128xf32>
    %431 = math.exp %430 : vector<8x128xf32>
    %cst_108 = arith.constant 1.000000e+00 : f32
    %432 = vector.broadcast %cst_108 : f32 to vector<8x128xf32>
    %433 = arith.addf %432, %431 : vector<8x128xf32>
    %434 = arith.divf %432, %433 : vector<8x128xf32>
    %435 = vector.extract_strided_slice %428 {offsets = [0, 128], sizes = [8, 128], strides = [1, 1]} : vector<8x512xf32> to vector<8x128xf32>
    %436 = arith.negf %435 : vector<8x128xf32>
    %437 = math.exp %436 : vector<8x128xf32>
    %cst_109 = arith.constant 1.000000e+00 : f32
    %438 = vector.broadcast %cst_109 : f32 to vector<8x128xf32>
    %439 = arith.addf %438, %437 : vector<8x128xf32>
    %440 = arith.divf %438, %439 : vector<8x128xf32>
    %441 = vector.extract_strided_slice %428 {offsets = [0, 256], sizes = [8, 128], strides = [1, 1]} : vector<8x512xf32> to vector<8x128xf32>
    %442 = math.tanh %441 : vector<8x128xf32>
    %443 = vector.extract_strided_slice %428 {offsets = [0, 384], sizes = [8, 128], strides = [1, 1]} : vector<8x512xf32> to vector<8x128xf32>
    %444 = arith.negf %443 : vector<8x128xf32>
    %445 = math.exp %444 : vector<8x128xf32>
    %cst_110 = arith.constant 1.000000e+00 : f32
    %446 = vector.broadcast %cst_110 : f32 to vector<8x128xf32>
    %447 = arith.addf %446, %445 : vector<8x128xf32>
    %448 = arith.divf %446, %447 : vector<8x128xf32>
    %449 = arith.mulf %440, %389 : vector<8x128xf32>
    %450 = arith.mulf %434, %442 : vector<8x128xf32>
    %451 = arith.addf %449, %450 : vector<8x128xf32>
    %452 = math.tanh %451 : vector<8x128xf32>
    %453 = arith.mulf %448, %452 : vector<8x128xf32>
    %c7_i32 = arith.constant 7 : i32
    %c0_111 = arith.constant 0 : index
    %c0_112 = arith.constant 0 : index
    %454 = vector.load %arg7[%c0_111, %c0_112] : memref<128x512xf32, #tpu.memory_space<vmem>>, vector<128x512xf32>
    %cst_113 = arith.constant dense<0.000000e+00> : vector<8x512xf32>
    %455 = tpu.matmul %453, %454, %cst_113 {dimension_numbers = #tpu.dot_dimension_numbers<[1], [0], [0], [1], [0, 0, 1, 1], [], []>} : vector<8x128xf32>, vector<128x512xf32>, vector<8x512xf32> -> vector<8x512xf32>
    %456 = tpu.concatenate %453, %451 in 1 : vector<8x128xf32>, vector<8x128xf32> -> vector<8x256xf32>
    %c0_114 = arith.constant 0 : index
    %c0_115 = arith.constant 0 : index
    %457 = vector.load %arg2[%c0_114, %c0_115] : memref<256x128xf32, #tpu.memory_space<vmem>>, vector<256x128xf32>
    %cst_116 = arith.constant dense<0.000000e+00> : vector<8x128xf32>
    %458 = tpu.matmul %456, %457, %cst_116 {dimension_numbers = #tpu.dot_dimension_numbers<[1], [0], [0], [1], [0, 0, 1, 1], [], []>} : vector<8x256xf32>, vector<256x128xf32>, vector<8x128xf32> -> vector<8x128xf32>
    %459 = vector.shape_cast %458 : vector<8x128xf32> to vector<8x1x128xf32>
    %460 = vector.broadcast %459 : vector<8x1x128xf32> to vector<8x8x128xf32>
    %461 = arith.addf %460, %15 : vector<8x8x128xf32>
    %462 = math.tanh %461 : vector<8x8x128xf32>
    %463 = vector.broadcast %2 : vector<1x1x128xf32> to vector<8x8x128xf32>
    %464 = arith.mulf %462, %463 : vector<8x8x128xf32>
    %cst_117 = arith.constant dense<0.000000e+00> : vector<8x8xf32>
    %465 = vector.multi_reduction <add>, %464, %cst_117 [2] : vector<8x8x128xf32> to vector<8x8xf32>
    %466 = math.exp %465 : vector<8x8xf32>
    %cst_118 = arith.constant dense<0.000000e+00> : vector<8xf32>
    %467 = vector.multi_reduction <add>, %466, %cst_118 [1] : vector<8x8xf32> to vector<8xf32>
    %468 = vector.shape_cast %467 : vector<8xf32> to vector<8x1xf32>
    %469 = tpu.reciprocal %468 {approx = true} : vector<8x1xf32> -> vector<8x1xf32>
    %470 = vector.broadcast %469 : vector<8x1xf32> to vector<8x8xf32>
    %471 = arith.mulf %466, %470 : vector<8x8xf32>
    %472 = vector.shape_cast %471 : vector<8x8xf32> to vector<8x8x1xf32>
    %473 = vector.broadcast %472 : vector<8x8x1xf32> to vector<8x8x128xf32>
    %474 = arith.mulf %473, %0 : vector<8x8x128xf32>
    %cst_119 = arith.constant dense<0.000000e+00> : vector<8x128xf32>
    %475 = vector.multi_reduction <add>, %474, %cst_119 [1] : vector<8x8x128xf32> to vector<8x128xf32>
    %476 = vector.broadcast %5 : vector<1x128xf32> to vector<8x128xf32>
    %477 = arith.mulf %475, %476 : vector<8x128xf32>
    %cst_120 = arith.constant dense<0.000000e+00> : vector<8xf32>
    %478 = vector.multi_reduction <add>, %477, %cst_120 [1] : vector<8x128xf32> to vector<8xf32>
    %479 = vector.shape_cast %478 : vector<8xf32> to vector<8x1xf32>
    %480 = vector.broadcast %6 : f32 to vector<8x1xf32>
    %481 = arith.mulf %422, %480 : vector<8x1xf32>
    %482 = arith.addf %479, %481 : vector<8x1xf32>
    %483 = vector.broadcast %7 : f32 to vector<8x1xf32>
    %484 = arith.addf %482, %483 : vector<8x1xf32>
    %485 = vector.broadcast %484 : vector<8x1xf32> to vector<8x512xf32>
    %486 = vector.broadcast %3 : vector<1x512xf32> to vector<8x512xf32>
    %487 = arith.mulf %485, %486 : vector<8x512xf32>
    %488 = arith.addf %487, %455 : vector<8x512xf32>
    %489 = vector.broadcast %4 : vector<1x512xf32> to vector<8x512xf32>
    %490 = arith.addf %488, %489 : vector<8x512xf32>
    %491 = vector.extract_strided_slice %490 {offsets = [0, 0], sizes = [8, 128], strides = [1, 1]} : vector<8x512xf32> to vector<8x128xf32>
    %492 = arith.negf %491 : vector<8x128xf32>
    %493 = math.exp %492 : vector<8x128xf32>
    %cst_121 = arith.constant 1.000000e+00 : f32
    %494 = vector.broadcast %cst_121 : f32 to vector<8x128xf32>
    %495 = arith.addf %494, %493 : vector<8x128xf32>
    %496 = arith.divf %494, %495 : vector<8x128xf32>
    %497 = vector.extract_strided_slice %490 {offsets = [0, 128], sizes = [8, 128], strides = [1, 1]} : vector<8x512xf32> to vector<8x128xf32>
    %498 = arith.negf %497 : vector<8x128xf32>
    %499 = math.exp %498 : vector<8x128xf32>
    %cst_122 = arith.constant 1.000000e+00 : f32
    %500 = vector.broadcast %cst_122 : f32 to vector<8x128xf32>
    %501 = arith.addf %500, %499 : vector<8x128xf32>
    %502 = arith.divf %500, %501 : vector<8x128xf32>
    %503 = vector.extract_strided_slice %490 {offsets = [0, 256], sizes = [8, 128], strides = [1, 1]} : vector<8x512xf32> to vector<8x128xf32>
    %504 = math.tanh %503 : vector<8x128xf32>
    %505 = vector.extract_strided_slice %490 {offsets = [0, 384], sizes = [8, 128], strides = [1, 1]} : vector<8x512xf32> to vector<8x128xf32>
    %506 = arith.negf %505 : vector<8x128xf32>
    %507 = math.exp %506 : vector<8x128xf32>
    %cst_123 = arith.constant 1.000000e+00 : f32
    %508 = vector.broadcast %cst_123 : f32 to vector<8x128xf32>
    %509 = arith.addf %508, %507 : vector<8x128xf32>
    %510 = arith.divf %508, %509 : vector<8x128xf32>
    %511 = arith.mulf %502, %451 : vector<8x128xf32>
    %512 = arith.mulf %496, %504 : vector<8x128xf32>
    %513 = arith.addf %511, %512 : vector<8x128xf32>
    %514 = math.tanh %513 : vector<8x128xf32>
    %515 = arith.mulf %510, %514 : vector<8x128xf32>
    %c0_124 = arith.constant 0 : index
    %c0_125 = arith.constant 0 : index
    %516 = vector.load %arg10[%c0_124, %c0_125] : memref<1x128xf32, #tpu.memory_space<vmem>>, vector<1x128xf32>
    %517 = vector.broadcast %516 : vector<1x128xf32> to vector<8x128xf32>
    %518 = arith.mulf %515, %517 : vector<8x128xf32>
    %cst_126 = arith.constant dense<0.000000e+00> : vector<8xf32>
    %519 = vector.multi_reduction <add>, %518, %cst_126 [1] : vector<8x128xf32> to vector<8xf32>
    %520 = vector.shape_cast %519 : vector<8xf32> to vector<8x1xf32>
    %c0_127 = arith.constant 0 : index
    %c0_128 = arith.constant 0 : index
    %521 = vector.load %arg11[%c0_127, %c0_128] : memref<1x128xf32, #tpu.memory_space<vmem>>, vector<1x128xf32>
    %522 = vector.broadcast %521 : vector<1x128xf32> to vector<8x128xf32>
    %523 = arith.mulf %475, %522 : vector<8x128xf32>
    %cst_129 = arith.constant dense<0.000000e+00> : vector<8xf32>
    %524 = vector.multi_reduction <add>, %523, %cst_129 [1] : vector<8x128xf32> to vector<8xf32>
    %525 = vector.shape_cast %524 : vector<8xf32> to vector<8x1xf32>
    %526 = arith.addf %520, %525 : vector<8x1xf32>
    %c0_130 = arith.constant 0 : index
    %527 = memref.load %arg14[%c0_130] : memref<1xf32, #tpu.memory_space<smem>>
    %528 = vector.broadcast %527 : f32 to vector<8x1xf32>
    %529 = arith.addf %526, %528 : vector<8x1xf32>
    %c0_131 = arith.constant 0 : index
    %c0_132 = arith.constant 0 : index
    %530 = vector.load %arg15[%c0_131, %c0_132] : memref<8x1xf32, #tpu.memory_space<vmem>>, vector<8x1xf32>
    tpu.vector_store %arg15[%c0_131, %c0_132], %529 {strides = array<i32>} : memref<8x1xf32, #tpu.memory_space<vmem>>, vector<8x1xf32>,
    return
  }
  func.func @transform_0(%arg0: i32) -> (i32, i32, i32) {
    %c0_i32 = arith.constant 0 : i32
    %c0_i32_0 = arith.constant 0 : i32
    %c0_i32_1 = arith.constant 0 : i32
    return %arg0, %c0_i32, %c0_i32_0 : i32, i32, i32
  }
  func.func @transform_1(%arg0: i32) -> (i32, i32) {
    %c0_i32 = arith.constant 0 : i32
    %c0_i32_0 = arith.constant 0 : i32
    %c0_i32_1 = arith.constant 0 : i32
    return %c0_i32, %c0_i32_0 : i32, i32
  }
  func.func @transform_2(%arg0: i32) -> (i32, i32) {
    %c0_i32 = arith.constant 0 : i32
    %c0_i32_0 = arith.constant 0 : i32
    %c0_i32_1 = arith.constant 0 : i32
    return %c0_i32, %c0_i32_0 : i32, i32
  }
  func.func @transform_3(%arg0: i32) -> (i32, i32) {
    %c0_i32 = arith.constant 0 : i32
    %c0_i32_0 = arith.constant 0 : i32
    %c0_i32_1 = arith.constant 0 : i32
    return %c0_i32, %c0_i32_0 : i32, i32
  }
  func.func @transform_4(%arg0: i32) -> (i32, i32) {
    %c0_i32 = arith.constant 0 : i32
    %c0_i32_0 = arith.constant 0 : i32
    %c0_i32_1 = arith.constant 0 : i32
    return %c0_i32, %c0_i32_0 : i32, i32
  }
  func.func @transform_5(%arg0: i32) -> (i32, i32) {
    %c0_i32 = arith.constant 0 : i32
    %c0_i32_0 = arith.constant 0 : i32
    %c0_i32_1 = arith.constant 0 : i32
    return %c0_i32, %c0_i32_0 : i32, i32
  }
  func.func @transform_6(%arg0: i32) -> (i32, i32) {
    %c0_i32 = arith.constant 0 : i32
    %c0_i32_0 = arith.constant 0 : i32
    %c0_i32_1 = arith.constant 0 : i32
    return %c0_i32, %c0_i32_0 : i32, i32
  }
  func.func @transform_7(%arg0: i32) -> (i32, i32) {
    %c0_i32 = arith.constant 0 : i32
    %c0_i32_0 = arith.constant 0 : i32
    %c0_i32_1 = arith.constant 0 : i32
    return %c0_i32, %c0_i32_0 : i32, i32
  }
  func.func @transform_8(%arg0: i32) -> (i32, i32) {
    %c0_i32 = arith.constant 0 : i32
    %c0_i32_0 = arith.constant 0 : i32
    %c0_i32_1 = arith.constant 0 : i32
    return %c0_i32, %c0_i32_0 : i32, i32
  }
  func.func @transform_9(%arg0: i32) -> (i32, i32) {
    %c0_i32 = arith.constant 0 : i32
    %c0_i32_0 = arith.constant 0 : i32
    %c0_i32_1 = arith.constant 0 : i32
    return %c0_i32, %c0_i32_0 : i32, i32
  }
  func.func @transform_10(%arg0: i32) -> (i32, i32) {
    %c0_i32 = arith.constant 0 : i32
    %c0_i32_0 = arith.constant 0 : i32
    %c0_i32_1 = arith.constant 0 : i32
    return %c0_i32, %c0_i32_0 : i32, i32
  }
  func.func @transform_11(%arg0: i32) -> i32 {
    %c0_i32 = arith.constant 0 : i32
    %c0_i32_0 = arith.constant 0 : i32
    return %c0_i32 : i32
  }
  func.func @transform_12(%arg0: i32) -> i32 {
    %c0_i32 = arith.constant 0 : i32
    %c0_i32_0 = arith.constant 0 : i32
    return %c0_i32 : i32
  }
  func.func @transform_13(%arg0: i32) -> i32 {
    %c0_i32 = arith.constant 0 : i32
    %c0_i32_0 = arith.constant 0 : i32
    return %c0_i32 : i32
  }
  func.func @transform_14(%arg0: i32) -> (i32, i32) {
    %c0_i32 = arith.constant 0 : i32
    %c0_i32_0 = arith.constant 0 : i32
    return %arg0, %c0_i32 : i32, i32
  }
}

</mosaic_0001>

<llo_original>
// kernel: tpu_custom_call.1
$region0: #{tpu_custom_call.1}
  #allocation0 [shape = 'u32[]', space=smem, size = 0x4, offset = 0x4, fixed_abs, tag = 'smem constant byte address 0x4 - core index']
  #allocation1 [shape = 'u32[144,128]{1,0:T(1,128)}', space=vmem, size = 0x12000, scoped, tag = 'internal scratch']
  #allocation2 [shape = 'f32[1]{0:T(128)S(6)}', space=smem, size = 0x200, scoped, tag = 'scoped memory for tpu_custom_call.1']
  #allocation3 [shape = 'f32[1]{0:T(128)S(6)}', space=smem, size = 0x200, scoped, tag = 'scoped memory for tpu_custom_call.1']
  #allocation4 [shape = 'f32[1]{0:T(128)S(6)}', space=smem, size = 0x200, scoped, tag = 'scoped memory for tpu_custom_call.1']
  %s0 = inlined_call_operand.hbm [shape: f32[8,8,128], index: 0, kind: input, shape index: {}]
  %s1 = inlined_call_operand.hbm [shape: f32[256,128], index: 1, kind: input, shape index: {}]
  %s2 = inlined_call_operand.hbm [shape: f32[128,128], index: 2, kind: input, shape index: {}]
  %s3 = inlined_call_operand.vmem [shape: f32[1,128], index: 3, kind: input, shape index: {}]
  %s4 = inlined_call_operand.vmem [shape: f32[1,128], index: 4, kind: input, shape index: {}]
  %s5 = inlined_call_operand.vmem [shape: f32[1,512], index: 5, kind: input, shape index: {}]
  %s6 = inlined_call_operand.hbm [shape: f32[128,512], index: 6, kind: input, shape index: {}]
  %s7 = inlined_call_operand.vmem [shape: f32[1,512], index: 7, kind: input, shape index: {}]
  %s8 = inlined_call_operand.vmem [shape: f32[1,128], index: 8, kind: input, shape index: {}]
  %s9 = inlined_call_operand.vmem [shape: f32[1,128], index: 9, kind: input, shape index: {}]
  %s10 = inlined_call_operand.vmem [shape: f32[1,128], index: 10, kind: input, shape index: {}]
  %s11 = inlined_call_operand.<no memory space> [shape: f32[1], index: 11, kind: input, shape index: {}]
  %s12 = inlined_call_operand.<no memory space> [shape: f32[1], index: 12, kind: input, shape index: {}]
  %s13 = inlined_call_operand.<no memory space> [shape: f32[1], index: 13, kind: input, shape index: {}]
  %s14 = inlined_call_operand.vmem [shape: f32[8,1], index: 14, kind: output, shape index: {}]
  %s15 = sld [smem:[#allocation0]]
  $region82: #{tpu_custom_call.1} parent=0
    _
  %s17 = ssub.s32 1, %s15
  %s18 = scalar_select 0, %s17, %s15
  %19 = sst [smem:[#allocation2]] %s11
  %20 = sst [smem:[#allocation3]] %s12
  %21 = sst [smem:[#allocation4]] %s13
  $region1: #{tpu_custom_call.1} parent=0
    #allocation5 [shape = 'u8[32768]{0}', space=vmem, size = 0x8000, scoped, tag = 'input window, operand 0, single buffered']
    #allocation6 [shape = 's32[1]{0}', space=sflag, size = 0x4, scoped, tag = 'scoped memory for tpu_custom_call.1']
    #allocation7 [shape = 'u8[131072]{0}', space=vmem, size = 0x20000, scoped, tag = 'input window, operand 1, single buffered']
    #allocation8 [shape = 's32[1]{0}', space=sflag, size = 0x4, scoped, tag = 'scoped memory for tpu_custom_call.1']
    #allocation9 [shape = 'u8[65536]{0}', space=vmem, size = 0x10000, scoped, tag = 'input window, operand 2, single buffered']
    #allocation10 [shape = 'u8[262144]{0}', space=vmem, size = 0x40000, scoped, tag = 'input window, operand 6, single buffered']
    #allocation11 [shape = 's32[1]{0}', space=sflag, size = 0x4, scoped, tag = 'scoped memory for tpu_custom_call.1']
    %22 = vsyncpa [#allocation6], 0
    %23 = vsyncpa [#allocation8], 0
    %24 = vsyncpa [#allocation11], 0
    // Predicated region
    $region2: #{tpu_custom_call.1} parent=1 // pred_check
      _
    $region3: #{tpu_custom_call.1} parent=1 // pred_check_branch
      %26 = sbr.rel (0) target = $region5
    $region4: #{tpu_custom_call.1} parent=1 // pred_region
      %s28 = ssub.s32 1024, 1024
      %29 = vsyncadd [#allocation6], %s28
      %s30 = sshll.u32 [#allocation5], 4
      %s31 = int_to_ptr.vmem [resolvable:$true] %s30
      %36 = dma.hbm_to_vmem [thread:$0]  %s0, 1024, %s31, [#allocation6], 128, 128, 8
    $region5: #{tpu_custom_call.1} parent=1 // pred_fallthru
      _
    // Predicated region
    $region6: #{tpu_custom_call.1} parent=1 // pred_check
      _
    $region7: #{tpu_custom_call.1} parent=1 // pred_check_branch
      %38 = sbr.rel (0) target = $region9
    $region8: #{tpu_custom_call.1} parent=1 // pred_region
      %s40 = ssub.s32 4096, 4096
      %41 = vsyncadd [#allocation8], %s40
      %s42 = sshll.u32 [#allocation7], 4
      %s43 = int_to_ptr.vmem [resolvable:$true] %s42
      %48 = dma.hbm_to_vmem [thread:$0]  %s1, 4096, %s43, [#allocation8], 128, 128, 8
    $region9: #{tpu_custom_call.1} parent=1 // pred_fallthru
      _
    // Predicated region
    $region10: #{tpu_custom_call.1} parent=1 // pred_check
      _
    $region11: #{tpu_custom_call.1} parent=1 // pred_check_branch
      %50 = sbr.rel (0) target = $region13
    $region12: #{tpu_custom_call.1} parent=1 // pred_region
      %s52 = ssub.s32 2048, 2048
      %53 = vsyncadd [#allocation8], %s52
      %s54 = sshll.u32 [#allocation9], 4
      %s55 = int_to_ptr.vmem [resolvable:$true] %s54
      %60 = dma.hbm_to_vmem [thread:$0]  %s2, 2048, %s55, [#allocation8], 128, 128, 8
    $region13: #{tpu_custom_call.1} parent=1 // pred_fallthru
      _
    // Predicated region
    $region14: #{tpu_custom_call.1} parent=1 // pred_check
      _
    $region15: #{tpu_custom_call.1} parent=1 // pred_check_branch
      %62 = sbr.rel (0) target = $region17
    $region16: #{tpu_custom_call.1} parent=1 // pred_region
      _
    $region17: #{tpu_custom_call.1} parent=1 // pred_fallthru
      _
    // Predicated region
    $region18: #{tpu_custom_call.1} parent=1 // pred_check
      _
    $region19: #{tpu_custom_call.1} parent=1 // pred_check_branch
      %64 = sbr.rel (0) target = $region21
    $region20: #{tpu_custom_call.1} parent=1 // pred_region
      _
    $region21: #{tpu_custom_call.1} parent=1 // pred_fallthru
      _
    // Predicated region
    $region22: #{tpu_custom_call.1} parent=1 // pred_check
      _
    $region23: #{tpu_custom_call.1} parent=1 // pred_check_branch
      %66 = sbr.rel (0) target = $region25
    $region24: #{tpu_custom_call.1} parent=1 // pred_region
      _
    $region25: #{tpu_custom_call.1} parent=1 // pred_fallthru
      _
    // Predicated region
    $region26: #{tpu_custom_call.1} parent=1 // pred_check
      _
    $region27: #{tpu_custom_call.1} parent=1 // pred_check_branch
      %68 = sbr.rel (0) target = $region29
    $region28: #{tpu_custom_call.1} parent=1 // pred_region
      %s70 = ssub.s32 8192, 8192
      %71 = vsyncadd [#allocation11], %s70
      %s72 = sshll.u32 [#allocation10], 4
      %s73 = int_to_ptr.vmem [resolvable:$true] %s72
      %78 = dma.hbm_to_vmem [thread:$0]  %s6, 8192, %s73, [#allocation11], 512, 512, 32
    $region29: #{tpu_custom_call.1} parent=1 // pred_fallthru
      _
    // Predicated region
    $region30: #{tpu_custom_call.1} parent=1 // pred_check
      _
    $region31: #{tpu_custom_call.1} parent=1 // pred_check_branch
      %80 = sbr.rel (0) target = $region33
    $region32: #{tpu_custom_call.1} parent=1 // pred_region
      _
    $region33: #{tpu_custom_call.1} parent=1 // pred_fallthru
      _
    // Predicated region
    $region34: #{tpu_custom_call.1} parent=1 // pred_check
      _
    $region35: #{tpu_custom_call.1} parent=1 // pred_check_branch
      %82 = sbr.rel (0) target = $region37
    $region36: #{tpu_custom_call.1} parent=1 // pred_region
      _
    $region37: #{tpu_custom_call.1} parent=1 // pred_fallthru
      _
    // Predicated region
    $region38: #{tpu_custom_call.1} parent=1 // pred_check
      _
    $region39: #{tpu_custom_call.1} parent=1 // pred_check_branch
      %84 = sbr.rel (0) target = $region41
    $region40: #{tpu_custom_call.1} parent=1 // pred_region
      _
    $region41: #{tpu_custom_call.1} parent=1 // pred_fallthru
      _
    // Predicated region
    $region42: #{tpu_custom_call.1} parent=1 // pred_check
      _
    $region43: #{tpu_custom_call.1} parent=1 // pred_check_branch
      %86 = sbr.rel (0) target = $region45
    $region44: #{tpu_custom_call.1} parent=1 // pred_region
      _
    $region45: #{tpu_custom_call.1} parent=1 // pred_fallthru
      _
    // Predicated region
    $region46: #{tpu_custom_call.1} parent=1 // pred_check
      _
    $region47: #{tpu_custom_call.1} parent=1 // pred_check_branch
      %88 = sbr.rel (0) target = $region49
    $region48: #{tpu_custom_call.1} parent=1 // pred_region
      _
    $region49: #{tpu_custom_call.1} parent=1 // pred_fallthru
      _
    // Predicated region
    $region50: #{tpu_custom_call.1} parent=1 // pred_check
      _
    $region51: #{tpu_custom_call.1} parent=1 // pred_check_branch
      %90 = sbr.rel (0) target = $region53
    $region52: #{tpu_custom_call.1} parent=1 // pred_region
      _
    $region53: #{tpu_custom_call.1} parent=1 // pred_fallthru
      _
    // Predicated region
    $region54: #{tpu_custom_call.1} parent=1 // pred_check
      _
    $region55: #{tpu_custom_call.1} parent=1 // pred_check_branch
      %92 = sbr.rel (0) target = $region57
    $region56: #{tpu_custom_call.1} parent=1 // pred_region
      _
    $region57: #{tpu_custom_call.1} parent=1 // pred_fallthru
      _
    // Predicated region
    $region58: #{tpu_custom_call.1} parent=1 // pred_check
      _
    $region59: #{tpu_custom_call.1} parent=1 // pred_check_branch
      %94 = sbr.rel (0) target = $region61
    $region60: #{tpu_custom_call.1} parent=1 // pred_region
      %95 = dma.done [#allocation6], 1024
    $region61: #{tpu_custom_call.1} parent=1 // pred_fallthru
      _
    // Predicated region
    $region62: #{tpu_custom_call.1} parent=1 // pred_check
      _
    $region63: #{tpu_custom_call.1} parent=1 // pred_check_branch
      %97 = sbr.rel (0) target = $region65
    $region64: #{tpu_custom_call.1} parent=1 // pred_region
      %98 = dma.done [#allocation8], 4096
    $region65: #{tpu_custom_call.1} parent=1 // pred_fallthru
      _
    // Predicated region
    $region66: #{tpu_custom_call.1} parent=1 // pred_check
      _
    $region67: #{tpu_custom_call.1} parent=1 // pred_check_branch
      %100 = sbr.rel (0) target = $region69
    $region68: #{tpu_custom_call.1} parent=1 // pred_region
      %101 = dma.done [#allocation8], 2048
    $region69: #{tpu_custom_call.1} parent=1 // pred_fallthru
      _
    // Predicated region
    $region70: #{tpu_custom_call.1} parent=1 // pred_check
      _
    $region71: #{tpu_custom_call.1} parent=1 // pred_check_branch
      %103 = sbr.rel (0) target = $region73
    $region72: #{tpu_custom_call.1} parent=1 // pred_region
      %104 = dma.done [#allocation11], 8192
    $region73: #{tpu_custom_call.1} parent=1 // pred_fallthru
      _
    %v105 = vld [vmem:[#allocation5] sm:$0xff]
    %v106 = vld [vmem:[#allocation5 + $0x8] sm:$0xff]
    %v107 = vld [vmem:[#allocation5 + $0x10] sm:$0xff]
    %v108 = vld [vmem:[#allocation5 + $0x18] sm:$0xff]
    %v109 = vld [vmem:[#allocation5 + $0x20] sm:$0xff]
    %v110 = vld [vmem:[#allocation5 + $0x28] sm:$0xff]
    %v111 = vld [vmem:[#allocation5 + $0x30] sm:$0xff]
    %v112 = vld [vmem:[#allocation5 + $0x38] sm:$0xff]
    %v113 = vld [vmem:[%s4] sm:$0x1]
    %v114 = vld [vmem:[%s5] sm:$0xf]
    %v115 = vld [vmem:[%s7] sm:$0xf]
    %v116 = vld [vmem:[%s8] sm:$0x1]
    %s117 = sld [smem:[#allocation2]]
    %s118 = sld [smem:[#allocation3]]
    %v119 = vld [vmem:[#allocation9] sm:$0xff]
    %v120 = vld [vmem:[#allocation9 + $0x8] sm:$0xff]
    %v121 = vld [vmem:[#allocation9 + $0x10] sm:$0xff]
    %v122 = vld [vmem:[#allocation9 + $0x18] sm:$0xff]
    %v123 = vld [vmem:[#allocation9 + $0x20] sm:$0xff]
    %v124 = vld [vmem:[#allocation9 + $0x28] sm:$0xff]
    %v125 = vld [vmem:[#allocation9 + $0x30] sm:$0xff]
    %v126 = vld [vmem:[#allocation9 + $0x38] sm:$0xff]
    %v127 = vld [vmem:[#allocation9 + $0x40] sm:$0xff]
    %v128 = vld [vmem:[#allocation9 + $0x48] sm:$0xff]
    %v129 = vld [vmem:[#allocation9 + $0x50] sm:$0xff]
    %v130 = vld [vmem:[#allocation9 + $0x58] sm:$0xff]
    %v131 = vld [vmem:[#allocation9 + $0x60] sm:$0xff]
    %v132 = vld [vmem:[#allocation9 + $0x68] sm:$0xff]
    %v133 = vld [vmem:[#allocation9 + $0x70] sm:$0xff]
    %v134 = vld [vmem:[#allocation9 + $0x78] sm:$0xff]
    %135 = vmatprep.subr.mxu0 0.0
    %136 = vmatpush1.msra.mxu0 %v119
    %137 = vmatprep.subr.mxu0 0.0
    %138 = vmatpush1.msra.mxu0 %v120
    %139 = vmatprep.subr.mxu0 0.0
    %140 = vmatpush1.msra.mxu0 %v121
    %141 = vmatprep.subr.mxu0 0.0
    %142 = vmatpush1.msra.mxu0 %v122
    %143 = vmatprep.subr.mxu0 0.0
    %144 = vmatpush1.msra.mxu0 %v123
    %145 = vmatprep.subr.mxu0 0.0
    %146 = vmatpush1.msra.mxu0 %v124
    %147 = vmatprep.subr.mxu0 0.0
    %148 = vmatpush1.msra.mxu0 %v125
    %149 = vmatprep.subr.mxu0 0.0
    %150 = vmatpush1.msra.mxu0 %v126
    %151 = vmatprep.subr.mxu0 0.0
    %152 = vmatpush1.msra.mxu0 %v127
    %153 = vmatprep.subr.mxu0 0.0
    %154 = vmatpush1.msra.mxu0 %v128
    %155 = vmatprep.subr.mxu0 0.0
    %156 = vmatpush1.msra.mxu0 %v129
    %157 = vmatprep.subr.mxu0 0.0
    %158 = vmatpush1.msra.mxu0 %v130
    %159 = vmatprep.subr.mxu0 0.0
    %160 = vmatpush1.msra.mxu0 %v131
    %161 = vmatprep.subr.mxu0 0.0
    %162 = vmatpush1.msra.mxu0 %v132
    %163 = vmatprep.subr.mxu0 0.0
    %164 = vmatpush1.msra.mxu0 %v133
    %165 = vmatprep.subr.mxu0 0.0
    %166 = vmatpush1.msra.mxu0 %v134
    %167 = vmatprep.subr.mxu0 0.0
    %168 = vmatpush1.msra.mxu0 0.0
    %169 = vmatprep.subr.mxu0 0.0
    %170 = vmatpush1.msra.mxu0 0.0
    %171 = vmatprep.subr.mxu0 0.0
    %172 = vmatpush1.msra.mxu0 0.0
    %173 = vmatprep.subr.mxu0 0.0
    %174 = vmatpush1.msra.mxu0 0.0
    %175 = vmatprep.subr.mxu0 0.0
    %176 = vmatpush1.msra.mxu0 0.0
    %177 = vmatprep.subr.mxu0 0.0
    %178 = vmatpush1.msra.mxu0 0.0
    %179 = vmatprep.subr.mxu0 0.0
    %180 = vmatpush1.msra.mxu0 0.0
    %181 = vmatprep.subr.mxu0 0.0
    %182 = vmatpush1.msra.mxu0 0.0
    %183 = vmatprep.subr.mxu0 0.0
    %184 = vmatpush1.msra.mxu0 0.0
    %185 = vmatprep.subr.mxu0 0.0
    %186 = vmatpush1.msra.mxu0 0.0
    %187 = vmatprep.subr.mxu0 0.0
    %188 = vmatpush1.msra.mxu0 0.0
    %189 = vmatprep.subr.mxu0 0.0
    %190 = vmatpush1.msra.mxu0 0.0
    %191 = vmatprep.subr.mxu0 0.0
    %192 = vmatpush1.msra.mxu0 0.0
    %193 = vmatprep.subr.mxu0 0.0
    %194 = vmatpush1.msra.mxu0 0.0
    %195 = vmatprep.subr.mxu0 0.0
    %196 = vmatpush1.msra.mxu0 0.0
    %197 = vmatprep.subr.mxu0 0.0
    %198 = vmatpush1.msra.mxu0 0.0
    %199 = vmatprep.mubr.f32.mxu0 0.0
    %200 = vmatmul.mubr.f32.gmra.mrb[0].mxu0 %v105
    %v201 = vpop.f32.mrb[0].mxu0
    %v202 = vadd.f32 0.0, %v201
    %v203 = vpop.f32.mrb[0].mxu0
    %204 = vmatprep.mubr.f32.mxu0 0.0
    %205 = vmatmul.mubr.f32.gmra.mrb[0].mxu0 %v106
    %v206 = vpop.f32.mrb[0].mxu0
    %v207 = vadd.f32 0.0, %v206
    %v208 = vpop.f32.mrb[0].mxu0
    %209 = vmatprep.mubr.f32.mxu0 0.0
    %210 = vmatmul.mubr.f32.gmra.mrb[0].mxu0 %v107
    %v211 = vpop.f32.mrb[0].mxu0
    %v212 = vadd.f32 0.0, %v211
    %v213 = vpop.f32.mrb[0].mxu0
    %214 = vmatprep.mubr.f32.mxu0 0.0
    %215 = vmatmul.mubr.f32.gmra.mrb[0].mxu0 %v108
    %v216 = vpop.f32.mrb[0].mxu0
    %v217 = vadd.f32 0.0, %v216
    %v218 = vpop.f32.mrb[0].mxu0
    %219 = vmatprep.mubr.f32.mxu0 0.0
    %220 = vmatmul.mubr.f32.gmra.mrb[0].mxu0 %v109
    %v221 = vpop.f32.mrb[0].mxu0
    %v222 = vadd.f32 0.0, %v221
    %v223 = vpop.f32.mrb[0].mxu0
    %224 = vmatprep.mubr.f32.mxu0 0.0
    %225 = vmatmul.mubr.f32.gmra.mrb[0].mxu0 %v110
    %v226 = vpop.f32.mrb[0].mxu0
    %v227 = vadd.f32 0.0, %v226
    %v228 = vpop.f32.mrb[0].mxu0
    %229 = vmatprep.mubr.f32.mxu0 0.0
    %230 = vmatmul.mubr.f32.gmra.mrb[0].mxu0 %v111
    %v231 = vpop.f32.mrb[0].mxu0
    %v232 = vadd.f32 0.0, %v231
    %v233 = vpop.f32.mrb[0].mxu0
    %234 = vmatprep.mubr.f32.mxu0 0.0
    %235 = vmatmul.mubr.f32.gmra.mrb[0].mxu0 %v112
    %v236 = vpop.f32.mrb[0].mxu0
    %v237 = vadd.f32 0.0, %v236
    %v238 = vpop.f32.mrb[0].mxu0
    %239 = vdwg.mxu0
    %v240 = vld [vmem:[%s3] sm:$0x1]
    %v242 = vlaneseq
    %v243 = vshrl.u32 %v242, 7
    %v244 = vsub.s32 0, %v243
    %v245 = vrot.slane %v240, %v244
    %v247 = vadd.f32 %v202, %v245
    %v248 = vadd.f32 %v207, %v245
    %v249 = vadd.f32 %v212, %v245
    %v250 = vadd.f32 %v217, %v245
    %v251 = vadd.f32 %v222, %v245
    %v252 = vadd.f32 %v227, %v245
    %v253 = vadd.f32 %v232, %v245
    %v254 = vadd.f32 %v237, %v245
    %v255 = vld [vmem:[#allocation10] sm:$0xff]
    %v256 = vld [vmem:[#allocation10 + $0x8] sm:$0xff]
    %v257 = vld [vmem:[#allocation10 + $0x10] sm:$0xff]
    %v258 = vld [vmem:[#allocation10 + $0x18] sm:$0xff]
    %v259 = vld [vmem:[#allocation10 + $0x20] sm:$0xff]
    %v260 = vld [vmem:[#allocation10 + $0x28] sm:$0xff]
    %v261 = vld [vmem:[#allocation10 + $0x30] sm:$0xff]
    %v262 = vld [vmem:[#allocation10 + $0x38] sm:$0xff]
    %v263 = vld [vmem:[#allocation10 + $0x40] sm:$0xff]
    %v264 = vld [vmem:[#allocation10 + $0x48] sm:$0xff]
    %v265 = vld [vmem:[#allocation10 + $0x50] sm:$0xff]
    %v266 = vld [vmem:[#allocation10 + $0x58] sm:$0xff]
    %v267 = vld [vmem:[#allocation10 + $0x60] sm:$0xff]
    %v268 = vld [vmem:[#allocation10 + $0x68] sm:$0xff]
    %v269 = vld [vmem:[#allocation10 + $0x70] sm:$0xff]
    %v270 = vld [vmem:[#allocation10 + $0x78] sm:$0xff]
    %v271 = vld [vmem:[#allocation10 + $0x80] sm:$0xff]
    %v272 = vld [vmem:[#allocation10 + $0x88] sm:$0xff]
    %v273 = vld [vmem:[#allocation10 + $0x90] sm:$0xff]
    %v274 = vld [vmem:[#allocation10 + $0x98] sm:$0xff]
    %v275 = vld [vmem:[#allocation10 + $0xa0] sm:$0xff]
    %v276 = vld [vmem:[#allocation10 + $0xa8] sm:$0xff]
    %v277 = vld [vmem:[#allocation10 + $0xb0] sm:$0xff]
    %v278 = vld [vmem:[#allocation10 + $0xb8] sm:$0xff]
    %v279 = vld [vmem:[#allocation10 + $0xc0] sm:$0xff]
    %v280 = vld [vmem:[#allocation10 + $0xc8] sm:$0xff]
    %v281 = vld [vmem:[#allocation10 + $0xd0] sm:$0xff]
    %v282 = vld [vmem:[#allocation10 + $0xd8] sm:$0xff]
    %v283 = vld [vmem:[#allocation10 + $0xe0] sm:$0xff]
    %v284 = vld [vmem:[#allocation10 + $0xe8] sm:$0xff]
    %v285 = vld [vmem:[#allocation10 + $0xf0] sm:$0xff]
    %v286 = vld [vmem:[#allocation10 + $0xf8] sm:$0xff]
    %v287 = vld [vmem:[#allocation10 + $0x100] sm:$0xff]
    %v288 = vld [vmem:[#allocation10 + $0x108] sm:$0xff]
    %v289 = vld [vmem:[#allocation10 + $0x110] sm:$0xff]
    %v290 = vld [vmem:[#allocation10 + $0x118] sm:$0xff]
    %v291 = vld [vmem:[#allocation10 + $0x120] sm:$0xff]
    %v292 = vld [vmem:[#allocation10 + $0x128] sm:$0xff]
    %v293 = vld [vmem:[#allocation10 + $0x130] sm:$0xff]
    %v294 = vld [vmem:[#allocation10 + $0x138] sm:$0xff]
    %v295 = vld [vmem:[#allocation10 + $0x140] sm:$0xff]
    %v296 = vld [vmem:[#allocation10 + $0x148] sm:$0xff]
    %v297 = vld [vmem:[#allocation10 + $0x150] sm:$0xff]
    %v298 = vld [vmem:[#allocation10 + $0x158] sm:$0xff]
    %v299 = vld [vmem:[#allocation10 + $0x160] sm:$0xff]
    %v300 = vld [vmem:[#allocation10 + $0x168] sm:$0xff]
    %v301 = vld [vmem:[#allocation10 + $0x170] sm:$0xff]
    %v302 = vld [vmem:[#allocation10 + $0x178] sm:$0xff]
    %v303 = vld [vmem:[#allocation10 + $0x180] sm:$0xff]
    %v304 = vld [vmem:[#allocation10 + $0x188] sm:$0xff]
    %v305 = vld [vmem:[#allocation10 + $0x190] sm:$0xff]
    %v306 = vld [vmem:[#allocation10 + $0x198] sm:$0xff]
    %v307 = vld [vmem:[#allocation10 + $0x1a0] sm:$0xff]
    %v308 = vld [vmem:[#allocation10 + $0x1a8] sm:$0xff]
    %v309 = vld [vmem:[#allocation10 + $0x1b0] sm:$0xff]
    %v310 = vld [vmem:[#allocation10 + $0x1b8] sm:$0xff]
    %v311 = vld [vmem:[#allocation10 + $0x1c0] sm:$0xff]
    %v312 = vld [vmem:[#allocation10 + $0x1c8] sm:$0xff]
    %v313 = vld [vmem:[#allocation10 + $0x1d0] sm:$0xff]
    %v314 = vld [vmem:[#allocation10 + $0x1d8] sm:$0xff]
    %v315 = vld [vmem:[#allocation10 + $0x1e0] sm:$0xff]
    %v316 = vld [vmem:[#allocation10 + $0x1e8] sm:$0xff]
    %v317 = vld [vmem:[#allocation10 + $0x1f0] sm:$0xff]
    %v318 = vld [vmem:[#allocation10 + $0x1f8] sm:$0xff]
    %319 = vmatprep.subr.mxu0 %v256
    %320 = vmatpush1.msra.mxu0 %v255
    %321 = vmatprep.subr.mxu0 %v260
    %322 = vmatpush1.msra.mxu0 %v259
    %323 = vmatprep.subr.mxu0 %v264
    %324 = vmatpush1.msra.mxu0 %v263
    %325 = vmatprep.subr.mxu0 %v268
    %326 = vmatpush1.msra.mxu0 %v267
    %327 = vmatprep.subr.mxu0 %v272
    %328 = vmatpush1.msra.mxu0 %v271
    %329 = vmatprep.subr.mxu0 %v276
    %330 = vmatpush1.msra.mxu0 %v275
    %331 = vmatprep.subr.mxu0 %v280
    %332 = vmatpush1.msra.mxu0 %v279
    %333 = vmatprep.subr.mxu0 %v284
    %334 = vmatpush1.msra.mxu0 %v283
    %335 = vmatprep.subr.mxu0 %v288
    %336 = vmatpush1.msra.mxu0 %v287
    %337 = vmatprep.subr.mxu0 %v292
    %338 = vmatpush1.msra.mxu0 %v291
    %339 = vmatprep.subr.mxu0 %v296
    %340 = vmatpush1.msra.mxu0 %v295
    %341 = vmatprep.subr.mxu0 %v300
    %342 = vmatpush1.msra.mxu0 %v299
    %343 = vmatprep.subr.mxu0 %v304
    %344 = vmatpush1.msra.mxu0 %v303
    %345 = vmatprep.subr.mxu0 %v308
    %346 = vmatpush1.msra.mxu0 %v307
    %347 = vmatprep.subr.mxu0 %v312
    %348 = vmatpush1.msra.mxu0 %v311
    %349 = vmatprep.subr.mxu0 %v316
    %350 = vmatpush1.msra.mxu0 %v315
    %351 = vmatprep.subr.mxu0 0.0
    %352 = vmatpush1.msra.mxu0 0.0
    %353 = vmatprep.subr.mxu0 0.0
    %354 = vmatpush1.msra.mxu0 0.0
    %355 = vmatprep.subr.mxu0 0.0
    %356 = vmatpush1.msra.mxu0 0.0
    %357 = vmatprep.subr.mxu0 0.0
    %358 = vmatpush1.msra.mxu0 0.0
    %359 = vmatprep.subr.mxu0 0.0
    %360 = vmatpush1.msra.mxu0 0.0
    %361 = vmatprep.subr.mxu0 0.0
    %362 = vmatpush1.msra.mxu0 0.0
    %363 = vmatprep.subr.mxu0 0.0
    %364 = vmatpush1.msra.mxu0 0.0
    %365 = vmatprep.subr.mxu0 0.0
    %366 = vmatpush1.msra.mxu0 0.0
    %367 = vmatprep.subr.mxu0 0.0
    %368 = vmatpush1.msra.mxu0 0.0
    %369 = vmatprep.subr.mxu0 0.0
    %370 = vmatpush1.msra.mxu0 0.0
    %371 = vmatprep.subr.mxu0 0.0
    %372 = vmatpush1.msra.mxu0 0.0
    %373 = vmatprep.subr.mxu0 0.0
    %374 = vmatpush1.msra.mxu0 0.0
    %375 = vmatprep.subr.mxu0 0.0
    %376 = vmatpush1.msra.mxu0 0.0
    %377 = vmatprep.subr.mxu0 0.0
    %378 = vmatpush1.msra.mxu0 0.0
    %379 = vmatprep.subr.mxu0 0.0
    %380 = vmatpush1.msra.mxu0 0.0
    %381 = vmatprep.subr.mxu0 0.0
    %382 = vmatpush1.msra.mxu0 0.0
    %383 = vmatprep.mubr.f32.mxu0 0.0
    %384 = vmatmul.mubr.f32.gmra.mrb[0].mxu0 0.0
    %v385 = vpop.f32.mrb[0].mxu0
    %v386 = vadd.f32 0.0, %v385
    %v387 = vpop.f32.mrb[0].mxu0
    %v388 = vadd.f32 0.0, %v387
    %389 = vdwg.mxu0
    %390 = vmatprep.subr.mxu0 %v258
    %391 = vmatpush1.msra.mxu0 %v257
    %392 = vmatprep.subr.mxu0 %v262
    %393 = vmatpush1.msra.mxu0 %v261
    %394 = vmatprep.subr.mxu0 %v266
    %395 = vmatpush1.msra.mxu0 %v265
    %396 = vmatprep.subr.mxu0 %v270
    %397 = vmatpush1.msra.mxu0 %v269
    %398 = vmatprep.subr.mxu0 %v274
    %399 = vmatpush1.msra.mxu0 %v273
    %400 = vmatprep.subr.mxu0 %v278
    %401 = vmatpush1.msra.mxu0 %v277
    %402 = vmatprep.subr.mxu0 %v282
    %403 = vmatpush1.msra.mxu0 %v281
    %404 = vmatprep.subr.mxu0 %v286
    %405 = vmatpush1.msra.mxu0 %v285
    %406 = vmatprep.subr.mxu0 %v290
    %407 = vmatpush1.msra.mxu0 %v289
    %408 = vmatprep.subr.mxu0 %v294
    %409 = vmatpush1.msra.mxu0 %v293
    %410 = vmatprep.subr.mxu0 %v298
    %411 = vmatpush1.msra.mxu0 %v297
    %412 = vmatprep.subr.mxu0 %v302
    %413 = vmatpush1.msra.mxu0 %v301
    %414 = vmatprep.subr.mxu0 %v306
    %415 = vmatpush1.msra.mxu0 %v305
    %416 = vmatprep.subr.mxu0 %v310
    %417 = vmatpush1.msra.mxu0 %v309
    %418 = vmatprep.subr.mxu0 %v314
    %419 = vmatpush1.msra.mxu0 %v313
    %420 = vmatprep.subr.mxu0 %v318
    %421 = vmatpush1.msra.mxu0 %v317
    %422 = vmatprep.subr.mxu0 0.0
    %423 = vmatpush1.msra.mxu0 0.0
    %424 = vmatprep.subr.mxu0 0.0
    %425 = vmatpush1.msra.mxu0 0.0
    %426 = vmatprep.subr.mxu0 0.0
    %427 = vmatpush1.msra.mxu0 0.0
    %428 = vmatprep.subr.mxu0 0.0
    %429 = vmatpush1.msra.mxu0 0.0
    %430 = vmatprep.subr.mxu0 0.0
    %431 = vmatpush1.msra.mxu0 0.0
    %432 = vmatprep.subr.mxu0 0.0
    %433 = vmatpush1.msra.mxu0 0.0
    %434 = vmatprep.subr.mxu0 0.0
    %435 = vmatpush1.msra.mxu0 0.0
    %436 = vmatprep.subr.mxu0 0.0
    %437 = vmatpush1.msra.mxu0 0.0
    %438 = vmatprep.subr.mxu0 0.0
    %439 = vmatpush1.msra.mxu0 0.0
    %440 = vmatprep.subr.mxu0 0.0
    %441 = vmatpush1.msra.mxu0 0.0
    %442 = vmatprep.subr.mxu0 0.0
    %443 = vmatpush1.msra.mxu0 0.0
    %444 = vmatprep.subr.mxu0 0.0
    %445 = vmatpush1.msra.mxu0 0.0
    %446 = vmatprep.subr.mxu0 0.0
    %447 = vmatpush1.msra.mxu0 0.0
    %448 = vmatprep.subr.mxu0 0.0
    %449 = vmatpush1.msra.mxu0 0.0
    %450 = vmatprep.subr.mxu0 0.0
    %451 = vmatpush1.msra.mxu0 0.0
    %452 = vmatprep.subr.mxu0 0.0
    %453 = vmatpush1.msra.mxu0 0.0
    %454 = vmatprep.mubr.f32.mxu0 0.0
    %455 = vmatmul.mubr.f32.gmra.mrb[0].mxu0 0.0
    %v456 = vpop.f32.mrb[0].mxu0
    %v457 = vadd.f32 0.0, %v456
    %v458 = vpop.f32.mrb[0].mxu0
    %v459 = vadd.f32 0.0, %v458
    %460 = vdwg.mxu0
    %v461 = vld [vmem:[#allocation7] sm:$0xff]
    %v462 = vld [vmem:[#allocation7 + $0x8] sm:$0xff]
    %v463 = vld [vmem:[#allocation7 + $0x10] sm:$0xff]
    %v464 = vld [vmem:[#allocation7 + $0x18] sm:$0xff]
    %v465 = vld [vmem:[#allocation7 + $0x20] sm:$0xff]
    %v466 = vld [vmem:[#allocation7 + $0x28] sm:$0xff]
    %v467 = vld [vmem:[#allocation7 + $0x30] sm:$0xff]
    %v468 = vld [vmem:[#allocation7 + $0x38] sm:$0xff]
    %v469 = vld [vmem:[#allocation7 + $0x40] sm:$0xff]
    %v470 = vld [vmem:[#allocation7 + $0x48] sm:$0xff]
    %v471 = vld [vmem:[#allocation7 + $0x50] sm:$0xff]
    %v472 = vld [vmem:[#allocation7 + $0x58] sm:$0xff]
    %v473 = vld [vmem:[#allocation7 + $0x60] sm:$0xff]
    %v474 = vld [vmem:[#allocation7 + $0x68] sm:$0xff]
    %v475 = vld [vmem:[#allocation7 + $0x70] sm:$0xff]
    %v476 = vld [vmem:[#allocation7 + $0x78] sm:$0xff]
    %v477 = vld [vmem:[#allocation7 + $0x80] sm:$0xff]
    %v478 = vld [vmem:[#allocation7 + $0x88] sm:$0xff]
    %v479 = vld [vmem:[#allocation7 + $0x90] sm:$0xff]
    %v480 = vld [vmem:[#allocation7 + $0x98] sm:$0xff]
    %v481 = vld [vmem:[#allocation7 + $0xa0] sm:$0xff]
    %v482 = vld [vmem:[#allocation7 + $0xa8] sm:$0xff]
    %v483 = vld [vmem:[#allocation7 + $0xb0] sm:$0xff]
    %v484 = vld [vmem:[#allocation7 + $0xb8] sm:$0xff]
    %v485 = vld [vmem:[#allocation7 + $0xc0] sm:$0xff]
    %v486 = vld [vmem:[#allocation7 + $0xc8] sm:$0xff]
    %v487 = vld [vmem:[#allocation7 + $0xd0] sm:$0xff]
    %v488 = vld [vmem:[#allocation7 + $0xd8] sm:$0xff]
    %v489 = vld [vmem:[#allocation7 + $0xe0] sm:$0xff]
    %v490 = vld [vmem:[#allocation7 + $0xe8] sm:$0xff]
    %v491 = vld [vmem:[#allocation7 + $0xf0] sm:$0xff]
    %v492 = vld [vmem:[#allocation7 + $0xf8] sm:$0xff]
    %493 = vmatprep.subr.mxu0 0.0
    %494 = vmatpush1.msra.mxu0 %v461
    %495 = vmatprep.subr.mxu0 0.0
    %496 = vmatpush1.msra.mxu0 %v462
    %497 = vmatprep.subr.mxu0 0.0
    %498 = vmatpush1.msra.mxu0 %v463
    %499 = vmatprep.subr.mxu0 0.0
    %500 = vmatpush1.msra.mxu0 %v464
    %501 = vmatprep.subr.mxu0 0.0
    %502 = vmatpush1.msra.mxu0 %v465
    %503 = vmatprep.subr.mxu0 0.0
    %504 = vmatpush1.msra.mxu0 %v466
    %505 = vmatprep.subr.mxu0 0.0
    %506 = vmatpush1.msra.mxu0 %v467
    %507 = vmatprep.subr.mxu0 0.0
    %508 = vmatpush1.msra.mxu0 %v468
    %509 = vmatprep.subr.mxu0 0.0
    %510 = vmatpush1.msra.mxu0 %v469
    %511 = vmatprep.subr.mxu0 0.0
    %512 = vmatpush1.msra.mxu0 %v470
    %513 = vmatprep.subr.mxu0 0.0
    %514 = vmatpush1.msra.mxu0 %v471
    %515 = vmatprep.subr.mxu0 0.0
    %516 = vmatpush1.msra.mxu0 %v472
    %517 = vmatprep.subr.mxu0 0.0
    %518 = vmatpush1.msra.mxu0 %v473
    %519 = vmatprep.subr.mxu0 0.0
    %520 = vmatpush1.msra.mxu0 %v474
    %521 = vmatprep.subr.mxu0 0.0
    %522 = vmatpush1.msra.mxu0 %v475
    %523 = vmatprep.subr.mxu0 0.0
    %524 = vmatpush1.msra.mxu0 %v476
    %525 = vmatprep.subr.mxu0 0.0
    %526 = vmatpush1.msra.mxu0 %v477
    %527 = vmatprep.subr.mxu0 0.0
    %528 = vmatpush1.msra.mxu0 %v478
    %529 = vmatprep.subr.mxu0 0.0
    %530 = vmatpush1.msra.mxu0 %v479
    %531 = vmatprep.subr.mxu0 0.0
    %532 = vmatpush1.msra.mxu0 %v480
    %533 = vmatprep.subr.mxu0 0.0
    %534 = vmatpush1.msra.mxu0 %v481
    %535 = vmatprep.subr.mxu0 0.0
    %536 = vmatpush1.msra.mxu0 %v482
    %537 = vmatprep.subr.mxu0 0.0
    %538 = vmatpush1.msra.mxu0 %v483
    %539 = vmatprep.subr.mxu0 0.0
    %540 = vmatpush1.msra.mxu0 %v484
    %541 = vmatprep.subr.mxu0 0.0
    %542 = vmatpush1.msra.mxu0 %v485
    %543 = vmatprep.subr.mxu0 0.0
    %544 = vmatpush1.msra.mxu0 %v486
    %545 = vmatprep.subr.mxu0 0.0
    %546 = vmatpush1.msra.mxu0 %v487
    %547 = vmatprep.subr.mxu0 0.0
    %548 = vmatpush1.msra.mxu0 %v488
    %549 = vmatprep.subr.mxu0 0.0
    %550 = vmatpush1.msra.mxu0 %v489
    %551 = vmatprep.subr.mxu0 0.0
    %552 = vmatpush1.msra.mxu0 %v490
    %553 = vmatprep.subr.mxu0 0.0
    %554 = vmatpush1.msra.mxu0 %v491
    %555 = vmatprep.subr.mxu0 0.0
    %556 = vmatpush1.msra.mxu0 %v492
    %557 = vmatprep.mubr.f32.mxu0 0.0
    %558 = vmatmul.mubr.f32.gmra.mrb[0].mxu0 0.0
    %v559 = vpop.f32.mrb[0].mxu0
    %v560 = vadd.f32 0.0, %v559
    %v561 = vpop.f32.mrb[0].mxu0
    %562 = vdwg.mxu0
    %v564 = vcombine.high %v560, %v560
    %v566 = vunpack.c.l.s4 1966171168
    %v567 = vunpack.c.0.s8 %v566
    %v568 = vlaneseq
    %v569 = vshrl.u32 %v568, 7
    %v570 = vsub.s32 %v567, %v569
    %v571 = vrot.slane %v560, %v570
    %v573 = vunpack.c.l.s4 1966171168
    %v574 = vunpack.c.0.s8 %v573
    %v575 = vlaneseq
    %v576 = vshrl.u32 %v575, 7
    %v577 = vsub.s32 %v574, %v576
    %v578 = vrot.slane %v564, %v577
    %v579 = vcombine.high %v571, %v571
    %v580 = vcombine.high %v578, %v578
    %v582 = vunpack.c.l.s4 1966171168
    %v583 = vunpack.c.0.s8 %v582
    %v584 = vlaneseq
    %v585 = vshrl.u32 %v584, 7
    %v586 = vsub.s32 %v583, %v585
    %v587 = vrot.slane %v571, %v586
    %v589 = vunpack.c.l.s4 1966171168
    %v590 = vunpack.c.0.s8 %v589
    %v591 = vlaneseq
    %v592 = vshrl.u32 %v591, 7
    %v593 = vsub.s32 %v590, %v592
    %v594 = vrot.slane %v578, %v593
    %v596 = vunpack.c.l.s4 1966171168
    %v597 = vunpack.c.0.s8 %v596
    %v598 = vlaneseq
    %v599 = vshrl.u32 %v598, 7
    %v600 = vsub.s32 %v597, %v599
    %v601 = vrot.slane %v579, %v600
    %v603 = vunpack.c.l.s4 1966171168
    %v604 = vunpack.c.0.s8 %v603
    %v605 = vlaneseq
    %v606 = vshrl.u32 %v605, 7
    %v607 = vsub.s32 %v604, %v606
    %v608 = vrot.slane %v580, %v607
    %v609 = vcombine.high %v587, %v587
    %v610 = vcombine.high %v594, %v594
    %v611 = vcombine.high %v601, %v601
    %v612 = vcombine.high %v608, %v608
    %v613 = vlaneseq
    %v614 = vshrl.u32 %v613, 7
    %v615 = vsub.s32 0, %v614
    %v616 = vrot.slane %v587, %v615
    %v617 = vlaneseq
    %v618 = vshrl.u32 %v617, 7
    %v619 = vsub.s32 0, %v618
    %v620 = vrot.slane %v601, %v619
    %v621 = vlaneseq
    %v622 = vshrl.u32 %v621, 7
    %v623 = vsub.s32 0, %v622
    %v624 = vrot.slane %v609, %v623
    %v625 = vlaneseq
    %v626 = vshrl.u32 %v625, 7
    %v627 = vsub.s32 0, %v626
    %v628 = vrot.slane %v611, %v627
    %v629 = vlaneseq
    %v630 = vshrl.u32 %v629, 7
    %v631 = vsub.s32 0, %v630
    %v632 = vrot.slane %v594, %v631
    %v633 = vlaneseq
    %v634 = vshrl.u32 %v633, 7
    %v635 = vsub.s32 0, %v634
    %v636 = vrot.slane %v608, %v635
    %v637 = vlaneseq
    %v638 = vshrl.u32 %v637, 7
    %v639 = vsub.s32 0, %v638
    %v640 = vrot.slane %v610, %v639
    %v641 = vlaneseq
    %v642 = vshrl.u32 %v641, 7
    %v643 = vsub.s32 0, %v642
    %v644 = vrot.slane %v612, %v643
    %v653 = vadd.f32 %v616, %v247
    %v654 = vadd.f32 %v620, %v248
    %v655 = vadd.f32 %v624, %v249
    %v656 = vadd.f32 %v628, %v250
    %v657 = vadd.f32 %v632, %v251
    %v658 = vadd.f32 %v636, %v252
    %v659 = vadd.f32 %v640, %v253
    %v660 = vadd.f32 %v644, %v254
    %v661 = vtanh.pop %v653
    %v662 = vtanh.pop %v654
    %v663 = vtanh.pop %v655
    %v664 = vtanh.pop %v656
    %v665 = vtanh.pop %v657
    %v666 = vtanh.pop %v658
    %v667 = vtanh.pop %v659
    %v668 = vtanh.pop %v660
    %v670 = vlaneseq
    %v671 = vshrl.u32 %v670, 7
    %v672 = vsub.s32 0, %v671
    %v673 = vrot.slane %v113, %v672
    %v675 = vmul.f32 %v661, %v673
    %v676 = vmul.f32 %v662, %v673
    %v677 = vmul.f32 %v663, %v673
    %v678 = vmul.f32 %v664, %v673
    %v679 = vmul.f32 %v665, %v673
    %v680 = vmul.f32 %v666, %v673
    %v681 = vmul.f32 %v667, %v673
    %v682 = vmul.f32 %v668, %v673
    %683 = vadd.xlane.f32.xlu0 %v675
    %v684 = vpop.xlane.xlu0 %683
    %685 = vadd.xlane.f32.xlu0 %v676
    %v686 = vpop.xlane.xlu0 %685
    %687 = vadd.xlane.f32.xlu0 %v677
    %v688 = vpop.xlane.xlu0 %687
    %689 = vadd.xlane.f32.xlu0 %v678
    %v690 = vpop.xlane.xlu0 %689
    %691 = vadd.xlane.f32.xlu0 %v679
    %v692 = vpop.xlane.xlu0 %691
    %693 = vadd.xlane.f32.xlu0 %v680
    %v694 = vpop.xlane.xlu0 %693
    %695 = vadd.xlane.f32.xlu0 %v681
    %v696 = vpop.xlane.xlu0 %695
    %697 = vadd.xlane.f32.xlu0 %v682
    %v698 = vpop.xlane.xlu0 %697
    %v699 = vmul.f32 %v684, 1.442695
    %v700 = vpow.pop %v699
    %v701 = vmul.f32 %v686, 1.442695
    %v702 = vpow.pop %v701
    %v703 = vmul.f32 %v688, 1.442695
    %v704 = vpow.pop %v703
    %v705 = vmul.f32 %v690, 1.442695
    %v706 = vpow.pop %v705
    %v707 = vmul.f32 %v692, 1.442695
    %v708 = vpow.pop %v707
    %v709 = vmul.f32 %v694, 1.442695
    %v710 = vpow.pop %v709
    %v711 = vmul.f32 %v696, 1.442695
    %v712 = vpow.pop %v711
    %v713 = vmul.f32 %v698, 1.442695
    %v714 = vpow.pop %v713
    %v723 = vlaneseq
    %v724 = vand.u32 %v723, 127
    %v725 = vlaneseq
    %v726 = vshrl.u32 %v725, 7
    %v727 = vsub.s32 %v724, %v726
    %v728 = vrot.slane %v700, %v727
    %v729 = vlaneseq
    %v730 = vshrl.u32 %v729, 7
    %v731 = vsub.s32 %v724, %v730
    %v732 = vrot.slane %v702, %v731
    %v733 = vlaneseq
    %v734 = vshrl.u32 %v733, 7
    %v735 = vsub.s32 %v724, %v734
    %v736 = vrot.slane %v704, %v735
    %v737 = vlaneseq
    %v738 = vshrl.u32 %v737, 7
    %v739 = vsub.s32 %v724, %v738
    %v740 = vrot.slane %v706, %v739
    %v741 = vlaneseq
    %v742 = vshrl.u32 %v741, 7
    %v743 = vsub.s32 %v724, %v742
    %v744 = vrot.slane %v708, %v743
    %v745 = vlaneseq
    %v746 = vshrl.u32 %v745, 7
    %v747 = vsub.s32 %v724, %v746
    %v748 = vrot.slane %v710, %v747
    %v749 = vlaneseq
    %v750 = vshrl.u32 %v749, 7
    %v751 = vsub.s32 %v724, %v750
    %v752 = vrot.slane %v712, %v751
    %v753 = vlaneseq
    %v754 = vshrl.u32 %v753, 7
    %v755 = vsub.s32 %v724, %v754
    %v756 = vrot.slane %v714, %v755
    %vm757 = vcmask 1041409
    %v758 = vsel %vm757, %v732, %v728
    %vm759 = vcmask 1042434
    %v760 = vsel %vm759, %v736, %v758
    %vm761 = vcmask 1043459
    %v762 = vsel %vm761, %v740, %v760
    %vm763 = vcmask 1044484
    %v764 = vsel %vm763, %v744, %v762
    %vm765 = vcmask 1045509
    %v766 = vsel %vm765, %v748, %v764
    %vm767 = vcmask 1046534
    %v768 = vsel %vm767, %v752, %v766
    %vm769 = vcmask 1047559
    %v770 = vsel %vm769, %v756, %v768
    %vm772 = vcmask 64512
    %v773 = vsel %vm772, %v770, 0.0
    %774 = vadd.xlane.f32.xlu0 %v773
    %v775 = vpop.xlane.xlu0 %774
    %v776 = vrcp.pop %v775
    %v778 = vlaneseq
    %v779 = vshrl.u32 %v778, 7
    %v780 = vsub.s32 0, %v779
    %v781 = vrot.slane %v776, %v780
    %v782 = vlaneseq
    %v783 = vshrl.u32 %v782, 7
    %v784 = vsub.s32 1, %v783
    %v785 = vrot.slane %v776, %v784
    %v786 = vlaneseq
    %v787 = vshrl.u32 %v786, 7
    %v788 = vsub.s32 2, %v787
    %v789 = vrot.slane %v776, %v788
    %v790 = vlaneseq
    %v791 = vshrl.u32 %v790, 7
    %v792 = vsub.s32 3, %v791
    %v793 = vrot.slane %v776, %v792
    %v794 = vlaneseq
    %v795 = vshrl.u32 %v794, 7
    %v796 = vsub.s32 4, %v795
    %v797 = vrot.slane %v776, %v796
    %v798 = vlaneseq
    %v799 = vshrl.u32 %v798, 7
    %v800 = vsub.s32 5, %v799
    %v801 = vrot.slane %v776, %v800
    %v802 = vlaneseq
    %v803 = vshrl.u32 %v802, 7
    %v804 = vsub.s32 6, %v803
    %v805 = vrot.slane %v776, %v804
    %v806 = vlaneseq
    %v807 = vshrl.u32 %v806, 7
    %v808 = vsub.s32 7, %v807
    %v809 = vrot.slane %v776, %v808
    %v818 = vmul.f32 %v700, %v781
    %v819 = vmul.f32 %v702, %v785
    %v820 = vmul.f32 %v704, %v789
    %v821 = vmul.f32 %v706, %v793
    %v822 = vmul.f32 %v708, %v797
    %v823 = vmul.f32 %v710, %v801
    %v824 = vmul.f32 %v712, %v805
    %v825 = vmul.f32 %v714, %v809
    %827 = vset.pattern.permute.xlu0 0
    %828 = vperm.xlu0 %827, %v818
    %v829 = vpop.permute.xlu0 %828
    %832 = vset.pattern.permute.xlu0 0
    %833 = vperm.xlu0 %832, %v819
    %v834 = vpop.permute.xlu0 %833
    %837 = vset.pattern.permute.xlu0 0
    %838 = vperm.xlu0 %837, %v820
    %v839 = vpop.permute.xlu0 %838
    %842 = vset.pattern.permute.xlu0 0
    %843 = vperm.xlu0 %842, %v821
    %v844 = vpop.permute.xlu0 %843
    %847 = vset.pattern.permute.xlu0 0
    %848 = vperm.xlu0 %847, %v822
    %v849 = vpop.permute.xlu0 %848
    %852 = vset.pattern.permute.xlu0 0
    %853 = vperm.xlu0 %852, %v823
    %v854 = vpop.permute.xlu0 %853
    %857 = vset.pattern.permute.xlu0 0
    %858 = vperm.xlu0 %857, %v824
    %v859 = vpop.permute.xlu0 %858
    %862 = vset.pattern.permute.xlu0 0
    %863 = vperm.xlu0 %862, %v825
    %v864 = vpop.permute.xlu0 %863
    %v866 = vmul.f32 %v829, %v105
    %v867 = vmul.f32 %v834, %v106
    %v868 = vmul.f32 %v839, %v107
    %v869 = vmul.f32 %v844, %v108
    %v870 = vmul.f32 %v849, %v109
    %v871 = vmul.f32 %v854, %v110
    %v872 = vmul.f32 %v859, %v111
    %v873 = vmul.f32 %v864, %v112
    %v874 = vrot.slane %v866, 4
    %v875 = vadd.f32 %v866, %v874
    %v876 = vrot.slane %v875, 2
    %v877 = vadd.f32 %v875, %v876
    %v878 = vrot.slane %v877, 1
    %v879 = vadd.f32 %v877, %v878
    %v880 = vrot.slane %v867, 4
    %v881 = vadd.f32 %v867, %v880
    %v882 = vrot.slane %v881, 2
    %v883 = vadd.f32 %v881, %v882
    %v884 = vrot.slane %v883, 1
    %v885 = vadd.f32 %v883, %v884
    %v886 = vrot.slane %v868, 4
    %v887 = vadd.f32 %v868, %v886
    %v888 = vrot.slane %v887, 2
    %v889 = vadd.f32 %v887, %v888
    %v890 = vrot.slane %v889, 1
    %v891 = vadd.f32 %v889, %v890
    %v892 = vrot.slane %v869, 4
    %v893 = vadd.f32 %v869, %v892
    %v894 = vrot.slane %v893, 2
    %v895 = vadd.f32 %v893, %v894
    %v896 = vrot.slane %v895, 1
    %v897 = vadd.f32 %v895, %v896
    %v898 = vrot.slane %v870, 4
    %v899 = vadd.f32 %v870, %v898
    %v900 = vrot.slane %v899, 2
    %v901 = vadd.f32 %v899, %v900
    %v902 = vrot.slane %v901, 1
    %v903 = vadd.f32 %v901, %v902
    %v904 = vrot.slane %v871, 4
    %v905 = vadd.f32 %v871, %v904
    %v906 = vrot.slane %v905, 2
    %v907 = vadd.f32 %v905, %v906
    %v908 = vrot.slane %v907, 1
    %v909 = vadd.f32 %v907, %v908
    %v910 = vrot.slane %v872, 4
    %v911 = vadd.f32 %v872, %v910
    %v912 = vrot.slane %v911, 2
    %v913 = vadd.f32 %v911, %v912
    %v914 = vrot.slane %v913, 1
    %v915 = vadd.f32 %v913, %v914
    %v916 = vrot.slane %v873, 4
    %v917 = vadd.f32 %v873, %v916
    %v918 = vrot.slane %v917, 2
    %v919 = vadd.f32 %v917, %v918
    %v920 = vrot.slane %v919, 1
    %v921 = vadd.f32 %v919, %v920
    %v923 = vlaneseq
    %v924 = vshrl.u32 %v923, 7
    %v925 = vsub.s32 0, %v924
    %v926 = vrot.slane %v116, %v925
    %v928 = vmul.f32 %v879, %v926
    %v929 = vmul.f32 %v885, %v926
    %v930 = vmul.f32 %v891, %v926
    %v931 = vmul.f32 %v897, %v926
    %v932 = vmul.f32 %v903, %v926
    %v933 = vmul.f32 %v909, %v926
    %v934 = vmul.f32 %v915, %v926
    %v935 = vmul.f32 %v921, %v926
    %v944 = vrot.slane %v929, 7
    %v945 = vsel %vm757, %v944, %v928
    %v946 = vrot.slane %v930, 6
    %v947 = vsel %vm759, %v946, %v945
    %v948 = vrot.slane %v931, 5
    %v949 = vsel %vm761, %v948, %v947
    %v950 = vrot.slane %v932, 4
    %v951 = vsel %vm763, %v950, %v949
    %v952 = vrot.slane %v933, 3
    %v953 = vsel %vm765, %v952, %v951
    %v954 = vrot.slane %v934, 2
    %v955 = vsel %vm767, %v954, %v953
    %v956 = vrot.slane %v935, 1
    %v957 = vsel %vm769, %v956, %v955
    %959 = vadd.xlane.f32.xlu0 %v957
    %v960 = vpop.xlane.xlu0 %959
    %v961 = vstv %s117
    %v962 = vmul.f32 %v961, 0.0
    %v963 = vadd.f32 %v960, %v962
    %v964 = vstv %s118
    %v965 = vadd.f32 %v963, %v964
    %v967 = vlaneseq
    %v968 = vshrl.u32 %v967, 7
    %v969 = vsub.s32 0, %v968
    %v970 = vrot.slane %v114, %v969
    %v971 = vlaneseq
    %v972 = vshrl.u32 %v971, 7
    %v973 = vsub.s32 1, %v972
    %v974 = vrot.slane %v114, %v973
    %v975 = vlaneseq
    %v976 = vshrl.u32 %v975, 7
    %v977 = vsub.s32 2, %v976
    %v978 = vrot.slane %v114, %v977
    %v979 = vlaneseq
    %v980 = vshrl.u32 %v979, 7
    %v981 = vsub.s32 3, %v980
    %v982 = vrot.slane %v114, %v981
    %v987 = vmul.f32 %v965, %v970
    %v988 = vmul.f32 %v965, %v974
    %v989 = vmul.f32 %v965, %v978
    %v990 = vmul.f32 %v965, %v982
    %v991 = vadd.f32 %v987, %v386
    %v992 = vadd.f32 %v988, %v388
    %v993 = vadd.f32 %v989, %v457
    %v994 = vadd.f32 %v990, %v459
    %v996 = vlaneseq
    %v997 = vshrl.u32 %v996, 7
    %v998 = vsub.s32 0, %v997
    %v999 = vrot.slane %v115, %v998
    %v1000 = vlaneseq
    %v1001 = vshrl.u32 %v1000, 7
    %v1002 = vsub.s32 1, %v1001
    %v1003 = vrot.slane %v115, %v1002
    %v1004 = vlaneseq
    %v1005 = vshrl.u32 %v1004, 7
    %v1006 = vsub.s32 2, %v1005
    %v1007 = vrot.slane %v115, %v1006
    %v1008 = vlaneseq
    %v1009 = vshrl.u32 %v1008, 7
    %v1010 = vsub.s32 3, %v1009
    %v1011 = vrot.slane %v115, %v1010
    %v1016 = vadd.f32 %v991, %v999
    %v1017 = vadd.f32 %v992, %v1003
    %v1018 = vadd.f32 %v993, %v1007
    %v1019 = vadd.f32 %v994, %v1011
    %v1020 = vxor.u32 %v1016, 2147483648
    %v1021 = vmul.f32 %v1020, 1.442695
    %v1022 = vpow.pop %v1021
    %v1023 = vadd.f32 %v1022, 1.0
    %v1024 = vrcp.pop %v1023
    %v1025 = vmul.f32 1.0, %v1024
    %v1026 = vxor.u32 %v1017, 2147483648
    %v1027 = vmul.f32 %v1026, 1.442695
    %v1028 = vpow.pop %v1027
    %v1029 = vadd.f32 %v1028, 1.0
    %v1030 = vrcp.pop %v1029
    %v1031 = vmul.f32 1.0, %v1030
    %v1032 = vtanh.pop %v1018
    %v1033 = vxor.u32 %v1019, 2147483648
    %v1034 = vmul.f32 %v1033, 1.442695
    %v1035 = vpow.pop %v1034
    %v1036 = vadd.f32 %v1035, 1.0
    %v1037 = vrcp.pop %v1036
    %v1038 = vmul.f32 1.0, %v1037
    %v1039 = vmul.f32 %v1031, 0.0
    %v1040 = vmul.f32 %v1025, %v1032
    %v1041 = vadd.f32 %v1039, %v1040
    %v1042 = vtanh.pop %v1041
    %v1043 = vmul.f32 %v1038, %v1042
    %1044 = vmatprep.subr.mxu0 %v256
    %1045 = vmatpush1.msra.mxu0 %v255
    %1046 = vmatprep.subr.mxu0 %v260
    %1047 = vmatpush1.msra.mxu0 %v259
    %1048 = vmatprep.subr.mxu0 %v264
    %1049 = vmatpush1.msra.mxu0 %v263
    %1050 = vmatprep.subr.mxu0 %v268
    %1051 = vmatpush1.msra.mxu0 %v267
    %1052 = vmatprep.subr.mxu0 %v272
    %1053 = vmatpush1.msra.mxu0 %v271
    %1054 = vmatprep.subr.mxu0 %v276
    %1055 = vmatpush1.msra.mxu0 %v275
    %1056 = vmatprep.subr.mxu0 %v280
    %1057 = vmatpush1.msra.mxu0 %v279
    %1058 = vmatprep.subr.mxu0 %v284
    %1059 = vmatpush1.msra.mxu0 %v283
    %1060 = vmatprep.subr.mxu0 %v288
    %1061 = vmatpush1.msra.mxu0 %v287
    %1062 = vmatprep.subr.mxu0 %v292
    %1063 = vmatpush1.msra.mxu0 %v291
    %1064 = vmatprep.subr.mxu0 %v296
    %1065 = vmatpush1.msra.mxu0 %v295
    %1066 = vmatprep.subr.mxu0 %v300
    %1067 = vmatpush1.msra.mxu0 %v299
    %1068 = vmatprep.subr.mxu0 %v304
    %1069 = vmatpush1.msra.mxu0 %v303
    %1070 = vmatprep.subr.mxu0 %v308
    %1071 = vmatpush1.msra.mxu0 %v307
    %1072 = vmatprep.subr.mxu0 %v312
    %1073 = vmatpush1.msra.mxu0 %v311
    %1074 = vmatprep.subr.mxu0 %v316
    %1075 = vmatpush1.msra.mxu0 %v315
    %1076 = vmatprep.subr.mxu0 0.0
    %1077 = vmatpush1.msra.mxu0 0.0
    %1078 = vmatprep.subr.mxu0 0.0
    %1079 = vmatpush1.msra.mxu0 0.0
    %1080 = vmatprep.subr.mxu0 0.0
    %1081 = vmatpush1.msra.mxu0 0.0
    %1082 = vmatprep.subr.mxu0 0.0
    %1083 = vmatpush1.msra.mxu0 0.0
    %1084 = vmatprep.subr.mxu0 0.0
    %1085 = vmatpush1.msra.mxu0 0.0
    %1086 = vmatprep.subr.mxu0 0.0
    %1087 = vmatpush1.msra.mxu0 0.0
    %1088 = vmatprep.subr.mxu0 0.0
    %1089 = vmatpush1.msra.mxu0 0.0
    %1090 = vmatprep.subr.mxu0 0.0
    %1091 = vmatpush1.msra.mxu0 0.0
    %1092 = vmatprep.subr.mxu0 0.0
    %1093 = vmatpush1.msra.mxu0 0.0
    %1094 = vmatprep.subr.mxu0 0.0
    %1095 = vmatpush1.msra.mxu0 0.0
    %1096 = vmatprep.subr.mxu0 0.0
    %1097 = vmatpush1.msra.mxu0 0.0
    %1098 = vmatprep.subr.mxu0 0.0
    %1099 = vmatpush1.msra.mxu0 0.0
    %1100 = vmatprep.subr.mxu0 0.0
    %1101 = vmatpush1.msra.mxu0 0.0
    %1102 = vmatprep.subr.mxu0 0.0
    %1103 = vmatpush1.msra.mxu0 0.0
    %1104 = vmatprep.subr.mxu0 0.0
    %1105 = vmatpush1.msra.mxu0 0.0
    %1106 = vmatprep.subr.mxu0 0.0
    %1107 = vmatpush1.msra.mxu0 0.0
    %1108 = vmatprep.mubr.f32.mxu0 0.0
    %1109 = vmatmul.mubr.f32.gmra.mrb[0].mxu0 %v1043
    %v1110 = vpop.f32.mrb[0].mxu0
    %v1111 = vadd.f32 0.0, %v1110
    %v1112 = vpop.f32.mrb[0].mxu0
    %v1113 = vadd.f32 0.0, %v1112
    %1114 = vdwg.mxu0
    %1115 = vmatprep.subr.mxu0 %v258
    %1116 = vmatpush1.msra.mxu0 %v257
    %1117 = vmatprep.subr.mxu0 %v262
    %1118 = vmatpush1.msra.mxu0 %v261
    %1119 = vmatprep.subr.mxu0 %v266
    %1120 = vmatpush1.msra.mxu0 %v265
    %1121 = vmatprep.subr.mxu0 %v270
    %1122 = vmatpush1.msra.mxu0 %v269
    %1123 = vmatprep.subr.mxu0 %v274
    %1124 = vmatpush1.msra.mxu0 %v273
    %1125 = vmatprep.subr.mxu0 %v278
    %1126 = vmatpush1.msra.mxu0 %v277
    %1127 = vmatprep.subr.mxu0 %v282
    %1128 = vmatpush1.msra.mxu0 %v281
    %1129 = vmatprep.subr.mxu0 %v286
    %1130 = vmatpush1.msra.mxu0 %v285
    %1131 = vmatprep.subr.mxu0 %v290
    %1132 = vmatpush1.msra.mxu0 %v289
    %1133 = vmatprep.subr.mxu0 %v294
    %1134 = vmatpush1.msra.mxu0 %v293
    %1135 = vmatprep.subr.mxu0 %v298
    %1136 = vmatpush1.msra.mxu0 %v297
    %1137 = vmatprep.subr.mxu0 %v302
    %1138 = vmatpush1.msra.mxu0 %v301
    %1139 = vmatprep.subr.mxu0 %v306
    %1140 = vmatpush1.msra.mxu0 %v305
    %1141 = vmatprep.subr.mxu0 %v310
    %1142 = vmatpush1.msra.mxu0 %v309
    %1143 = vmatprep.subr.mxu0 %v314
    %1144 = vmatpush1.msra.mxu0 %v313
    %1145 = vmatprep.subr.mxu0 %v318
    %1146 = vmatpush1.msra.mxu0 %v317
    %1147 = vmatprep.subr.mxu0 0.0
    %1148 = vmatpush1.msra.mxu0 0.0
    %1149 = vmatprep.subr.mxu0 0.0
    %1150 = vmatpush1.msra.mxu0 0.0
    %1151 = vmatprep.subr.mxu0 0.0
    %1152 = vmatpush1.msra.mxu0 0.0
    %1153 = vmatprep.subr.mxu0 0.0
    %1154 = vmatpush1.msra.mxu0 0.0
    %1155 = vmatprep.subr.mxu0 0.0
    %1156 = vmatpush1.msra.mxu0 0.0
    %1157 = vmatprep.subr.mxu0 0.0
    %1158 = vmatpush1.msra.mxu0 0.0
    %1159 = vmatprep.subr.mxu0 0.0
    %1160 = vmatpush1.msra.mxu0 0.0
    %1161 = vmatprep.subr.mxu0 0.0
    %1162 = vmatpush1.msra.mxu0 0.0
    %1163 = vmatprep.subr.mxu0 0.0
    %1164 = vmatpush1.msra.mxu0 0.0
    %1165 = vmatprep.subr.mxu0 0.0
    %1166 = vmatpush1.msra.mxu0 0.0
    %1167 = vmatprep.subr.mxu0 0.0
    %1168 = vmatpush1.msra.mxu0 0.0
    %1169 = vmatprep.subr.mxu0 0.0
    %1170 = vmatpush1.msra.mxu0 0.0
    %1171 = vmatprep.subr.mxu0 0.0
    %1172 = vmatpush1.msra.mxu0 0.0
    %1173 = vmatprep.subr.mxu0 0.0
    %1174 = vmatpush1.msra.mxu0 0.0
    %1175 = vmatprep.subr.mxu0 0.0
    %1176 = vmatpush1.msra.mxu0 0.0
    %1177 = vmatprep.subr.mxu0 0.0
    %1178 = vmatpush1.msra.mxu0 0.0
    %1179 = vmatprep.mubr.f32.mxu0 0.0
    %1180 = vmatmul.mubr.f32.gmra.mrb[0].mxu0 %v1043
    %v1181 = vpop.f32.mrb[0].mxu0
    %v1182 = vadd.f32 0.0, %v1181
    %v1183 = vpop.f32.mrb[0].mxu0
    %v1184 = vadd.f32 0.0, %v1183
    %1185 = vdwg.mxu0
    %1186 = vmatprep.subr.mxu0 0.0
    %1187 = vmatpush1.msra.mxu0 %v461
    %1188 = vmatprep.subr.mxu0 0.0
    %1189 = vmatpush1.msra.mxu0 %v462
    %1190 = vmatprep.subr.mxu0 0.0
    %1191 = vmatpush1.msra.mxu0 %v463
    %1192 = vmatprep.subr.mxu0 0.0
    %1193 = vmatpush1.msra.mxu0 %v464
    %1194 = vmatprep.subr.mxu0 0.0
    %1195 = vmatpush1.msra.mxu0 %v465
    %1196 = vmatprep.subr.mxu0 0.0
    %1197 = vmatpush1.msra.mxu0 %v466
    %1198 = vmatprep.subr.mxu0 0.0
    %1199 = vmatpush1.msra.mxu0 %v467
    %1200 = vmatprep.subr.mxu0 0.0
    %1201 = vmatpush1.msra.mxu0 %v468
    %1202 = vmatprep.subr.mxu0 0.0
    %1203 = vmatpush1.msra.mxu0 %v469
    %1204 = vmatprep.subr.mxu0 0.0
    %1205 = vmatpush1.msra.mxu0 %v470
    %1206 = vmatprep.subr.mxu0 0.0
    %1207 = vmatpush1.msra.mxu0 %v471
    %1208 = vmatprep.subr.mxu0 0.0
    %1209 = vmatpush1.msra.mxu0 %v472
    %1210 = vmatprep.subr.mxu0 0.0
    %1211 = vmatpush1.msra.mxu0 %v473
    %1212 = vmatprep.subr.mxu0 0.0
    %1213 = vmatpush1.msra.mxu0 %v474
    %1214 = vmatprep.subr.mxu0 0.0
    %1215 = vmatpush1.msra.mxu0 %v475
    %1216 = vmatprep.subr.mxu0 0.0
    %1217 = vmatpush1.msra.mxu0 %v476
    %1218 = vmatprep.subr.mxu0 0.0
    %1219 = vmatpush1.msra.mxu0 %v477
    %1220 = vmatprep.subr.mxu0 0.0
    %1221 = vmatpush1.msra.mxu0 %v478
    %1222 = vmatprep.subr.mxu0 0.0
    %1223 = vmatpush1.msra.mxu0 %v479
    %1224 = vmatprep.subr.mxu0 0.0
    %1225 = vmatpush1.msra.mxu0 %v480
    %1226 = vmatprep.subr.mxu0 0.0
    %1227 = vmatpush1.msra.mxu0 %v481
    %1228 = vmatprep.subr.mxu0 0.0
    %1229 = vmatpush1.msra.mxu0 %v482
    %1230 = vmatprep.subr.mxu0 0.0
    %1231 = vmatpush1.msra.mxu0 %v483
    %1232 = vmatprep.subr.mxu0 0.0
    %1233 = vmatpush1.msra.mxu0 %v484
    %1234 = vmatprep.subr.mxu0 0.0
    %1235 = vmatpush1.msra.mxu0 %v485
    %1236 = vmatprep.subr.mxu0 0.0
    %1237 = vmatpush1.msra.mxu0 %v486
    %1238 = vmatprep.subr.mxu0 0.0
    %1239 = vmatpush1.msra.mxu0 %v487
    %1240 = vmatprep.subr.mxu0 0.0
    %1241 = vmatpush1.msra.mxu0 %v488
    %1242 = vmatprep.subr.mxu0 0.0
    %1243 = vmatpush1.msra.mxu0 %v489
    %1244 = vmatprep.subr.mxu0 0.0
    %1245 = vmatpush1.msra.mxu0 %v490
    %1246 = vmatprep.subr.mxu0 0.0
    %1247 = vmatpush1.msra.mxu0 %v491
    %1248 = vmatprep.subr.mxu0 0.0
    %1249 = vmatpush1.msra.mxu0 %v492
    %1250 = vmatprep.mubr.f32.mxu0 %v1041
    %1251 = vmatmul.mubr.f32.gmra.mrb[0].mxu0 %v1043
    %v1252 = vpop.f32.mrb[0].mxu0
    %v1253 = vadd.f32 0.0, %v1252
    %v1254 = vpop.f32.mrb[0].mxu0
    %1255 = vdwg.mxu0
    %v1257 = vcombine.high %v1253, %v1253
    %v1259 = vunpack.c.l.s4 1966171168
    %v1260 = vunpack.c.0.s8 %v1259
    %v1261 = vlaneseq
    %v1262 = vshrl.u32 %v1261, 7
    %v1263 = vsub.s32 %v1260, %v1262
    %v1264 = vrot.slane %v1253, %v1263
    %v1266 = vunpack.c.l.s4 1966171168
    %v1267 = vunpack.c.0.s8 %v1266
    %v1268 = vlaneseq
    %v1269 = vshrl.u32 %v1268, 7
    %v1270 = vsub.s32 %v1267, %v1269
    %v1271 = vrot.slane %v1257, %v1270
    %v1272 = vcombine.high %v1264, %v1264
    %v1273 = vcombine.high %v1271, %v1271
    %v1275 = vunpack.c.l.s4 1966171168
    %v1276 = vunpack.c.0.s8 %v1275
    %v1277 = vlaneseq
    %v1278 = vshrl.u32 %v1277, 7
    %v1279 = vsub.s32 %v1276, %v1278
    %v1280 = vrot.slane %v1264, %v1279
    %v1282 = vunpack.c.l.s4 1966171168
    %v1283 = vunpack.c.0.s8 %v1282
    %v1284 = vlaneseq
    %v1285 = vshrl.u32 %v1284, 7
    %v1286 = vsub.s32 %v1283, %v1285
    %v1287 = vrot.slane %v1271, %v1286
    %v1289 = vunpack.c.l.s4 1966171168
    %v1290 = vunpack.c.0.s8 %v1289
    %v1291 = vlaneseq
    %v1292 = vshrl.u32 %v1291, 7
    %v1293 = vsub.s32 %v1290, %v1292
    %v1294 = vrot.slane %v1272, %v1293
    %v1296 = vunpack.c.l.s4 1966171168
    %v1297 = vunpack.c.0.s8 %v1296
    %v1298 = vlaneseq
    %v1299 = vshrl.u32 %v1298, 7
    %v1300 = vsub.s32 %v1297, %v1299
    %v1301 = vrot.slane %v1273, %v1300
    %v1302 = vcombine.high %v1280, %v1280
    %v1303 = vcombine.high %v1287, %v1287
    %v1304 = vcombine.high %v1294, %v1294
    %v1305 = vcombine.high %v1301, %v1301
    %v1306 = vlaneseq
    %v1307 = vshrl.u32 %v1306, 7
    %v1308 = vsub.s32 0, %v1307
    %v1309 = vrot.slane %v1280, %v1308
    %v1310 = vlaneseq
    %v1311 = vshrl.u32 %v1310, 7
    %v1312 = vsub.s32 0, %v1311
    %v1313 = vrot.slane %v1294, %v1312
    %v1314 = vlaneseq
    %v1315 = vshrl.u32 %v1314, 7
    %v1316 = vsub.s32 0, %v1315
    %v1317 = vrot.slane %v1302, %v1316
    %v1318 = vlaneseq
    %v1319 = vshrl.u32 %v1318, 7
    %v1320 = vsub.s32 0, %v1319
    %v1321 = vrot.slane %v1304, %v1320
    %v1322 = vlaneseq
    %v1323 = vshrl.u32 %v1322, 7
    %v1324 = vsub.s32 0, %v1323
    %v1325 = vrot.slane %v1287, %v1324
    %v1326 = vlaneseq
    %v1327 = vshrl.u32 %v1326, 7
    %v1328 = vsub.s32 0, %v1327
    %v1329 = vrot.slane %v1301, %v1328
    %v1330 = vlaneseq
    %v1331 = vshrl.u32 %v1330, 7
    %v1332 = vsub.s32 0, %v1331
    %v1333 = vrot.slane %v1303, %v1332
    %v1334 = vlaneseq
    %v1335 = vshrl.u32 %v1334, 7
    %v1336 = vsub.s32 0, %v1335
    %v1337 = vrot.slane %v1305, %v1336
    %v1346 = vadd.f32 %v1309, %v247
    %v1347 = vadd.f32 %v1313, %v248
    %v1348 = vadd.f32 %v1317, %v249
    %v1349 = vadd.f32 %v1321, %v250
    %v1350 = vadd.f32 %v1325, %v251
    %v1351 = vadd.f32 %v1329, %v252
    %v1352 = vadd.f32 %v1333, %v253
    %v1353 = vadd.f32 %v1337, %v254
    %v1354 = vtanh.pop %v1346
    %v1355 = vtanh.pop %v1347
    %v1356 = vtanh.pop %v1348
    %v1357 = vtanh.pop %v1349
    %v1358 = vtanh.pop %v1350
    %v1359 = vtanh.pop %v1351
    %v1360 = vtanh.pop %v1352
    %v1361 = vtanh.pop %v1353
    %v1362 = vmul.f32 %v1354, %v673
    %v1363 = vmul.f32 %v1355, %v673
    %v1364 = vmul.f32 %v1356, %v673
    %v1365 = vmul.f32 %v1357, %v673
    %v1366 = vmul.f32 %v1358, %v673
    %v1367 = vmul.f32 %v1359, %v673
    %v1368 = vmul.f32 %v1360, %v673
    %v1369 = vmul.f32 %v1361, %v673
    %1370 = vadd.xlane.f32.xlu0 %v1362
    %v1371 = vpop.xlane.xlu0 %1370
    %1372 = vadd.xlane.f32.xlu0 %v1363
    %v1373 = vpop.xlane.xlu0 %1372
    %1374 = vadd.xlane.f32.xlu0 %v1364
    %v1375 = vpop.xlane.xlu0 %1374
    %1376 = vadd.xlane.f32.xlu0 %v1365
    %v1377 = vpop.xlane.xlu0 %1376
    %1378 = vadd.xlane.f32.xlu0 %v1366
    %v1379 = vpop.xlane.xlu0 %1378
    %1380 = vadd.xlane.f32.xlu0 %v1367
    %v1381 = vpop.xlane.xlu0 %1380
    %1382 = vadd.xlane.f32.xlu0 %v1368
    %v1383 = vpop.xlane.xlu0 %1382
    %1384 = vadd.xlane.f32.xlu0 %v1369
    %v1385 = vpop.xlane.xlu0 %1384
    %v1386 = vmul.f32 %v1371, 1.442695
    %v1387 = vpow.pop %v1386
    %v1388 = vmul.f32 %v1373, 1.442695
    %v1389 = vpow.pop %v1388
    %v1390 = vmul.f32 %v1375, 1.442695
    %v1391 = vpow.pop %v1390
    %v1392 = vmul.f32 %v1377, 1.442695
    %v1393 = vpow.pop %v1392
    %v1394 = vmul.f32 %v1379, 1.442695
    %v1395 = vpow.pop %v1394
    %v1396 = vmul.f32 %v1381, 1.442695
    %v1397 = vpow.pop %v1396
    %v1398 = vmul.f32 %v1383, 1.442695
    %v1399 = vpow.pop %v1398
    %v1400 = vmul.f32 %v1385, 1.442695
    %v1401 = vpow.pop %v1400
    %v1410 = vlaneseq
    %v1411 = vshrl.u32 %v1410, 7
    %v1412 = vsub.s32 %v724, %v1411
    %v1413 = vrot.slane %v1387, %v1412
    %v1414 = vlaneseq
    %v1415 = vshrl.u32 %v1414, 7
    %v1416 = vsub.s32 %v724, %v1415
    %v1417 = vrot.slane %v1389, %v1416
    %v1418 = vlaneseq
    %v1419 = vshrl.u32 %v1418, 7
    %v1420 = vsub.s32 %v724, %v1419
    %v1421 = vrot.slane %v1391, %v1420
    %v1422 = vlaneseq
    %v1423 = vshrl.u32 %v1422, 7
    %v1424 = vsub.s32 %v724, %v1423
    %v1425 = vrot.slane %v1393, %v1424
    %v1426 = vlaneseq
    %v1427 = vshrl.u32 %v1426, 7
    %v1428 = vsub.s32 %v724, %v1427
    %v1429 = vrot.slane %v1395, %v1428
    %v1430 = vlaneseq
    %v1431 = vshrl.u32 %v1430, 7
    %v1432 = vsub.s32 %v724, %v1431
    %v1433 = vrot.slane %v1397, %v1432
    %v1434 = vlaneseq
    %v1435 = vshrl.u32 %v1434, 7
    %v1436 = vsub.s32 %v724, %v1435
    %v1437 = vrot.slane %v1399, %v1436
    %v1438 = vlaneseq
    %v1439 = vshrl.u32 %v1438, 7
    %v1440 = vsub.s32 %v724, %v1439
    %v1441 = vrot.slane %v1401, %v1440
    %v1442 = vsel %vm757, %v1417, %v1413
    %v1443 = vsel %vm759, %v1421, %v1442
    %v1444 = vsel %vm761, %v1425, %v1443
    %v1445 = vsel %vm763, %v1429, %v1444
    %v1446 = vsel %vm765, %v1433, %v1445
    %v1447 = vsel %vm767, %v1437, %v1446
    %v1448 = vsel %vm769, %v1441, %v1447
    %v1450 = vsel %vm772, %v1448, 0.0
    %1451 = vadd.xlane.f32.xlu0 %v1450
    %v1452 = vpop.xlane.xlu0 %1451
    %v1453 = vrcp.pop %v1452
    %v1455 = vlaneseq
    %v1456 = vshrl.u32 %v1455, 7
    %v1457 = vsub.s32 0, %v1456
    %v1458 = vrot.slane %v1453, %v1457
    %v1459 = vlaneseq
    %v1460 = vshrl.u32 %v1459, 7
    %v1461 = vsub.s32 1, %v1460
    %v1462 = vrot.slane %v1453, %v1461
    %v1463 = vlaneseq
    %v1464 = vshrl.u32 %v1463, 7
    %v1465 = vsub.s32 2, %v1464
    %v1466 = vrot.slane %v1453, %v1465
    %v1467 = vlaneseq
    %v1468 = vshrl.u32 %v1467, 7
    %v1469 = vsub.s32 3, %v1468
    %v1470 = vrot.slane %v1453, %v1469
    %v1471 = vlaneseq
    %v1472 = vshrl.u32 %v1471, 7
    %v1473 = vsub.s32 4, %v1472
    %v1474 = vrot.slane %v1453, %v1473
    %v1475 = vlaneseq
    %v1476 = vshrl.u32 %v1475, 7
    %v1477 = vsub.s32 5, %v1476
    %v1478 = vrot.slane %v1453, %v1477
    %v1479 = vlaneseq
    %v1480 = vshrl.u32 %v1479, 7
    %v1481 = vsub.s32 6, %v1480
    %v1482 = vrot.slane %v1453, %v1481
    %v1483 = vlaneseq
    %v1484 = vshrl.u32 %v1483, 7
    %v1485 = vsub.s32 7, %v1484
    %v1486 = vrot.slane %v1453, %v1485
    %v1495 = vmul.f32 %v1387, %v1458
    %v1496 = vmul.f32 %v1389, %v1462
    %v1497 = vmul.f32 %v1391, %v1466
    %v1498 = vmul.f32 %v1393, %v1470
    %v1499 = vmul.f32 %v1395, %v1474
    %v1500 = vmul.f32 %v1397, %v1478
    %v1501 = vmul.f32 %v1399, %v1482
    %v1502 = vmul.f32 %v1401, %v1486
    %1504 = vset.pattern.permute.xlu0 0
    %1505 = vperm.xlu0 %1504, %v1495
    %v1506 = vpop.permute.xlu0 %1505
    %1509 = vset.pattern.permute.xlu0 0
    %1510 = vperm.xlu0 %1509, %v1496
    %v1511 = vpop.permute.xlu0 %1510
    %1514 = vset.pattern.permute.xlu0 0
    %1515 = vperm.xlu0 %1514, %v1497
    %v1516 = vpop.permute.xlu0 %1515
    %1519 = vset.pattern.permute.xlu0 0
    %1520 = vperm.xlu0 %1519, %v1498
    %v1521 = vpop.permute.xlu0 %1520
    %1524 = vset.pattern.permute.xlu0 0
    %1525 = vperm.xlu0 %1524, %v1499
    %v1526 = vpop.permute.xlu0 %1525
    %1529 = vset.pattern.permute.xlu0 0
    %1530 = vperm.xlu0 %1529, %v1500
    %v1531 = vpop.permute.xlu0 %1530
    %1534 = vset.pattern.permute.xlu0 0
    %1535 = vperm.xlu0 %1534, %v1501
    %v1536 = vpop.permute.xlu0 %1535
    %1539 = vset.pattern.permute.xlu0 0
    %1540 = vperm.xlu0 %1539, %v1502
    %v1541 = vpop.permute.xlu0 %1540
    %v1543 = vmul.f32 %v1506, %v105
    %v1544 = vmul.f32 %v1511, %v106
    %v1545 = vmul.f32 %v1516, %v107
    %v1546 = vmul.f32 %v1521, %v108
    %v1547 = vmul.f32 %v1526, %v109
    %v1548 = vmul.f32 %v1531, %v110
    %v1549 = vmul.f32 %v1536, %v111
    %v1550 = vmul.f32 %v1541, %v112
    %v1551 = vrot.slane %v1543, 4
    %v1552 = vadd.f32 %v1543, %v1551
    %v1553 = vrot.slane %v1552, 2
    %v1554 = vadd.f32 %v1552, %v1553
    %v1555 = vrot.slane %v1554, 1
    %v1556 = vadd.f32 %v1554, %v1555
    %v1557 = vrot.slane %v1544, 4
    %v1558 = vadd.f32 %v1544, %v1557
    %v1559 = vrot.slane %v1558, 2
    %v1560 = vadd.f32 %v1558, %v1559
    %v1561 = vrot.slane %v1560, 1
    %v1562 = vadd.f32 %v1560, %v1561
    %v1563 = vrot.slane %v1545, 4
    %v1564 = vadd.f32 %v1545, %v1563
    %v1565 = vrot.slane %v1564, 2
    %v1566 = vadd.f32 %v1564, %v1565
    %v1567 = vrot.slane %v1566, 1
    %v1568 = vadd.f32 %v1566, %v1567
    %v1569 = vrot.slane %v1546, 4
    %v1570 = vadd.f32 %v1546, %v1569
    %v1571 = vrot.slane %v1570, 2
    %v1572 = vadd.f32 %v1570, %v1571
    %v1573 = vrot.slane %v1572, 1
    %v1574 = vadd.f32 %v1572, %v1573
    %v1575 = vrot.slane %v1547, 4
    %v1576 = vadd.f32 %v1547, %v1575
    %v1577 = vrot.slane %v1576, 2
    %v1578 = vadd.f32 %v1576, %v1577
    %v1579 = vrot.slane %v1578, 1
    %v1580 = vadd.f32 %v1578, %v1579
    %v1581 = vrot.slane %v1548, 4
    %v1582 = vadd.f32 %v1548, %v1581
    %v1583 = vrot.slane %v1582, 2
    %v1584 = vadd.f32 %v1582, %v1583
    %v1585 = vrot.slane %v1584, 1
    %v1586 = vadd.f32 %v1584, %v1585
    %v1587 = vrot.slane %v1549, 4
    %v1588 = vadd.f32 %v1549, %v1587
    %v1589 = vrot.slane %v1588, 2
    %v1590 = vadd.f32 %v1588, %v1589
    %v1591 = vrot.slane %v1590, 1
    %v1592 = vadd.f32 %v1590, %v1591
    %v1593 = vrot.slane %v1550, 4
    %v1594 = vadd.f32 %v1550, %v1593
    %v1595 = vrot.slane %v1594, 2
    %v1596 = vadd.f32 %v1594, %v1595
    %v1597 = vrot.slane %v1596, 1
    %v1598 = vadd.f32 %v1596, %v1597
    %v1599 = vmul.f32 %v1556, %v926
    %v1600 = vmul.f32 %v1562, %v926
    %v1601 = vmul.f32 %v1568, %v926
    %v1602 = vmul.f32 %v1574, %v926
    %v1603 = vmul.f32 %v1580, %v926
    %v1604 = vmul.f32 %v1586, %v926
    %v1605 = vmul.f32 %v1592, %v926
    %v1606 = vmul.f32 %v1598, %v926
    %v1615 = vrot.slane %v1600, 7
    %v1616 = vsel %vm757, %v1615, %v1599
    %v1617 = vrot.slane %v1601, 6
    %v1618 = vsel %vm759, %v1617, %v1616
    %v1619 = vrot.slane %v1602, 5
    %v1620 = vsel %vm761, %v1619, %v1618
    %v1621 = vrot.slane %v1603, 4
    %v1622 = vsel %vm763, %v1621, %v1620
    %v1623 = vrot.slane %v1604, 3
    %v1624 = vsel %vm765, %v1623, %v1622
    %v1625 = vrot.slane %v1605, 2
    %v1626 = vsel %vm767, %v1625, %v1624
    %v1627 = vrot.slane %v1606, 1
    %v1628 = vsel %vm769, %v1627, %v1626
    %1630 = vadd.xlane.f32.xlu0 %v1628
    %v1631 = vpop.xlane.xlu0 %1630
    %v1632 = vmul.f32 %v965, %v961
    %v1633 = vadd.f32 %v1631, %v1632
    %v1634 = vadd.f32 %v1633, %v964
    %v1635 = vmul.f32 %v1634, %v970
    %v1636 = vmul.f32 %v1634, %v974
    %v1637 = vmul.f32 %v1634, %v978
    %v1638 = vmul.f32 %v1634, %v982
    %v1639 = vadd.f32 %v1635, %v1111
    %v1640 = vadd.f32 %v1636, %v1113
    %v1641 = vadd.f32 %v1637, %v1182
    %v1642 = vadd.f32 %v1638, %v1184
    %v1643 = vadd.f32 %v1639, %v999
    %v1644 = vadd.f32 %v1640, %v1003
    %v1645 = vadd.f32 %v1641, %v1007
    %v1646 = vadd.f32 %v1642, %v1011
    %v1647 = vxor.u32 %v1643, 2147483648
    %v1648 = vmul.f32 %v1647, 1.442695
    %v1649 = vpow.pop %v1648
    %v1650 = vadd.f32 %v1649, 1.0
    %v1651 = vrcp.pop %v1650
    %v1652 = vmul.f32 1.0, %v1651
    %v1653 = vxor.u32 %v1644, 2147483648
    %v1654 = vmul.f32 %v1653, 1.442695
    %v1655 = vpow.pop %v1654
    %v1656 = vadd.f32 %v1655, 1.0
    %v1657 = vrcp.pop %v1656
    %v1658 = vmul.f32 1.0, %v1657
    %v1659 = vtanh.pop %v1645
    %v1660 = vxor.u32 %v1646, 2147483648
    %v1661 = vmul.f32 %v1660, 1.442695
    %v1662 = vpow.pop %v1661
    %v1663 = vadd.f32 %v1662, 1.0
    %v1664 = vrcp.pop %v1663
    %v1665 = vmul.f32 1.0, %v1664
    %v1666 = vmul.f32 %v1658, %v1041
    %v1667 = vmul.f32 %v1652, %v1659
    %v1668 = vadd.f32 %v1666, %v1667
    %v1669 = vtanh.pop %v1668
    %v1670 = vmul.f32 %v1665, %v1669
    %1671 = vmatprep.subr.mxu0 %v256
    %1672 = vmatpush1.msra.mxu0 %v255
    %1673 = vmatprep.subr.mxu0 %v260
    %1674 = vmatpush1.msra.mxu0 %v259
    %1675 = vmatprep.subr.mxu0 %v264
    %1676 = vmatpush1.msra.mxu0 %v263
    %1677 = vmatprep.subr.mxu0 %v268
    %1678 = vmatpush1.msra.mxu0 %v267
    %1679 = vmatprep.subr.mxu0 %v272
    %1680 = vmatpush1.msra.mxu0 %v271
    %1681 = vmatprep.subr.mxu0 %v276
    %1682 = vmatpush1.msra.mxu0 %v275
    %1683 = vmatprep.subr.mxu0 %v280
    %1684 = vmatpush1.msra.mxu0 %v279
    %1685 = vmatprep.subr.mxu0 %v284
    %1686 = vmatpush1.msra.mxu0 %v283
    %1687 = vmatprep.subr.mxu0 %v288
    %1688 = vmatpush1.msra.mxu0 %v287
    %1689 = vmatprep.subr.mxu0 %v292
    %1690 = vmatpush1.msra.mxu0 %v291
    %1691 = vmatprep.subr.mxu0 %v296
    %1692 = vmatpush1.msra.mxu0 %v295
    %1693 = vmatprep.subr.mxu0 %v300
    %1694 = vmatpush1.msra.mxu0 %v299
    %1695 = vmatprep.subr.mxu0 %v304
    %1696 = vmatpush1.msra.mxu0 %v303
    %1697 = vmatprep.subr.mxu0 %v308
    %1698 = vmatpush1.msra.mxu0 %v307
    %1699 = vmatprep.subr.mxu0 %v312
    %1700 = vmatpush1.msra.mxu0 %v311
    %1701 = vmatprep.subr.mxu0 %v316
    %1702 = vmatpush1.msra.mxu0 %v315
    %1703 = vmatprep.subr.mxu0 0.0
    %1704 = vmatpush1.msra.mxu0 0.0
    %1705 = vmatprep.subr.mxu0 0.0
    %1706 = vmatpush1.msra.mxu0 0.0
    %1707 = vmatprep.subr.mxu0 0.0
    %1708 = vmatpush1.msra.mxu0 0.0
    %1709 = vmatprep.subr.mxu0 0.0
    %1710 = vmatpush1.msra.mxu0 0.0
    %1711 = vmatprep.subr.mxu0 0.0
    %1712 = vmatpush1.msra.mxu0 0.0
    %1713 = vmatprep.subr.mxu0 0.0
    %1714 = vmatpush1.msra.mxu0 0.0
    %1715 = vmatprep.subr.mxu0 0.0
    %1716 = vmatpush1.msra.mxu0 0.0
    %1717 = vmatprep.subr.mxu0 0.0
    %1718 = vmatpush1.msra.mxu0 0.0
    %1719 = vmatprep.subr.mxu0 0.0
    %1720 = vmatpush1.msra.mxu0 0.0
    %1721 = vmatprep.subr.mxu0 0.0
    %1722 = vmatpush1.msra.mxu0 0.0
    %1723 = vmatprep.subr.mxu0 0.0
    %1724 = vmatpush1.msra.mxu0 0.0
    %1725 = vmatprep.subr.mxu0 0.0
    %1726 = vmatpush1.msra.mxu0 0.0
    %1727 = vmatprep.subr.mxu0 0.0
    %1728 = vmatpush1.msra.mxu0 0.0
    %1729 = vmatprep.subr.mxu0 0.0
    %1730 = vmatpush1.msra.mxu0 0.0
    %1731 = vmatprep.subr.mxu0 0.0
    %1732 = vmatpush1.msra.mxu0 0.0
    %1733 = vmatprep.subr.mxu0 0.0
    %1734 = vmatpush1.msra.mxu0 0.0
    %1735 = vmatprep.mubr.f32.mxu0 0.0
    %1736 = vmatmul.mubr.f32.gmra.mrb[0].mxu0 %v1670
    %v1737 = vpop.f32.mrb[0].mxu0
    %v1738 = vadd.f32 0.0, %v1737
    %v1739 = vpop.f32.mrb[0].mxu0
    %v1740 = vadd.f32 0.0, %v1739
    %1741 = vdwg.mxu0
    %1742 = vmatprep.subr.mxu0 %v258
    %1743 = vmatpush1.msra.mxu0 %v257
    %1744 = vmatprep.subr.mxu0 %v262
    %1745 = vmatpush1.msra.mxu0 %v261
    %1746 = vmatprep.subr.mxu0 %v266
    %1747 = vmatpush1.msra.mxu0 %v265
    %1748 = vmatprep.subr.mxu0 %v270
    %1749 = vmatpush1.msra.mxu0 %v269
    %1750 = vmatprep.subr.mxu0 %v274
    %1751 = vmatpush1.msra.mxu0 %v273
    %1752 = vmatprep.subr.mxu0 %v278
    %1753 = vmatpush1.msra.mxu0 %v277
    %1754 = vmatprep.subr.mxu0 %v282
    %1755 = vmatpush1.msra.mxu0 %v281
    %1756 = vmatprep.subr.mxu0 %v286
    %1757 = vmatpush1.msra.mxu0 %v285
    %1758 = vmatprep.subr.mxu0 %v290
    %1759 = vmatpush1.msra.mxu0 %v289
    %1760 = vmatprep.subr.mxu0 %v294
    %1761 = vmatpush1.msra.mxu0 %v293
    %1762 = vmatprep.subr.mxu0 %v298
    %1763 = vmatpush1.msra.mxu0 %v297
    %1764 = vmatprep.subr.mxu0 %v302
    %1765 = vmatpush1.msra.mxu0 %v301
    %1766 = vmatprep.subr.mxu0 %v306
    %1767 = vmatpush1.msra.mxu0 %v305
    %1768 = vmatprep.subr.mxu0 %v310
    %1769 = vmatpush1.msra.mxu0 %v309
    %1770 = vmatprep.subr.mxu0 %v314
    %1771 = vmatpush1.msra.mxu0 %v313
    %1772 = vmatprep.subr.mxu0 %v318
    %1773 = vmatpush1.msra.mxu0 %v317
    %1774 = vmatprep.subr.mxu0 0.0
    %1775 = vmatpush1.msra.mxu0 0.0
    %1776 = vmatprep.subr.mxu0 0.0
    %1777 = vmatpush1.msra.mxu0 0.0
    %1778 = vmatprep.subr.mxu0 0.0
    %1779 = vmatpush1.msra.mxu0 0.0
    %1780 = vmatprep.subr.mxu0 0.0
    %1781 = vmatpush1.msra.mxu0 0.0
    %1782 = vmatprep.subr.mxu0 0.0
    %1783 = vmatpush1.msra.mxu0 0.0
    %1784 = vmatprep.subr.mxu0 0.0
    %1785 = vmatpush1.msra.mxu0 0.0
    %1786 = vmatprep.subr.mxu0 0.0
    %1787 = vmatpush1.msra.mxu0 0.0
    %1788 = vmatprep.subr.mxu0 0.0
    %1789 = vmatpush1.msra.mxu0 0.0
    %1790 = vmatprep.subr.mxu0 0.0
    %1791 = vmatpush1.msra.mxu0 0.0
    %1792 = vmatprep.subr.mxu0 0.0
    %1793 = vmatpush1.msra.mxu0 0.0
    %1794 = vmatprep.subr.mxu0 0.0
    %1795 = vmatpush1.msra.mxu0 0.0
    %1796 = vmatprep.subr.mxu0 0.0
    %1797 = vmatpush1.msra.mxu0 0.0
    %1798 = vmatprep.subr.mxu0 0.0
    %1799 = vmatpush1.msra.mxu0 0.0
    %1800 = vmatprep.subr.mxu0 0.0
    %1801 = vmatpush1.msra.mxu0 0.0
    %1802 = vmatprep.subr.mxu0 0.0
    %1803 = vmatpush1.msra.mxu0 0.0
    %1804 = vmatprep.subr.mxu0 0.0
    %1805 = vmatpush1.msra.mxu0 0.0
    %1806 = vmatprep.mubr.f32.mxu0 0.0
    %1807 = vmatmul.mubr.f32.gmra.mrb[0].mxu0 %v1670
    %v1808 = vpop.f32.mrb[0].mxu0
    %v1809 = vadd.f32 0.0, %v1808
    %v1810 = vpop.f32.mrb[0].mxu0
    %v1811 = vadd.f32 0.0, %v1810
    %1812 = vdwg.mxu0
    %1813 = vmatprep.subr.mxu0 0.0
    %1814 = vmatpush1.msra.mxu0 %v461
    %1815 = vmatprep.subr.mxu0 0.0
    %1816 = vmatpush1.msra.mxu0 %v462
    %1817 = vmatprep.subr.mxu0 0.0
    %1818 = vmatpush1.msra.mxu0 %v463
    %1819 = vmatprep.subr.mxu0 0.0
    %1820 = vmatpush1.msra.mxu0 %v464
    %1821 = vmatprep.subr.mxu0 0.0
    %1822 = vmatpush1.msra.mxu0 %v465
    %1823 = vmatprep.subr.mxu0 0.0
    %1824 = vmatpush1.msra.mxu0 %v466
    %1825 = vmatprep.subr.mxu0 0.0
    %1826 = vmatpush1.msra.mxu0 %v467
    %1827 = vmatprep.subr.mxu0 0.0
    %1828 = vmatpush1.msra.mxu0 %v468
    %1829 = vmatprep.subr.mxu0 0.0
    %1830 = vmatpush1.msra.mxu0 %v469
    %1831 = vmatprep.subr.mxu0 0.0
    %1832 = vmatpush1.msra.mxu0 %v470
    %1833 = vmatprep.subr.mxu0 0.0
    %1834 = vmatpush1.msra.mxu0 %v471
    %1835 = vmatprep.subr.mxu0 0.0
    %1836 = vmatpush1.msra.mxu0 %v472
    %1837 = vmatprep.subr.mxu0 0.0
    %1838 = vmatpush1.msra.mxu0 %v473
    %1839 = vmatprep.subr.mxu0 0.0
    %1840 = vmatpush1.msra.mxu0 %v474
    %1841 = vmatprep.subr.mxu0 0.0
    %1842 = vmatpush1.msra.mxu0 %v475
    %1843 = vmatprep.subr.mxu0 0.0
    %1844 = vmatpush1.msra.mxu0 %v476
    %1845 = vmatprep.subr.mxu0 0.0
    %1846 = vmatpush1.msra.mxu0 %v477
    %1847 = vmatprep.subr.mxu0 0.0
    %1848 = vmatpush1.msra.mxu0 %v478
    %1849 = vmatprep.subr.mxu0 0.0
    %1850 = vmatpush1.msra.mxu0 %v479
    %1851 = vmatprep.subr.mxu0 0.0
    %1852 = vmatpush1.msra.mxu0 %v480
    %1853 = vmatprep.subr.mxu0 0.0
    %1854 = vmatpush1.msra.mxu0 %v481
    %1855 = vmatprep.subr.mxu0 0.0
    %1856 = vmatpush1.msra.mxu0 %v482
    %1857 = vmatprep.subr.mxu0 0.0
    %1858 = vmatpush1.msra.mxu0 %v483
    %1859 = vmatprep.subr.mxu0 0.0
    %1860 = vmatpush1.msra.mxu0 %v484
    %1861 = vmatprep.subr.mxu0 0.0
    %1862 = vmatpush1.msra.mxu0 %v485
    %1863 = vmatprep.subr.mxu0 0.0
    %1864 = vmatpush1.msra.mxu0 %v486
    %1865 = vmatprep.subr.mxu0 0.0
    %1866 = vmatpush1.msra.mxu0 %v487
    %1867 = vmatprep.subr.mxu0 0.0
    %1868 = vmatpush1.msra.mxu0 %v488
    %1869 = vmatprep.subr.mxu0 0.0
    %1870 = vmatpush1.msra.mxu0 %v489
    %1871 = vmatprep.subr.mxu0 0.0
    %1872 = vmatpush1.msra.mxu0 %v490
    %1873 = vmatprep.subr.mxu0 0.0
    %1874 = vmatpush1.msra.mxu0 %v491
    %1875 = vmatprep.subr.mxu0 0.0
    %1876 = vmatpush1.msra.mxu0 %v492
    %1877 = vmatprep.mubr.f32.mxu0 %v1668
    %1878 = vmatmul.mubr.f32.gmra.mrb[0].mxu0 %v1670
    %v1879 = vpop.f32.mrb[0].mxu0
    %v1880 = vadd.f32 0.0, %v1879
    %v1881 = vpop.f32.mrb[0].mxu0
    %1882 = vdwg.mxu0
    %v1884 = vcombine.high %v1880, %v1880
    %v1886 = vunpack.c.l.s4 1966171168
    %v1887 = vunpack.c.0.s8 %v1886
    %v1888 = vlaneseq
    %v1889 = vshrl.u32 %v1888, 7
    %v1890 = vsub.s32 %v1887, %v1889
    %v1891 = vrot.slane %v1880, %v1890
    %v1893 = vunpack.c.l.s4 1966171168
    %v1894 = vunpack.c.0.s8 %v1893
    %v1895 = vlaneseq
    %v1896 = vshrl.u32 %v1895, 7
    %v1897 = vsub.s32 %v1894, %v1896
    %v1898 = vrot.slane %v1884, %v1897
    %v1899 = vcombine.high %v1891, %v1891
    %v1900 = vcombine.high %v1898, %v1898
    %v1902 = vunpack.c.l.s4 1966171168
    %v1903 = vunpack.c.0.s8 %v1902
    %v1904 = vlaneseq
    %v1905 = vshrl.u32 %v1904, 7
    %v1906 = vsub.s32 %v1903, %v1905
    %v1907 = vrot.slane %v1891, %v1906
    %v1909 = vunpack.c.l.s4 1966171168
    %v1910 = vunpack.c.0.s8 %v1909
    %v1911 = vlaneseq
    %v1912 = vshrl.u32 %v1911, 7
    %v1913 = vsub.s32 %v1910, %v1912
    %v1914 = vrot.slane %v1898, %v1913
    %v1916 = vunpack.c.l.s4 1966171168
    %v1917 = vunpack.c.0.s8 %v1916
    %v1918 = vlaneseq
    %v1919 = vshrl.u32 %v1918, 7
    %v1920 = vsub.s32 %v1917, %v1919
    %v1921 = vrot.slane %v1899, %v1920
    %v1923 = vunpack.c.l.s4 1966171168
    %v1924 = vunpack.c.0.s8 %v1923
    %v1925 = vlaneseq
    %v1926 = vshrl.u32 %v1925, 7
    %v1927 = vsub.s32 %v1924, %v1926
    %v1928 = vrot.slane %v1900, %v1927
    %v1929 = vcombine.high %v1907, %v1907
    %v1930 = vcombine.high %v1914, %v1914
    %v1931 = vcombine.high %v1921, %v1921
    %v1932 = vcombine.high %v1928, %v1928
    %v1933 = vlaneseq
    %v1934 = vshrl.u32 %v1933, 7
    %v1935 = vsub.s32 0, %v1934
    %v1936 = vrot.slane %v1907, %v1935
    %v1937 = vlaneseq
    %v1938 = vshrl.u32 %v1937, 7
    %v1939 = vsub.s32 0, %v1938
    %v1940 = vrot.slane %v1921, %v1939
    %v1941 = vlaneseq
    %v1942 = vshrl.u32 %v1941, 7
    %v1943 = vsub.s32 0, %v1942
    %v1944 = vrot.slane %v1929, %v1943
    %v1945 = vlaneseq
    %v1946 = vshrl.u32 %v1945, 7
    %v1947 = vsub.s32 0, %v1946
    %v1948 = vrot.slane %v1931, %v1947
    %v1949 = vlaneseq
    %v1950 = vshrl.u32 %v1949, 7
    %v1951 = vsub.s32 0, %v1950
    %v1952 = vrot.slane %v1914, %v1951
    %v1953 = vlaneseq
    %v1954 = vshrl.u32 %v1953, 7
    %v1955 = vsub.s32 0, %v1954
    %v1956 = vrot.slane %v1928, %v1955
    %v1957 = vlaneseq
    %v1958 = vshrl.u32 %v1957, 7
    %v1959 = vsub.s32 0, %v1958
    %v1960 = vrot.slane %v1930, %v1959
    %v1961 = vlaneseq
    %v1962 = vshrl.u32 %v1961, 7
    %v1963 = vsub.s32 0, %v1962
    %v1964 = vrot.slane %v1932, %v1963
    %v1973 = vadd.f32 %v1936, %v247
    %v1974 = vadd.f32 %v1940, %v248
    %v1975 = vadd.f32 %v1944, %v249
    %v1976 = vadd.f32 %v1948, %v250
    %v1977 = vadd.f32 %v1952, %v251
    %v1978 = vadd.f32 %v1956, %v252
    %v1979 = vadd.f32 %v1960, %v253
    %v1980 = vadd.f32 %v1964, %v254
    %v1981 = vtanh.pop %v1973
    %v1982 = vtanh.pop %v1974
    %v1983 = vtanh.pop %v1975
    %v1984 = vtanh.pop %v1976
    %v1985 = vtanh.pop %v1977
    %v1986 = vtanh.pop %v1978
    %v1987 = vtanh.pop %v1979
    %v1988 = vtanh.pop %v1980
    %v1989 = vmul.f32 %v1981, %v673
    %v1990 = vmul.f32 %v1982, %v673
    %v1991 = vmul.f32 %v1983, %v673
    %v1992 = vmul.f32 %v1984, %v673
    %v1993 = vmul.f32 %v1985, %v673
    %v1994 = vmul.f32 %v1986, %v673
    %v1995 = vmul.f32 %v1987, %v673
    %v1996 = vmul.f32 %v1988, %v673
    %1997 = vadd.xlane.f32.xlu0 %v1989
    %v1998 = vpop.xlane.xlu0 %1997
    %1999 = vadd.xlane.f32.xlu0 %v1990
    %v2000 = vpop.xlane.xlu0 %1999
    %2001 = vadd.xlane.f32.xlu0 %v1991
    %v2002 = vpop.xlane.xlu0 %2001
    %2003 = vadd.xlane.f32.xlu0 %v1992
    %v2004 = vpop.xlane.xlu0 %2003
    %2005 = vadd.xlane.f32.xlu0 %v1993
    %v2006 = vpop.xlane.xlu0 %2005
    %2007 = vadd.xlane.f32.xlu0 %v1994
    %v2008 = vpop.xlane.xlu0 %2007
    %2009 = vadd.xlane.f32.xlu0 %v1995
    %v2010 = vpop.xlane.xlu0 %2009
    %2011 = vadd.xlane.f32.xlu0 %v1996
    %v2012 = vpop.xlane.xlu0 %2011
    %v2013 = vmul.f32 %v1998, 1.442695
    %v2014 = vpow.pop %v2013
    %v2015 = vmul.f32 %v2000, 1.442695
    %v2016 = vpow.pop %v2015
    %v2017 = vmul.f32 %v2002, 1.442695
    %v2018 = vpow.pop %v2017
    %v2019 = vmul.f32 %v2004, 1.442695
    %v2020 = vpow.pop %v2019
    %v2021 = vmul.f32 %v2006, 1.442695
    %v2022 = vpow.pop %v2021
    %v2023 = vmul.f32 %v2008, 1.442695
    %v2024 = vpow.pop %v2023
    %v2025 = vmul.f32 %v2010, 1.442695
    %v2026 = vpow.pop %v2025
    %v2027 = vmul.f32 %v2012, 1.442695
    %v2028 = vpow.pop %v2027
    %v2037 = vlaneseq
    %v2038 = vshrl.u32 %v2037, 7
    %v2039 = vsub.s32 %v724, %v2038
    %v2040 = vrot.slane %v2014, %v2039
    %v2041 = vlaneseq
    %v2042 = vshrl.u32 %v2041, 7
    %v2043 = vsub.s32 %v724, %v2042
    %v2044 = vrot.slane %v2016, %v2043
    %v2045 = vlaneseq
    %v2046 = vshrl.u32 %v2045, 7
    %v2047 = vsub.s32 %v724, %v2046
    %v2048 = vrot.slane %v2018, %v2047
    %v2049 = vlaneseq
    %v2050 = vshrl.u32 %v2049, 7
    %v2051 = vsub.s32 %v724, %v2050
    %v2052 = vrot.slane %v2020, %v2051
    %v2053 = vlaneseq
    %v2054 = vshrl.u32 %v2053, 7
    %v2055 = vsub.s32 %v724, %v2054
    %v2056 = vrot.slane %v2022, %v2055
    %v2057 = vlaneseq
    %v2058 = vshrl.u32 %v2057, 7
    %v2059 = vsub.s32 %v724, %v2058
    %v2060 = vrot.slane %v2024, %v2059
    %v2061 = vlaneseq
    %v2062 = vshrl.u32 %v2061, 7
    %v2063 = vsub.s32 %v724, %v2062
    %v2064 = vrot.slane %v2026, %v2063
    %v2065 = vlaneseq
    %v2066 = vshrl.u32 %v2065, 7
    %v2067 = vsub.s32 %v724, %v2066
    %v2068 = vrot.slane %v2028, %v2067
    %v2069 = vsel %vm757, %v2044, %v2040
    %v2070 = vsel %vm759, %v2048, %v2069
    %v2071 = vsel %vm761, %v2052, %v2070
    %v2072 = vsel %vm763, %v2056, %v2071
    %v2073 = vsel %vm765, %v2060, %v2072
    %v2074 = vsel %vm767, %v2064, %v2073
    %v2075 = vsel %vm769, %v2068, %v2074
    %v2077 = vsel %vm772, %v2075, 0.0
    %2078 = vadd.xlane.f32.xlu0 %v2077
    %v2079 = vpop.xlane.xlu0 %2078
    %v2080 = vrcp.pop %v2079
    %v2082 = vlaneseq
    %v2083 = vshrl.u32 %v2082, 7
    %v2084 = vsub.s32 0, %v2083
    %v2085 = vrot.slane %v2080, %v2084
    %v2086 = vlaneseq
    %v2087 = vshrl.u32 %v2086, 7
    %v2088 = vsub.s32 1, %v2087
    %v2089 = vrot.slane %v2080, %v2088
    %v2090 = vlaneseq
    %v2091 = vshrl.u32 %v2090, 7
    %v2092 = vsub.s32 2, %v2091
    %v2093 = vrot.slane %v2080, %v2092
    %v2094 = vlaneseq
    %v2095 = vshrl.u32 %v2094, 7
    %v2096 = vsub.s32 3, %v2095
    %v2097 = vrot.slane %v2080, %v2096
    %v2098 = vlaneseq
    %v2099 = vshrl.u32 %v2098, 7
    %v2100 = vsub.s32 4, %v2099
    %v2101 = vrot.slane %v2080, %v2100
    %v2102 = vlaneseq
    %v2103 = vshrl.u32 %v2102, 7
    %v2104 = vsub.s32 5, %v2103
    %v2105 = vrot.slane %v2080, %v2104
    %v2106 = vlaneseq
    %v2107 = vshrl.u32 %v2106, 7
    %v2108 = vsub.s32 6, %v2107
    %v2109 = vrot.slane %v2080, %v2108
    %v2110 = vlaneseq
    %v2111 = vshrl.u32 %v2110, 7
    %v2112 = vsub.s32 7, %v2111
    %v2113 = vrot.slane %v2080, %v2112
    %v2122 = vmul.f32 %v2014, %v2085
    %v2123 = vmul.f32 %v2016, %v2089
    %v2124 = vmul.f32 %v2018, %v2093
    %v2125 = vmul.f32 %v2020, %v2097
    %v2126 = vmul.f32 %v2022, %v2101
    %v2127 = vmul.f32 %v2024, %v2105
    %v2128 = vmul.f32 %v2026, %v2109
    %v2129 = vmul.f32 %v2028, %v2113
    %2131 = vset.pattern.permute.xlu0 0
    %2132 = vperm.xlu0 %2131, %v2122
    %v2133 = vpop.permute.xlu0 %2132
    %2136 = vset.pattern.permute.xlu0 0
    %2137 = vperm.xlu0 %2136, %v2123
    %v2138 = vpop.permute.xlu0 %2137
    %2141 = vset.pattern.permute.xlu0 0
    %2142 = vperm.xlu0 %2141, %v2124
    %v2143 = vpop.permute.xlu0 %2142
    %2146 = vset.pattern.permute.xlu0 0
    %2147 = vperm.xlu0 %2146, %v2125
    %v2148 = vpop.permute.xlu0 %2147
    %2151 = vset.pattern.permute.xlu0 0
    %2152 = vperm.xlu0 %2151, %v2126
    %v2153 = vpop.permute.xlu0 %2152
    %2156 = vset.pattern.permute.xlu0 0
    %2157 = vperm.xlu0 %2156, %v2127
    %v2158 = vpop.permute.xlu0 %2157
    %2161 = vset.pattern.permute.xlu0 0
    %2162 = vperm.xlu0 %2161, %v2128
    %v2163 = vpop.permute.xlu0 %2162
    %2166 = vset.pattern.permute.xlu0 0
    %2167 = vperm.xlu0 %2166, %v2129
    %v2168 = vpop.permute.xlu0 %2167
    %v2170 = vmul.f32 %v2133, %v105
    %v2171 = vmul.f32 %v2138, %v106
    %v2172 = vmul.f32 %v2143, %v107
    %v2173 = vmul.f32 %v2148, %v108
    %v2174 = vmul.f32 %v2153, %v109
    %v2175 = vmul.f32 %v2158, %v110
    %v2176 = vmul.f32 %v2163, %v111
    %v2177 = vmul.f32 %v2168, %v112
    %v2178 = vrot.slane %v2170, 4
    %v2179 = vadd.f32 %v2170, %v2178
    %v2180 = vrot.slane %v2179, 2
    %v2181 = vadd.f32 %v2179, %v2180
    %v2182 = vrot.slane %v2181, 1
    %v2183 = vadd.f32 %v2181, %v2182
    %v2184 = vrot.slane %v2171, 4
    %v2185 = vadd.f32 %v2171, %v2184
    %v2186 = vrot.slane %v2185, 2
    %v2187 = vadd.f32 %v2185, %v2186
    %v2188 = vrot.slane %v2187, 1
    %v2189 = vadd.f32 %v2187, %v2188
    %v2190 = vrot.slane %v2172, 4
    %v2191 = vadd.f32 %v2172, %v2190
    %v2192 = vrot.slane %v2191, 2
    %v2193 = vadd.f32 %v2191, %v2192
    %v2194 = vrot.slane %v2193, 1
    %v2195 = vadd.f32 %v2193, %v2194
    %v2196 = vrot.slane %v2173, 4
    %v2197 = vadd.f32 %v2173, %v2196
    %v2198 = vrot.slane %v2197, 2
    %v2199 = vadd.f32 %v2197, %v2198
    %v2200 = vrot.slane %v2199, 1
    %v2201 = vadd.f32 %v2199, %v2200
    %v2202 = vrot.slane %v2174, 4
    %v2203 = vadd.f32 %v2174, %v2202
    %v2204 = vrot.slane %v2203, 2
    %v2205 = vadd.f32 %v2203, %v2204
    %v2206 = vrot.slane %v2205, 1
    %v2207 = vadd.f32 %v2205, %v2206
    %v2208 = vrot.slane %v2175, 4
    %v2209 = vadd.f32 %v2175, %v2208
    %v2210 = vrot.slane %v2209, 2
    %v2211 = vadd.f32 %v2209, %v2210
    %v2212 = vrot.slane %v2211, 1
    %v2213 = vadd.f32 %v2211, %v2212
    %v2214 = vrot.slane %v2176, 4
    %v2215 = vadd.f32 %v2176, %v2214
    %v2216 = vrot.slane %v2215, 2
    %v2217 = vadd.f32 %v2215, %v2216
    %v2218 = vrot.slane %v2217, 1
    %v2219 = vadd.f32 %v2217, %v2218
    %v2220 = vrot.slane %v2177, 4
    %v2221 = vadd.f32 %v2177, %v2220
    %v2222 = vrot.slane %v2221, 2
    %v2223 = vadd.f32 %v2221, %v2222
    %v2224 = vrot.slane %v2223, 1
    %v2225 = vadd.f32 %v2223, %v2224
    %v2226 = vmul.f32 %v2183, %v926
    %v2227 = vmul.f32 %v2189, %v926
    %v2228 = vmul.f32 %v2195, %v926
    %v2229 = vmul.f32 %v2201, %v926
    %v2230 = vmul.f32 %v2207, %v926
    %v2231 = vmul.f32 %v2213, %v926
    %v2232 = vmul.f32 %v2219, %v926
    %v2233 = vmul.f32 %v2225, %v926
    %v2242 = vrot.slane %v2227, 7
    %v2243 = vsel %vm757, %v2242, %v2226
    %v2244 = vrot.slane %v2228, 6
    %v2245 = vsel %vm759, %v2244, %v2243
    %v2246 = vrot.slane %v2229, 5
    %v2247 = vsel %vm761, %v2246, %v2245
    %v2248 = vrot.slane %v2230, 4
    %v2249 = vsel %vm763, %v2248, %v2247
    %v2250 = vrot.slane %v2231, 3
    %v2251 = vsel %vm765, %v2250, %v2249
    %v2252 = vrot.slane %v2232, 2
    %v2253 = vsel %vm767, %v2252, %v2251
    %v2254 = vrot.slane %v2233, 1
    %v2255 = vsel %vm769, %v2254, %v2253
    %2257 = vadd.xlane.f32.xlu0 %v2255
    %v2258 = vpop.xlane.xlu0 %2257
    %v2259 = vmul.f32 %v1634, %v961
    %v2260 = vadd.f32 %v2258, %v2259
    %v2261 = vadd.f32 %v2260, %v964
    %v2262 = vmul.f32 %v2261, %v970
    %v2263 = vmul.f32 %v2261, %v974
    %v2264 = vmul.f32 %v2261, %v978
    %v2265 = vmul.f32 %v2261, %v982
    %v2266 = vadd.f32 %v2262, %v1738
    %v2267 = vadd.f32 %v2263, %v1740
    %v2268 = vadd.f32 %v2264, %v1809
    %v2269 = vadd.f32 %v2265, %v1811
    %v2270 = vadd.f32 %v2266, %v999
    %v2271 = vadd.f32 %v2267, %v1003
    %v2272 = vadd.f32 %v2268, %v1007
    %v2273 = vadd.f32 %v2269, %v1011
    %v2274 = vxor.u32 %v2270, 2147483648
    %v2275 = vmul.f32 %v2274, 1.442695
    %v2276 = vpow.pop %v2275
    %v2277 = vadd.f32 %v2276, 1.0
    %v2278 = vrcp.pop %v2277
    %v2279 = vmul.f32 1.0, %v2278
    %v2280 = vxor.u32 %v2271, 2147483648
    %v2281 = vmul.f32 %v2280, 1.442695
    %v2282 = vpow.pop %v2281
    %v2283 = vadd.f32 %v2282, 1.0
    %v2284 = vrcp.pop %v2283
    %v2285 = vmul.f32 1.0, %v2284
    %v2286 = vtanh.pop %v2272
    %v2287 = vxor.u32 %v2273, 2147483648
    %v2288 = vmul.f32 %v2287, 1.442695
    %v2289 = vpow.pop %v2288
    %v2290 = vadd.f32 %v2289, 1.0
    %v2291 = vrcp.pop %v2290
    %v2292 = vmul.f32 1.0, %v2291
    %v2293 = vmul.f32 %v2285, %v1668
    %v2294 = vmul.f32 %v2279, %v2286
    %v2295 = vadd.f32 %v2293, %v2294
    %v2296 = vtanh.pop %v2295
    %v2297 = vmul.f32 %v2292, %v2296
    %2298 = vmatprep.subr.mxu0 %v256
    %2299 = vmatpush1.msra.mxu0 %v255
    %2300 = vmatprep.subr.mxu0 %v260
    %2301 = vmatpush1.msra.mxu0 %v259
    %2302 = vmatprep.subr.mxu0 %v264
    %2303 = vmatpush1.msra.mxu0 %v263
    %2304 = vmatprep.subr.mxu0 %v268
    %2305 = vmatpush1.msra.mxu0 %v267
    %2306 = vmatprep.subr.mxu0 %v272
    %2307 = vmatpush1.msra.mxu0 %v271
    %2308 = vmatprep.subr.mxu0 %v276
    %2309 = vmatpush1.msra.mxu0 %v275
    %2310 = vmatprep.subr.mxu0 %v280
    %2311 = vmatpush1.msra.mxu0 %v279
    %2312 = vmatprep.subr.mxu0 %v284
    %2313 = vmatpush1.msra.mxu0 %v283
    %2314 = vmatprep.subr.mxu0 %v288
    %2315 = vmatpush1.msra.mxu0 %v287
    %2316 = vmatprep.subr.mxu0 %v292
    %2317 = vmatpush1.msra.mxu0 %v291
    %2318 = vmatprep.subr.mxu0 %v296
    %2319 = vmatpush1.msra.mxu0 %v295
    %2320 = vmatprep.subr.mxu0 %v300
    %2321 = vmatpush1.msra.mxu0 %v299
    %2322 = vmatprep.subr.mxu0 %v304
    %2323 = vmatpush1.msra.mxu0 %v303
    %2324 = vmatprep.subr.mxu0 %v308
    %2325 = vmatpush1.msra.mxu0 %v307
    %2326 = vmatprep.subr.mxu0 %v312
    %2327 = vmatpush1.msra.mxu0 %v311
    %2328 = vmatprep.subr.mxu0 %v316
    %2329 = vmatpush1.msra.mxu0 %v315
    %2330 = vmatprep.subr.mxu0 0.0
    %2331 = vmatpush1.msra.mxu0 0.0
    %2332 = vmatprep.subr.mxu0 0.0
    %2333 = vmatpush1.msra.mxu0 0.0
    %2334 = vmatprep.subr.mxu0 0.0
    %2335 = vmatpush1.msra.mxu0 0.0
    %2336 = vmatprep.subr.mxu0 0.0
    %2337 = vmatpush1.msra.mxu0 0.0
    %2338 = vmatprep.subr.mxu0 0.0
    %2339 = vmatpush1.msra.mxu0 0.0
    %2340 = vmatprep.subr.mxu0 0.0
    %2341 = vmatpush1.msra.mxu0 0.0
    %2342 = vmatprep.subr.mxu0 0.0
    %2343 = vmatpush1.msra.mxu0 0.0
    %2344 = vmatprep.subr.mxu0 0.0
    %2345 = vmatpush1.msra.mxu0 0.0
    %2346 = vmatprep.subr.mxu0 0.0
    %2347 = vmatpush1.msra.mxu0 0.0
    %2348 = vmatprep.subr.mxu0 0.0
    %2349 = vmatpush1.msra.mxu0 0.0
    %2350 = vmatprep.subr.mxu0 0.0
    %2351 = vmatpush1.msra.mxu0 0.0
    %2352 = vmatprep.subr.mxu0 0.0
    %2353 = vmatpush1.msra.mxu0 0.0
    %2354 = vmatprep.subr.mxu0 0.0
    %2355 = vmatpush1.msra.mxu0 0.0
    %2356 = vmatprep.subr.mxu0 0.0
    %2357 = vmatpush1.msra.mxu0 0.0
    %2358 = vmatprep.subr.mxu0 0.0
    %2359 = vmatpush1.msra.mxu0 0.0
    %2360 = vmatprep.subr.mxu0 0.0
    %2361 = vmatpush1.msra.mxu0 0.0
    %2362 = vmatprep.mubr.f32.mxu0 0.0
    %2363 = vmatmul.mubr.f32.gmra.mrb[0].mxu0 %v2297
    %v2364 = vpop.f32.mrb[0].mxu0
    %v2365 = vadd.f32 0.0, %v2364
    %v2366 = vpop.f32.mrb[0].mxu0
    %v2367 = vadd.f32 0.0, %v2366
    %2368 = vdwg.mxu0
    %2369 = vmatprep.subr.mxu0 %v258
    %2370 = vmatpush1.msra.mxu0 %v257
    %2371 = vmatprep.subr.mxu0 %v262
    %2372 = vmatpush1.msra.mxu0 %v261
    %2373 = vmatprep.subr.mxu0 %v266
    %2374 = vmatpush1.msra.mxu0 %v265
    %2375 = vmatprep.subr.mxu0 %v270
    %2376 = vmatpush1.msra.mxu0 %v269
    %2377 = vmatprep.subr.mxu0 %v274
    %2378 = vmatpush1.msra.mxu0 %v273
    %2379 = vmatprep.subr.mxu0 %v278
    %2380 = vmatpush1.msra.mxu0 %v277
    %2381 = vmatprep.subr.mxu0 %v282
    %2382 = vmatpush1.msra.mxu0 %v281
    %2383 = vmatprep.subr.mxu0 %v286
    %2384 = vmatpush1.msra.mxu0 %v285
    %2385 = vmatprep.subr.mxu0 %v290
    %2386 = vmatpush1.msra.mxu0 %v289
    %2387 = vmatprep.subr.mxu0 %v294
    %2388 = vmatpush1.msra.mxu0 %v293
    %2389 = vmatprep.subr.mxu0 %v298
    %2390 = vmatpush1.msra.mxu0 %v297
    %2391 = vmatprep.subr.mxu0 %v302
    %2392 = vmatpush1.msra.mxu0 %v301
    %2393 = vmatprep.subr.mxu0 %v306
    %2394 = vmatpush1.msra.mxu0 %v305
    %2395 = vmatprep.subr.mxu0 %v310
    %2396 = vmatpush1.msra.mxu0 %v309
    %2397 = vmatprep.subr.mxu0 %v314
    %2398 = vmatpush1.msra.mxu0 %v313
    %2399 = vmatprep.subr.mxu0 %v318
    %2400 = vmatpush1.msra.mxu0 %v317
    %2401 = vmatprep.subr.mxu0 0.0
    %2402 = vmatpush1.msra.mxu0 0.0
    %2403 = vmatprep.subr.mxu0 0.0
    %2404 = vmatpush1.msra.mxu0 0.0
    %2405 = vmatprep.subr.mxu0 0.0
    %2406 = vmatpush1.msra.mxu0 0.0
    %2407 = vmatprep.subr.mxu0 0.0
    %2408 = vmatpush1.msra.mxu0 0.0
    %2409 = vmatprep.subr.mxu0 0.0
    %2410 = vmatpush1.msra.mxu0 0.0
    %2411 = vmatprep.subr.mxu0 0.0
    %2412 = vmatpush1.msra.mxu0 0.0
    %2413 = vmatprep.subr.mxu0 0.0
    %2414 = vmatpush1.msra.mxu0 0.0
    %2415 = vmatprep.subr.mxu0 0.0
    %2416 = vmatpush1.msra.mxu0 0.0
    %2417 = vmatprep.subr.mxu0 0.0
    %2418 = vmatpush1.msra.mxu0 0.0
    %2419 = vmatprep.subr.mxu0 0.0
    %2420 = vmatpush1.msra.mxu0 0.0
    %2421 = vmatprep.subr.mxu0 0.0
    %2422 = vmatpush1.msra.mxu0 0.0
    %2423 = vmatprep.subr.mxu0 0.0
    %2424 = vmatpush1.msra.mxu0 0.0
    %2425 = vmatprep.subr.mxu0 0.0
    %2426 = vmatpush1.msra.mxu0 0.0
    %2427 = vmatprep.subr.mxu0 0.0
    %2428 = vmatpush1.msra.mxu0 0.0
    %2429 = vmatprep.subr.mxu0 0.0
    %2430 = vmatpush1.msra.mxu0 0.0
    %2431 = vmatprep.subr.mxu0 0.0
    %2432 = vmatpush1.msra.mxu0 0.0
    %2433 = vmatprep.mubr.f32.mxu0 0.0
    %2434 = vmatmul.mubr.f32.gmra.mrb[0].mxu0 %v2297
    %v2435 = vpop.f32.mrb[0].mxu0
    %v2436 = vadd.f32 0.0, %v2435
    %v2437 = vpop.f32.mrb[0].mxu0
    %v2438 = vadd.f32 0.0, %v2437
    %2439 = vdwg.mxu0
    %2440 = vmatprep.subr.mxu0 0.0
    %2441 = vmatpush1.msra.mxu0 %v461
    %2442 = vmatprep.subr.mxu0 0.0
    %2443 = vmatpush1.msra.mxu0 %v462
    %2444 = vmatprep.subr.mxu0 0.0
    %2445 = vmatpush1.msra.mxu0 %v463
    %2446 = vmatprep.subr.mxu0 0.0
    %2447 = vmatpush1.msra.mxu0 %v464
    %2448 = vmatprep.subr.mxu0 0.0
    %2449 = vmatpush1.msra.mxu0 %v465
    %2450 = vmatprep.subr.mxu0 0.0
    %2451 = vmatpush1.msra.mxu0 %v466
    %2452 = vmatprep.subr.mxu0 0.0
    %2453 = vmatpush1.msra.mxu0 %v467
    %2454 = vmatprep.subr.mxu0 0.0
    %2455 = vmatpush1.msra.mxu0 %v468
    %2456 = vmatprep.subr.mxu0 0.0
    %2457 = vmatpush1.msra.mxu0 %v469
    %2458 = vmatprep.subr.mxu0 0.0
    %2459 = vmatpush1.msra.mxu0 %v470
    %2460 = vmatprep.subr.mxu0 0.0
    %2461 = vmatpush1.msra.mxu0 %v471
    %2462 = vmatprep.subr.mxu0 0.0
    %2463 = vmatpush1.msra.mxu0 %v472
    %2464 = vmatprep.subr.mxu0 0.0
    %2465 = vmatpush1.msra.mxu0 %v473
    %2466 = vmatprep.subr.mxu0 0.0
    %2467 = vmatpush1.msra.mxu0 %v474
    %2468 = vmatprep.subr.mxu0 0.0
    %2469 = vmatpush1.msra.mxu0 %v475
    %2470 = vmatprep.subr.mxu0 0.0
    %2471 = vmatpush1.msra.mxu0 %v476
    %2472 = vmatprep.subr.mxu0 0.0
    %2473 = vmatpush1.msra.mxu0 %v477
    %2474 = vmatprep.subr.mxu0 0.0
    %2475 = vmatpush1.msra.mxu0 %v478
    %2476 = vmatprep.subr.mxu0 0.0
    %2477 = vmatpush1.msra.mxu0 %v479
    %2478 = vmatprep.subr.mxu0 0.0
    %2479 = vmatpush1.msra.mxu0 %v480
    %2480 = vmatprep.subr.mxu0 0.0
    %2481 = vmatpush1.msra.mxu0 %v481
    %2482 = vmatprep.subr.mxu0 0.0
    %2483 = vmatpush1.msra.mxu0 %v482
    %2484 = vmatprep.subr.mxu0 0.0
    %2485 = vmatpush1.msra.mxu0 %v483
    %2486 = vmatprep.subr.mxu0 0.0
    %2487 = vmatpush1.msra.mxu0 %v484
    %2488 = vmatprep.subr.mxu0 0.0
    %2489 = vmatpush1.msra.mxu0 %v485
    %2490 = vmatprep.subr.mxu0 0.0
    %2491 = vmatpush1.msra.mxu0 %v486
    %2492 = vmatprep.subr.mxu0 0.0
    %2493 = vmatpush1.msra.mxu0 %v487
    %2494 = vmatprep.subr.mxu0 0.0
    %2495 = vmatpush1.msra.mxu0 %v488
    %2496 = vmatprep.subr.mxu0 0.0
    %2497 = vmatpush1.msra.mxu0 %v489
    %2498 = vmatprep.subr.mxu0 0.0
    %2499 = vmatpush1.msra.mxu0 %v490
    %2500 = vmatprep.subr.mxu0 0.0
    %2501 = vmatpush1.msra.mxu0 %v491
    %2502 = vmatprep.subr.mxu0 0.0
    %2503 = vmatpush1.msra.mxu0 %v492
    %2504 = vmatprep.mubr.f32.mxu0 %v2295
    %2505 = vmatmul.mubr.f32.gmra.mrb[0].mxu0 %v2297
    %v2506 = vpop.f32.mrb[0].mxu0
    %v2507 = vadd.f32 0.0, %v2506
    %v2508 = vpop.f32.mrb[0].mxu0
    %2509 = vdwg.mxu0
    %v2511 = vcombine.high %v2507, %v2507
    %v2513 = vunpack.c.l.s4 1966171168
    %v2514 = vunpack.c.0.s8 %v2513
    %v2515 = vlaneseq
    %v2516 = vshrl.u32 %v2515, 7
    %v2517 = vsub.s32 %v2514, %v2516
    %v2518 = vrot.slane %v2507, %v2517
    %v2520 = vunpack.c.l.s4 1966171168
    %v2521 = vunpack.c.0.s8 %v2520
    %v2522 = vlaneseq
    %v2523 = vshrl.u32 %v2522, 7
    %v2524 = vsub.s32 %v2521, %v2523
    %v2525 = vrot.slane %v2511, %v2524
    %v2526 = vcombine.high %v2518, %v2518
    %v2527 = vcombine.high %v2525, %v2525
    %v2529 = vunpack.c.l.s4 1966171168
    %v2530 = vunpack.c.0.s8 %v2529
    %v2531 = vlaneseq
    %v2532 = vshrl.u32 %v2531, 7
    %v2533 = vsub.s32 %v2530, %v2532
    %v2534 = vrot.slane %v2518, %v2533
    %v2536 = vunpack.c.l.s4 1966171168
    %v2537 = vunpack.c.0.s8 %v2536
    %v2538 = vlaneseq
    %v2539 = vshrl.u32 %v2538, 7
    %v2540 = vsub.s32 %v2537, %v2539
    %v2541 = vrot.slane %v2525, %v2540
    %v2543 = vunpack.c.l.s4 1966171168
    %v2544 = vunpack.c.0.s8 %v2543
    %v2545 = vlaneseq
    %v2546 = vshrl.u32 %v2545, 7
    %v2547 = vsub.s32 %v2544, %v2546
    %v2548 = vrot.slane %v2526, %v2547
    %v2550 = vunpack.c.l.s4 1966171168
    %v2551 = vunpack.c.0.s8 %v2550
    %v2552 = vlaneseq
    %v2553 = vshrl.u32 %v2552, 7
    %v2554 = vsub.s32 %v2551, %v2553
    %v2555 = vrot.slane %v2527, %v2554
    %v2556 = vcombine.high %v2534, %v2534
    %v2557 = vcombine.high %v2541, %v2541
    %v2558 = vcombine.high %v2548, %v2548
    %v2559 = vcombine.high %v2555, %v2555
    %v2560 = vlaneseq
    %v2561 = vshrl.u32 %v2560, 7
    %v2562 = vsub.s32 0, %v2561
    %v2563 = vrot.slane %v2534, %v2562
    %v2564 = vlaneseq
    %v2565 = vshrl.u32 %v2564, 7
    %v2566 = vsub.s32 0, %v2565
    %v2567 = vrot.slane %v2548, %v2566
    %v2568 = vlaneseq
    %v2569 = vshrl.u32 %v2568, 7
    %v2570 = vsub.s32 0, %v2569
    %v2571 = vrot.slane %v2556, %v2570
    %v2572 = vlaneseq
    %v2573 = vshrl.u32 %v2572, 7
    %v2574 = vsub.s32 0, %v2573
    %v2575 = vrot.slane %v2558, %v2574
    %v2576 = vlaneseq
    %v2577 = vshrl.u32 %v2576, 7
    %v2578 = vsub.s32 0, %v2577
    %v2579 = vrot.slane %v2541, %v2578
    %v2580 = vlaneseq
    %v2581 = vshrl.u32 %v2580, 7
    %v2582 = vsub.s32 0, %v2581
    %v2583 = vrot.slane %v2555, %v2582
    %v2584 = vlaneseq
    %v2585 = vshrl.u32 %v2584, 7
    %v2586 = vsub.s32 0, %v2585
    %v2587 = vrot.slane %v2557, %v2586
    %v2588 = vlaneseq
    %v2589 = vshrl.u32 %v2588, 7
    %v2590 = vsub.s32 0, %v2589
    %v2591 = vrot.slane %v2559, %v2590
    %v2600 = vadd.f32 %v2563, %v247
    %v2601 = vadd.f32 %v2567, %v248
    %v2602 = vadd.f32 %v2571, %v249
    %v2603 = vadd.f32 %v2575, %v250
    %v2604 = vadd.f32 %v2579, %v251
    %v2605 = vadd.f32 %v2583, %v252
    %v2606 = vadd.f32 %v2587, %v253
    %v2607 = vadd.f32 %v2591, %v254
    %v2608 = vtanh.pop %v2600
    %v2609 = vtanh.pop %v2601
    %v2610 = vtanh.pop %v2602
    %v2611 = vtanh.pop %v2603
    %v2612 = vtanh.pop %v2604
    %v2613 = vtanh.pop %v2605
    %v2614 = vtanh.pop %v2606
    %v2615 = vtanh.pop %v2607
    %v2616 = vmul.f32 %v2608, %v673
    %v2617 = vmul.f32 %v2609, %v673
    %v2618 = vmul.f32 %v2610, %v673
    %v2619 = vmul.f32 %v2611, %v673
    %v2620 = vmul.f32 %v2612, %v673
    %v2621 = vmul.f32 %v2613, %v673
    %v2622 = vmul.f32 %v2614, %v673
    %v2623 = vmul.f32 %v2615, %v673
    %2624 = vadd.xlane.f32.xlu0 %v2616
    %v2625 = vpop.xlane.xlu0 %2624
    %2626 = vadd.xlane.f32.xlu0 %v2617
    %v2627 = vpop.xlane.xlu0 %2626
    %2628 = vadd.xlane.f32.xlu0 %v2618
    %v2629 = vpop.xlane.xlu0 %2628
    %2630 = vadd.xlane.f32.xlu0 %v2619
    %v2631 = vpop.xlane.xlu0 %2630
    %2632 = vadd.xlane.f32.xlu0 %v2620
    %v2633 = vpop.xlane.xlu0 %2632
    %2634 = vadd.xlane.f32.xlu0 %v2621
    %v2635 = vpop.xlane.xlu0 %2634
    %2636 = vadd.xlane.f32.xlu0 %v2622
    %v2637 = vpop.xlane.xlu0 %2636
    %2638 = vadd.xlane.f32.xlu0 %v2623
    %v2639 = vpop.xlane.xlu0 %2638
    %v2640 = vmul.f32 %v2625, 1.442695
    %v2641 = vpow.pop %v2640
    %v2642 = vmul.f32 %v2627, 1.442695
    %v2643 = vpow.pop %v2642
    %v2644 = vmul.f32 %v2629, 1.442695
    %v2645 = vpow.pop %v2644
    %v2646 = vmul.f32 %v2631, 1.442695
    %v2647 = vpow.pop %v2646
    %v2648 = vmul.f32 %v2633, 1.442695
    %v2649 = vpow.pop %v2648
    %v2650 = vmul.f32 %v2635, 1.442695
    %v2651 = vpow.pop %v2650
    %v2652 = vmul.f32 %v2637, 1.442695
    %v2653 = vpow.pop %v2652
    %v2654 = vmul.f32 %v2639, 1.442695
    %v2655 = vpow.pop %v2654
    %v2664 = vlaneseq
    %v2665 = vshrl.u32 %v2664, 7
    %v2666 = vsub.s32 %v724, %v2665
    %v2667 = vrot.slane %v2641, %v2666
    %v2668 = vlaneseq
    %v2669 = vshrl.u32 %v2668, 7
    %v2670 = vsub.s32 %v724, %v2669
    %v2671 = vrot.slane %v2643, %v2670
    %v2672 = vlaneseq
    %v2673 = vshrl.u32 %v2672, 7
    %v2674 = vsub.s32 %v724, %v2673
    %v2675 = vrot.slane %v2645, %v2674
    %v2676 = vlaneseq
    %v2677 = vshrl.u32 %v2676, 7
    %v2678 = vsub.s32 %v724, %v2677
    %v2679 = vrot.slane %v2647, %v2678
    %v2680 = vlaneseq
    %v2681 = vshrl.u32 %v2680, 7
    %v2682 = vsub.s32 %v724, %v2681
    %v2683 = vrot.slane %v2649, %v2682
    %v2684 = vlaneseq
    %v2685 = vshrl.u32 %v2684, 7
    %v2686 = vsub.s32 %v724, %v2685
    %v2687 = vrot.slane %v2651, %v2686
    %v2688 = vlaneseq
    %v2689 = vshrl.u32 %v2688, 7
    %v2690 = vsub.s32 %v724, %v2689
    %v2691 = vrot.slane %v2653, %v2690
    %v2692 = vlaneseq
    %v2693 = vshrl.u32 %v2692, 7
    %v2694 = vsub.s32 %v724, %v2693
    %v2695 = vrot.slane %v2655, %v2694
    %v2696 = vsel %vm757, %v2671, %v2667
    %v2697 = vsel %vm759, %v2675, %v2696
    %v2698 = vsel %vm761, %v2679, %v2697
    %v2699 = vsel %vm763, %v2683, %v2698
    %v2700 = vsel %vm765, %v2687, %v2699
    %v2701 = vsel %vm767, %v2691, %v2700
    %v2702 = vsel %vm769, %v2695, %v2701
    %v2704 = vsel %vm772, %v2702, 0.0
    %2705 = vadd.xlane.f32.xlu0 %v2704
    %v2706 = vpop.xlane.xlu0 %2705
    %v2707 = vrcp.pop %v2706
    %v2709 = vlaneseq
    %v2710 = vshrl.u32 %v2709, 7
    %v2711 = vsub.s32 0, %v2710
    %v2712 = vrot.slane %v2707, %v2711
    %v2713 = vlaneseq
    %v2714 = vshrl.u32 %v2713, 7
    %v2715 = vsub.s32 1, %v2714
    %v2716 = vrot.slane %v2707, %v2715
    %v2717 = vlaneseq
    %v2718 = vshrl.u32 %v2717, 7
    %v2719 = vsub.s32 2, %v2718
    %v2720 = vrot.slane %v2707, %v2719
    %v2721 = vlaneseq
    %v2722 = vshrl.u32 %v2721, 7
    %v2723 = vsub.s32 3, %v2722
    %v2724 = vrot.slane %v2707, %v2723
    %v2725 = vlaneseq
    %v2726 = vshrl.u32 %v2725, 7
    %v2727 = vsub.s32 4, %v2726
    %v2728 = vrot.slane %v2707, %v2727
    %v2729 = vlaneseq
    %v2730 = vshrl.u32 %v2729, 7
    %v2731 = vsub.s32 5, %v2730
    %v2732 = vrot.slane %v2707, %v2731
    %v2733 = vlaneseq
    %v2734 = vshrl.u32 %v2733, 7
    %v2735 = vsub.s32 6, %v2734
    %v2736 = vrot.slane %v2707, %v2735
    %v2737 = vlaneseq
    %v2738 = vshrl.u32 %v2737, 7
    %v2739 = vsub.s32 7, %v2738
    %v2740 = vrot.slane %v2707, %v2739
    %v2749 = vmul.f32 %v2641, %v2712
    %v2750 = vmul.f32 %v2643, %v2716
    %v2751 = vmul.f32 %v2645, %v2720
    %v2752 = vmul.f32 %v2647, %v2724
    %v2753 = vmul.f32 %v2649, %v2728
    %v2754 = vmul.f32 %v2651, %v2732
    %v2755 = vmul.f32 %v2653, %v2736
    %v2756 = vmul.f32 %v2655, %v2740
    %2758 = vset.pattern.permute.xlu0 0
    %2759 = vperm.xlu0 %2758, %v2749
    %v2760 = vpop.permute.xlu0 %2759
    %2763 = vset.pattern.permute.xlu0 0
    %2764 = vperm.xlu0 %2763, %v2750
    %v2765 = vpop.permute.xlu0 %2764
    %2768 = vset.pattern.permute.xlu0 0
    %2769 = vperm.xlu0 %2768, %v2751
    %v2770 = vpop.permute.xlu0 %2769
    %2773 = vset.pattern.permute.xlu0 0
    %2774 = vperm.xlu0 %2773, %v2752
    %v2775 = vpop.permute.xlu0 %2774
    %2778 = vset.pattern.permute.xlu0 0
    %2779 = vperm.xlu0 %2778, %v2753
    %v2780 = vpop.permute.xlu0 %2779
    %2783 = vset.pattern.permute.xlu0 0
    %2784 = vperm.xlu0 %2783, %v2754
    %v2785 = vpop.permute.xlu0 %2784
    %2788 = vset.pattern.permute.xlu0 0
    %2789 = vperm.xlu0 %2788, %v2755
    %v2790 = vpop.permute.xlu0 %2789
    %2793 = vset.pattern.permute.xlu0 0
    %2794 = vperm.xlu0 %2793, %v2756
    %v2795 = vpop.permute.xlu0 %2794
    %v2797 = vmul.f32 %v2760, %v105
    %v2798 = vmul.f32 %v2765, %v106
    %v2799 = vmul.f32 %v2770, %v107
    %v2800 = vmul.f32 %v2775, %v108
    %v2801 = vmul.f32 %v2780, %v109
    %v2802 = vmul.f32 %v2785, %v110
    %v2803 = vmul.f32 %v2790, %v111
    %v2804 = vmul.f32 %v2795, %v112
    %v2805 = vrot.slane %v2797, 4
    %v2806 = vadd.f32 %v2797, %v2805
    %v2807 = vrot.slane %v2806, 2
    %v2808 = vadd.f32 %v2806, %v2807
    %v2809 = vrot.slane %v2808, 1
    %v2810 = vadd.f32 %v2808, %v2809
    %v2811 = vrot.slane %v2798, 4
    %v2812 = vadd.f32 %v2798, %v2811
    %v2813 = vrot.slane %v2812, 2
    %v2814 = vadd.f32 %v2812, %v2813
    %v2815 = vrot.slane %v2814, 1
    %v2816 = vadd.f32 %v2814, %v2815
    %v2817 = vrot.slane %v2799, 4
    %v2818 = vadd.f32 %v2799, %v2817
    %v2819 = vrot.slane %v2818, 2
    %v2820 = vadd.f32 %v2818, %v2819
    %v2821 = vrot.slane %v2820, 1
    %v2822 = vadd.f32 %v2820, %v2821
    %v2823 = vrot.slane %v2800, 4
    %v2824 = vadd.f32 %v2800, %v2823
    %v2825 = vrot.slane %v2824, 2
    %v2826 = vadd.f32 %v2824, %v2825
    %v2827 = vrot.slane %v2826, 1
    %v2828 = vadd.f32 %v2826, %v2827
    %v2829 = vrot.slane %v2801, 4
    %v2830 = vadd.f32 %v2801, %v2829
    %v2831 = vrot.slane %v2830, 2
    %v2832 = vadd.f32 %v2830, %v2831
    %v2833 = vrot.slane %v2832, 1
    %v2834 = vadd.f32 %v2832, %v2833
    %v2835 = vrot.slane %v2802, 4
    %v2836 = vadd.f32 %v2802, %v2835
    %v2837 = vrot.slane %v2836, 2
    %v2838 = vadd.f32 %v2836, %v2837
    %v2839 = vrot.slane %v2838, 1
    %v2840 = vadd.f32 %v2838, %v2839
    %v2841 = vrot.slane %v2803, 4
    %v2842 = vadd.f32 %v2803, %v2841
    %v2843 = vrot.slane %v2842, 2
    %v2844 = vadd.f32 %v2842, %v2843
    %v2845 = vrot.slane %v2844, 1
    %v2846 = vadd.f32 %v2844, %v2845
    %v2847 = vrot.slane %v2804, 4
    %v2848 = vadd.f32 %v2804, %v2847
    %v2849 = vrot.slane %v2848, 2
    %v2850 = vadd.f32 %v2848, %v2849
    %v2851 = vrot.slane %v2850, 1
    %v2852 = vadd.f32 %v2850, %v2851
    %v2853 = vmul.f32 %v2810, %v926
    %v2854 = vmul.f32 %v2816, %v926
    %v2855 = vmul.f32 %v2822, %v926
    %v2856 = vmul.f32 %v2828, %v926
    %v2857 = vmul.f32 %v2834, %v926
    %v2858 = vmul.f32 %v2840, %v926
    %v2859 = vmul.f32 %v2846, %v926
    %v2860 = vmul.f32 %v2852, %v926
    %v2869 = vrot.slane %v2854, 7
    %v2870 = vsel %vm757, %v2869, %v2853
    %v2871 = vrot.slane %v2855, 6
    %v2872 = vsel %vm759, %v2871, %v2870
    %v2873 = vrot.slane %v2856, 5
    %v2874 = vsel %vm761, %v2873, %v2872
    %v2875 = vrot.slane %v2857, 4
    %v2876 = vsel %vm763, %v2875, %v2874
    %v2877 = vrot.slane %v2858, 3
    %v2878 = vsel %vm765, %v2877, %v2876
    %v2879 = vrot.slane %v2859, 2
    %v2880 = vsel %vm767, %v2879, %v2878
    %v2881 = vrot.slane %v2860, 1
    %v2882 = vsel %vm769, %v2881, %v2880
    %2884 = vadd.xlane.f32.xlu0 %v2882
    %v2885 = vpop.xlane.xlu0 %2884
    %v2886 = vmul.f32 %v2261, %v961
    %v2887 = vadd.f32 %v2885, %v2886
    %v2888 = vadd.f32 %v2887, %v964
    %v2889 = vmul.f32 %v2888, %v970
    %v2890 = vmul.f32 %v2888, %v974
    %v2891 = vmul.f32 %v2888, %v978
    %v2892 = vmul.f32 %v2888, %v982
    %v2893 = vadd.f32 %v2889, %v2365
    %v2894 = vadd.f32 %v2890, %v2367
    %v2895 = vadd.f32 %v2891, %v2436
    %v2896 = vadd.f32 %v2892, %v2438
    %v2897 = vadd.f32 %v2893, %v999
    %v2898 = vadd.f32 %v2894, %v1003
    %v2899 = vadd.f32 %v2895, %v1007
    %v2900 = vadd.f32 %v2896, %v1011
    %v2901 = vxor.u32 %v2897, 2147483648
    %v2902 = vmul.f32 %v2901, 1.442695
    %v2903 = vpow.pop %v2902
    %v2904 = vadd.f32 %v2903, 1.0
    %v2905 = vrcp.pop %v2904
    %v2906 = vmul.f32 1.0, %v2905
    %v2907 = vxor.u32 %v2898, 2147483648
    %v2908 = vmul.f32 %v2907, 1.442695
    %v2909 = vpow.pop %v2908
    %v2910 = vadd.f32 %v2909, 1.0
    %v2911 = vrcp.pop %v2910
    %v2912 = vmul.f32 1.0, %v2911
    %v2913 = vtanh.pop %v2899
    %v2914 = vxor.u32 %v2900, 2147483648
    %v2915 = vmul.f32 %v2914, 1.442695
    %v2916 = vpow.pop %v2915
    %v2917 = vadd.f32 %v2916, 1.0
    %v2918 = vrcp.pop %v2917
    %v2919 = vmul.f32 1.0, %v2918
    %v2920 = vmul.f32 %v2912, %v2295
    %v2921 = vmul.f32 %v2906, %v2913
    %v2922 = vadd.f32 %v2920, %v2921
    %v2923 = vtanh.pop %v2922
    %v2924 = vmul.f32 %v2919, %v2923
    %2925 = vmatprep.subr.mxu0 %v256
    %2926 = vmatpush1.msra.mxu0 %v255
    %2927 = vmatprep.subr.mxu0 %v260
    %2928 = vmatpush1.msra.mxu0 %v259
    %2929 = vmatprep.subr.mxu0 %v264
    %2930 = vmatpush1.msra.mxu0 %v263
    %2931 = vmatprep.subr.mxu0 %v268
    %2932 = vmatpush1.msra.mxu0 %v267
    %2933 = vmatprep.subr.mxu0 %v272
    %2934 = vmatpush1.msra.mxu0 %v271
    %2935 = vmatprep.subr.mxu0 %v276
    %2936 = vmatpush1.msra.mxu0 %v275
    %2937 = vmatprep.subr.mxu0 %v280
    %2938 = vmatpush1.msra.mxu0 %v279
    %2939 = vmatprep.subr.mxu0 %v284
    %2940 = vmatpush1.msra.mxu0 %v283
    %2941 = vmatprep.subr.mxu0 %v288
    %2942 = vmatpush1.msra.mxu0 %v287
    %2943 = vmatprep.subr.mxu0 %v292
    %2944 = vmatpush1.msra.mxu0 %v291
    %2945 = vmatprep.subr.mxu0 %v296
    %2946 = vmatpush1.msra.mxu0 %v295
    %2947 = vmatprep.subr.mxu0 %v300
    %2948 = vmatpush1.msra.mxu0 %v299
    %2949 = vmatprep.subr.mxu0 %v304
    %2950 = vmatpush1.msra.mxu0 %v303
    %2951 = vmatprep.subr.mxu0 %v308
    %2952 = vmatpush1.msra.mxu0 %v307
    %2953 = vmatprep.subr.mxu0 %v312
    %2954 = vmatpush1.msra.mxu0 %v311
    %2955 = vmatprep.subr.mxu0 %v316
    %2956 = vmatpush1.msra.mxu0 %v315
    %2957 = vmatprep.subr.mxu0 0.0
    %2958 = vmatpush1.msra.mxu0 0.0
    %2959 = vmatprep.subr.mxu0 0.0
    %2960 = vmatpush1.msra.mxu0 0.0
    %2961 = vmatprep.subr.mxu0 0.0
    %2962 = vmatpush1.msra.mxu0 0.0
    %2963 = vmatprep.subr.mxu0 0.0
    %2964 = vmatpush1.msra.mxu0 0.0
    %2965 = vmatprep.subr.mxu0 0.0
    %2966 = vmatpush1.msra.mxu0 0.0
    %2967 = vmatprep.subr.mxu0 0.0
    %2968 = vmatpush1.msra.mxu0 0.0
    %2969 = vmatprep.subr.mxu0 0.0
    %2970 = vmatpush1.msra.mxu0 0.0
    %2971 = vmatprep.subr.mxu0 0.0
    %2972 = vmatpush1.msra.mxu0 0.0
    %2973 = vmatprep.subr.mxu0 0.0
    %2974 = vmatpush1.msra.mxu0 0.0
    %2975 = vmatprep.subr.mxu0 0.0
    %2976 = vmatpush1.msra.mxu0 0.0
    %2977 = vmatprep.subr.mxu0 0.0
    %2978 = vmatpush1.msra.mxu0 0.0
    %2979 = vmatprep.subr.mxu0 0.0
    %2980 = vmatpush1.msra.mxu0 0.0
    %2981 = vmatprep.subr.mxu0 0.0
    %2982 = vmatpush1.msra.mxu0 0.0
    %2983 = vmatprep.subr.mxu0 0.0
    %2984 = vmatpush1.msra.mxu0 0.0
    %2985 = vmatprep.subr.mxu0 0.0
    %2986 = vmatpush1.msra.mxu0 0.0
    %2987 = vmatprep.subr.mxu0 0.0
    %2988 = vmatpush1.msra.mxu0 0.0
    %2989 = vmatprep.mubr.f32.mxu0 0.0
    %2990 = vmatmul.mubr.f32.gmra.mrb[0].mxu0 %v2924
    %v2991 = vpop.f32.mrb[0].mxu0
    %v2992 = vadd.f32 0.0, %v2991
    %v2993 = vpop.f32.mrb[0].mxu0
    %v2994 = vadd.f32 0.0, %v2993
    %2995 = vdwg.mxu0
    %2996 = vmatprep.subr.mxu0 %v258
    %2997 = vmatpush1.msra.mxu0 %v257
    %2998 = vmatprep.subr.mxu0 %v262
    %2999 = vmatpush1.msra.mxu0 %v261
    %3000 = vmatprep.subr.mxu0 %v266
    %3001 = vmatpush1.msra.mxu0 %v265
    %3002 = vmatprep.subr.mxu0 %v270
    %3003 = vmatpush1.msra.mxu0 %v269
    %3004 = vmatprep.subr.mxu0 %v274
    %3005 = vmatpush1.msra.mxu0 %v273
    %3006 = vmatprep.subr.mxu0 %v278
    %3007 = vmatpush1.msra.mxu0 %v277
    %3008 = vmatprep.subr.mxu0 %v282
    %3009 = vmatpush1.msra.mxu0 %v281
    %3010 = vmatprep.subr.mxu0 %v286
    %3011 = vmatpush1.msra.mxu0 %v285
    %3012 = vmatprep.subr.mxu0 %v290
    %3013 = vmatpush1.msra.mxu0 %v289
    %3014 = vmatprep.subr.mxu0 %v294
    %3015 = vmatpush1.msra.mxu0 %v293
    %3016 = vmatprep.subr.mxu0 %v298
    %3017 = vmatpush1.msra.mxu0 %v297
    %3018 = vmatprep.subr.mxu0 %v302
    %3019 = vmatpush1.msra.mxu0 %v301
    %3020 = vmatprep.subr.mxu0 %v306
    %3021 = vmatpush1.msra.mxu0 %v305
    %3022 = vmatprep.subr.mxu0 %v310
    %3023 = vmatpush1.msra.mxu0 %v309
    %3024 = vmatprep.subr.mxu0 %v314
    %3025 = vmatpush1.msra.mxu0 %v313
    %3026 = vmatprep.subr.mxu0 %v318
    %3027 = vmatpush1.msra.mxu0 %v317
    %3028 = vmatprep.subr.mxu0 0.0
    %3029 = vmatpush1.msra.mxu0 0.0
    %3030 = vmatprep.subr.mxu0 0.0
    %3031 = vmatpush1.msra.mxu0 0.0
    %3032 = vmatprep.subr.mxu0 0.0
    %3033 = vmatpush1.msra.mxu0 0.0
    %3034 = vmatprep.subr.mxu0 0.0
    %3035 = vmatpush1.msra.mxu0 0.0
    %3036 = vmatprep.subr.mxu0 0.0
    %3037 = vmatpush1.msra.mxu0 0.0
    %3038 = vmatprep.subr.mxu0 0.0
    %3039 = vmatpush1.msra.mxu0 0.0
    %3040 = vmatprep.subr.mxu0 0.0
    %3041 = vmatpush1.msra.mxu0 0.0
    %3042 = vmatprep.subr.mxu0 0.0
    %3043 = vmatpush1.msra.mxu0 0.0
    %3044 = vmatprep.subr.mxu0 0.0
    %3045 = vmatpush1.msra.mxu0 0.0
    %3046 = vmatprep.subr.mxu0 0.0
    %3047 = vmatpush1.msra.mxu0 0.0
    %3048 = vmatprep.subr.mxu0 0.0
    %3049 = vmatpush1.msra.mxu0 0.0
    %3050 = vmatprep.subr.mxu0 0.0
    %3051 = vmatpush1.msra.mxu0 0.0
    %3052 = vmatprep.subr.mxu0 0.0
    %3053 = vmatpush1.msra.mxu0 0.0
    %3054 = vmatprep.subr.mxu0 0.0
    %3055 = vmatpush1.msra.mxu0 0.0
    %3056 = vmatprep.subr.mxu0 0.0
    %3057 = vmatpush1.msra.mxu0 0.0
    %3058 = vmatprep.subr.mxu0 0.0
    %3059 = vmatpush1.msra.mxu0 0.0
    %3060 = vmatprep.mubr.f32.mxu0 0.0
    %3061 = vmatmul.mubr.f32.gmra.mrb[0].mxu0 %v2924
    %v3062 = vpop.f32.mrb[0].mxu0
    %v3063 = vadd.f32 0.0, %v3062
    %v3064 = vpop.f32.mrb[0].mxu0
    %v3065 = vadd.f32 0.0, %v3064
    %3066 = vdwg.mxu0
    %3067 = vmatprep.subr.mxu0 0.0
    %3068 = vmatpush1.msra.mxu0 %v461
    %3069 = vmatprep.subr.mxu0 0.0
    %3070 = vmatpush1.msra.mxu0 %v462
    %3071 = vmatprep.subr.mxu0 0.0
    %3072 = vmatpush1.msra.mxu0 %v463
    %3073 = vmatprep.subr.mxu0 0.0
    %3074 = vmatpush1.msra.mxu0 %v464
    %3075 = vmatprep.subr.mxu0 0.0
    %3076 = vmatpush1.msra.mxu0 %v465
    %3077 = vmatprep.subr.mxu0 0.0
    %3078 = vmatpush1.msra.mxu0 %v466
    %3079 = vmatprep.subr.mxu0 0.0
    %3080 = vmatpush1.msra.mxu0 %v467
    %3081 = vmatprep.subr.mxu0 0.0
    %3082 = vmatpush1.msra.mxu0 %v468
    %3083 = vmatprep.subr.mxu0 0.0
    %3084 = vmatpush1.msra.mxu0 %v469
    %3085 = vmatprep.subr.mxu0 0.0
    %3086 = vmatpush1.msra.mxu0 %v470
    %3087 = vmatprep.subr.mxu0 0.0
    %3088 = vmatpush1.msra.mxu0 %v471
    %3089 = vmatprep.subr.mxu0 0.0
    %3090 = vmatpush1.msra.mxu0 %v472
    %3091 = vmatprep.subr.mxu0 0.0
    %3092 = vmatpush1.msra.mxu0 %v473
    %3093 = vmatprep.subr.mxu0 0.0
    %3094 = vmatpush1.msra.mxu0 %v474
    %3095 = vmatprep.subr.mxu0 0.0
    %3096 = vmatpush1.msra.mxu0 %v475
    %3097 = vmatprep.subr.mxu0 0.0
    %3098 = vmatpush1.msra.mxu0 %v476
    %3099 = vmatprep.subr.mxu0 0.0
    %3100 = vmatpush1.msra.mxu0 %v477
    %3101 = vmatprep.subr.mxu0 0.0
    %3102 = vmatpush1.msra.mxu0 %v478
    %3103 = vmatprep.subr.mxu0 0.0
    %3104 = vmatpush1.msra.mxu0 %v479
    %3105 = vmatprep.subr.mxu0 0.0
    %3106 = vmatpush1.msra.mxu0 %v480
    %3107 = vmatprep.subr.mxu0 0.0
    %3108 = vmatpush1.msra.mxu0 %v481
    %3109 = vmatprep.subr.mxu0 0.0
    %3110 = vmatpush1.msra.mxu0 %v482
    %3111 = vmatprep.subr.mxu0 0.0
    %3112 = vmatpush1.msra.mxu0 %v483
    %3113 = vmatprep.subr.mxu0 0.0
    %3114 = vmatpush1.msra.mxu0 %v484
    %3115 = vmatprep.subr.mxu0 0.0
    %3116 = vmatpush1.msra.mxu0 %v485
    %3117 = vmatprep.subr.mxu0 0.0
    %3118 = vmatpush1.msra.mxu0 %v486
    %3119 = vmatprep.subr.mxu0 0.0
    %3120 = vmatpush1.msra.mxu0 %v487
    %3121 = vmatprep.subr.mxu0 0.0
    %3122 = vmatpush1.msra.mxu0 %v488
    %3123 = vmatprep.subr.mxu0 0.0
    %3124 = vmatpush1.msra.mxu0 %v489
    %3125 = vmatprep.subr.mxu0 0.0
    %3126 = vmatpush1.msra.mxu0 %v490
    %3127 = vmatprep.subr.mxu0 0.0
    %3128 = vmatpush1.msra.mxu0 %v491
    %3129 = vmatprep.subr.mxu0 0.0
    %3130 = vmatpush1.msra.mxu0 %v492
    %3131 = vmatprep.mubr.f32.mxu0 %v2922
    %3132 = vmatmul.mubr.f32.gmra.mrb[0].mxu0 %v2924
    %v3133 = vpop.f32.mrb[0].mxu0
    %v3134 = vadd.f32 0.0, %v3133
    %v3135 = vpop.f32.mrb[0].mxu0
    %3136 = vdwg.mxu0
    %v3138 = vcombine.high %v3134, %v3134
    %v3140 = vunpack.c.l.s4 1966171168
    %v3141 = vunpack.c.0.s8 %v3140
    %v3142 = vlaneseq
    %v3143 = vshrl.u32 %v3142, 7
    %v3144 = vsub.s32 %v3141, %v3143
    %v3145 = vrot.slane %v3134, %v3144
    %v3147 = vunpack.c.l.s4 1966171168
    %v3148 = vunpack.c.0.s8 %v3147
    %v3149 = vlaneseq
    %v3150 = vshrl.u32 %v3149, 7
    %v3151 = vsub.s32 %v3148, %v3150
    %v3152 = vrot.slane %v3138, %v3151
    %v3153 = vcombine.high %v3145, %v3145
    %v3154 = vcombine.high %v3152, %v3152
    %v3156 = vunpack.c.l.s4 1966171168
    %v3157 = vunpack.c.0.s8 %v3156
    %v3158 = vlaneseq
    %v3159 = vshrl.u32 %v3158, 7
    %v3160 = vsub.s32 %v3157, %v3159
    %v3161 = vrot.slane %v3145, %v3160
    %v3163 = vunpack.c.l.s4 1966171168
    %v3164 = vunpack.c.0.s8 %v3163
    %v3165 = vlaneseq
    %v3166 = vshrl.u32 %v3165, 7
    %v3167 = vsub.s32 %v3164, %v3166
    %v3168 = vrot.slane %v3152, %v3167
    %v3170 = vunpack.c.l.s4 1966171168
    %v3171 = vunpack.c.0.s8 %v3170
    %v3172 = vlaneseq
    %v3173 = vshrl.u32 %v3172, 7
    %v3174 = vsub.s32 %v3171, %v3173
    %v3175 = vrot.slane %v3153, %v3174
    %v3177 = vunpack.c.l.s4 1966171168
    %v3178 = vunpack.c.0.s8 %v3177
    %v3179 = vlaneseq
    %v3180 = vshrl.u32 %v3179, 7
    %v3181 = vsub.s32 %v3178, %v3180
    %v3182 = vrot.slane %v3154, %v3181
    %v3183 = vcombine.high %v3161, %v3161
    %v3184 = vcombine.high %v3168, %v3168
    %v3185 = vcombine.high %v3175, %v3175
    %v3186 = vcombine.high %v3182, %v3182
    %v3187 = vlaneseq
    %v3188 = vshrl.u32 %v3187, 7
    %v3189 = vsub.s32 0, %v3188
    %v3190 = vrot.slane %v3161, %v3189
    %v3191 = vlaneseq
    %v3192 = vshrl.u32 %v3191, 7
    %v3193 = vsub.s32 0, %v3192
    %v3194 = vrot.slane %v3175, %v3193
    %v3195 = vlaneseq
    %v3196 = vshrl.u32 %v3195, 7
    %v3197 = vsub.s32 0, %v3196
    %v3198 = vrot.slane %v3183, %v3197
    %v3199 = vlaneseq
    %v3200 = vshrl.u32 %v3199, 7
    %v3201 = vsub.s32 0, %v3200
    %v3202 = vrot.slane %v3185, %v3201
    %v3203 = vlaneseq
    %v3204 = vshrl.u32 %v3203, 7
    %v3205 = vsub.s32 0, %v3204
    %v3206 = vrot.slane %v3168, %v3205
    %v3207 = vlaneseq
    %v3208 = vshrl.u32 %v3207, 7
    %v3209 = vsub.s32 0, %v3208
    %v3210 = vrot.slane %v3182, %v3209
    %v3211 = vlaneseq
    %v3212 = vshrl.u32 %v3211, 7
    %v3213 = vsub.s32 0, %v3212
    %v3214 = vrot.slane %v3184, %v3213
    %v3215 = vlaneseq
    %v3216 = vshrl.u32 %v3215, 7
    %v3217 = vsub.s32 0, %v3216
    %v3218 = vrot.slane %v3186, %v3217
    %v3227 = vadd.f32 %v3190, %v247
    %v3228 = vadd.f32 %v3194, %v248
    %v3229 = vadd.f32 %v3198, %v249
    %v3230 = vadd.f32 %v3202, %v250
    %v3231 = vadd.f32 %v3206, %v251
    %v3232 = vadd.f32 %v3210, %v252
    %v3233 = vadd.f32 %v3214, %v253
    %v3234 = vadd.f32 %v3218, %v254
    %v3235 = vtanh.pop %v3227
    %v3236 = vtanh.pop %v3228
    %v3237 = vtanh.pop %v3229
    %v3238 = vtanh.pop %v3230
    %v3239 = vtanh.pop %v3231
    %v3240 = vtanh.pop %v3232
    %v3241 = vtanh.pop %v3233
    %v3242 = vtanh.pop %v3234
    %v3243 = vmul.f32 %v3235, %v673
    %v3244 = vmul.f32 %v3236, %v673
    %v3245 = vmul.f32 %v3237, %v673
    %v3246 = vmul.f32 %v3238, %v673
    %v3247 = vmul.f32 %v3239, %v673
    %v3248 = vmul.f32 %v3240, %v673
    %v3249 = vmul.f32 %v3241, %v673
    %v3250 = vmul.f32 %v3242, %v673
    %3251 = vadd.xlane.f32.xlu0 %v3243
    %v3252 = vpop.xlane.xlu0 %3251
    %3253 = vadd.xlane.f32.xlu0 %v3244
    %v3254 = vpop.xlane.xlu0 %3253
    %3255 = vadd.xlane.f32.xlu0 %v3245
    %v3256 = vpop.xlane.xlu0 %3255
    %3257 = vadd.xlane.f32.xlu0 %v3246
    %v3258 = vpop.xlane.xlu0 %3257
    %3259 = vadd.xlane.f32.xlu0 %v3247
    %v3260 = vpop.xlane.xlu0 %3259
    %3261 = vadd.xlane.f32.xlu0 %v3248
    %v3262 = vpop.xlane.xlu0 %3261
    %3263 = vadd.xlane.f32.xlu0 %v3249
    %v3264 = vpop.xlane.xlu0 %3263
    %3265 = vadd.xlane.f32.xlu0 %v3250
    %v3266 = vpop.xlane.xlu0 %3265
    %v3267 = vmul.f32 %v3252, 1.442695
    %v3268 = vpow.pop %v3267
    %v3269 = vmul.f32 %v3254, 1.442695
    %v3270 = vpow.pop %v3269
    %v3271 = vmul.f32 %v3256, 1.442695
    %v3272 = vpow.pop %v3271
    %v3273 = vmul.f32 %v3258, 1.442695
    %v3274 = vpow.pop %v3273
    %v3275 = vmul.f32 %v3260, 1.442695
    %v3276 = vpow.pop %v3275
    %v3277 = vmul.f32 %v3262, 1.442695
    %v3278 = vpow.pop %v3277
    %v3279 = vmul.f32 %v3264, 1.442695
    %v3280 = vpow.pop %v3279
    %v3281 = vmul.f32 %v3266, 1.442695
    %v3282 = vpow.pop %v3281
    %v3291 = vlaneseq
    %v3292 = vshrl.u32 %v3291, 7
    %v3293 = vsub.s32 %v724, %v3292
    %v3294 = vrot.slane %v3268, %v3293
    %v3295 = vlaneseq
    %v3296 = vshrl.u32 %v3295, 7
    %v3297 = vsub.s32 %v724, %v3296
    %v3298 = vrot.slane %v3270, %v3297
    %v3299 = vlaneseq
    %v3300 = vshrl.u32 %v3299, 7
    %v3301 = vsub.s32 %v724, %v3300
    %v3302 = vrot.slane %v3272, %v3301
    %v3303 = vlaneseq
    %v3304 = vshrl.u32 %v3303, 7
    %v3305 = vsub.s32 %v724, %v3304
    %v3306 = vrot.slane %v3274, %v3305
    %v3307 = vlaneseq
    %v3308 = vshrl.u32 %v3307, 7
    %v3309 = vsub.s32 %v724, %v3308
    %v3310 = vrot.slane %v3276, %v3309
    %v3311 = vlaneseq
    %v3312 = vshrl.u32 %v3311, 7
    %v3313 = vsub.s32 %v724, %v3312
    %v3314 = vrot.slane %v3278, %v3313
    %v3315 = vlaneseq
    %v3316 = vshrl.u32 %v3315, 7
    %v3317 = vsub.s32 %v724, %v3316
    %v3318 = vrot.slane %v3280, %v3317
    %v3319 = vlaneseq
    %v3320 = vshrl.u32 %v3319, 7
    %v3321 = vsub.s32 %v724, %v3320
    %v3322 = vrot.slane %v3282, %v3321
    %v3323 = vsel %vm757, %v3298, %v3294
    %v3324 = vsel %vm759, %v3302, %v3323
    %v3325 = vsel %vm761, %v3306, %v3324
    %v3326 = vsel %vm763, %v3310, %v3325
    %v3327 = vsel %vm765, %v3314, %v3326
    %v3328 = vsel %vm767, %v3318, %v3327
    %v3329 = vsel %vm769, %v3322, %v3328
    %v3331 = vsel %vm772, %v3329, 0.0
    %3332 = vadd.xlane.f32.xlu0 %v3331
    %v3333 = vpop.xlane.xlu0 %3332
    %v3334 = vrcp.pop %v3333
    %v3336 = vlaneseq
    %v3337 = vshrl.u32 %v3336, 7
    %v3338 = vsub.s32 0, %v3337
    %v3339 = vrot.slane %v3334, %v3338
    %v3340 = vlaneseq
    %v3341 = vshrl.u32 %v3340, 7
    %v3342 = vsub.s32 1, %v3341
    %v3343 = vrot.slane %v3334, %v3342
    %v3344 = vlaneseq
    %v3345 = vshrl.u32 %v3344, 7
    %v3346 = vsub.s32 2, %v3345
    %v3347 = vrot.slane %v3334, %v3346
    %v3348 = vlaneseq
    %v3349 = vshrl.u32 %v3348, 7
    %v3350 = vsub.s32 3, %v3349
    %v3351 = vrot.slane %v3334, %v3350
    %v3352 = vlaneseq
    %v3353 = vshrl.u32 %v3352, 7
    %v3354 = vsub.s32 4, %v3353
    %v3355 = vrot.slane %v3334, %v3354
    %v3356 = vlaneseq
    %v3357 = vshrl.u32 %v3356, 7
    %v3358 = vsub.s32 5, %v3357
    %v3359 = vrot.slane %v3334, %v3358
    %v3360 = vlaneseq
    %v3361 = vshrl.u32 %v3360, 7
    %v3362 = vsub.s32 6, %v3361
    %v3363 = vrot.slane %v3334, %v3362
    %v3364 = vlaneseq
    %v3365 = vshrl.u32 %v3364, 7
    %v3366 = vsub.s32 7, %v3365
    %v3367 = vrot.slane %v3334, %v3366
    %v3376 = vmul.f32 %v3268, %v3339
    %v3377 = vmul.f32 %v3270, %v3343
    %v3378 = vmul.f32 %v3272, %v3347
    %v3379 = vmul.f32 %v3274, %v3351
    %v3380 = vmul.f32 %v3276, %v3355
    %v3381 = vmul.f32 %v3278, %v3359
    %v3382 = vmul.f32 %v3280, %v3363
    %v3383 = vmul.f32 %v3282, %v3367
    %3385 = vset.pattern.permute.xlu0 0
    %3386 = vperm.xlu0 %3385, %v3376
    %v3387 = vpop.permute.xlu0 %3386
    %3390 = vset.pattern.permute.xlu0 0
    %3391 = vperm.xlu0 %3390, %v3377
    %v3392 = vpop.permute.xlu0 %3391
    %3395 = vset.pattern.permute.xlu0 0
    %3396 = vperm.xlu0 %3395, %v3378
    %v3397 = vpop.permute.xlu0 %3396
    %3400 = vset.pattern.permute.xlu0 0
    %3401 = vperm.xlu0 %3400, %v3379
    %v3402 = vpop.permute.xlu0 %3401
    %3405 = vset.pattern.permute.xlu0 0
    %3406 = vperm.xlu0 %3405, %v3380
    %v3407 = vpop.permute.xlu0 %3406
    %3410 = vset.pattern.permute.xlu0 0
    %3411 = vperm.xlu0 %3410, %v3381
    %v3412 = vpop.permute.xlu0 %3411
    %3415 = vset.pattern.permute.xlu0 0
    %3416 = vperm.xlu0 %3415, %v3382
    %v3417 = vpop.permute.xlu0 %3416
    %3420 = vset.pattern.permute.xlu0 0
    %3421 = vperm.xlu0 %3420, %v3383
    %v3422 = vpop.permute.xlu0 %3421
    %v3424 = vmul.f32 %v3387, %v105
    %v3425 = vmul.f32 %v3392, %v106
    %v3426 = vmul.f32 %v3397, %v107
    %v3427 = vmul.f32 %v3402, %v108
    %v3428 = vmul.f32 %v3407, %v109
    %v3429 = vmul.f32 %v3412, %v110
    %v3430 = vmul.f32 %v3417, %v111
    %v3431 = vmul.f32 %v3422, %v112
    %v3432 = vrot.slane %v3424, 4
    %v3433 = vadd.f32 %v3424, %v3432
    %v3434 = vrot.slane %v3433, 2
    %v3435 = vadd.f32 %v3433, %v3434
    %v3436 = vrot.slane %v3435, 1
    %v3437 = vadd.f32 %v3435, %v3436
    %v3438 = vrot.slane %v3425, 4
    %v3439 = vadd.f32 %v3425, %v3438
    %v3440 = vrot.slane %v3439, 2
    %v3441 = vadd.f32 %v3439, %v3440
    %v3442 = vrot.slane %v3441, 1
    %v3443 = vadd.f32 %v3441, %v3442
    %v3444 = vrot.slane %v3426, 4
    %v3445 = vadd.f32 %v3426, %v3444
    %v3446 = vrot.slane %v3445, 2
    %v3447 = vadd.f32 %v3445, %v3446
    %v3448 = vrot.slane %v3447, 1
    %v3449 = vadd.f32 %v3447, %v3448
    %v3450 = vrot.slane %v3427, 4
    %v3451 = vadd.f32 %v3427, %v3450
    %v3452 = vrot.slane %v3451, 2
    %v3453 = vadd.f32 %v3451, %v3452
    %v3454 = vrot.slane %v3453, 1
    %v3455 = vadd.f32 %v3453, %v3454
    %v3456 = vrot.slane %v3428, 4
    %v3457 = vadd.f32 %v3428, %v3456
    %v3458 = vrot.slane %v3457, 2
    %v3459 = vadd.f32 %v3457, %v3458
    %v3460 = vrot.slane %v3459, 1
    %v3461 = vadd.f32 %v3459, %v3460
    %v3462 = vrot.slane %v3429, 4
    %v3463 = vadd.f32 %v3429, %v3462
    %v3464 = vrot.slane %v3463, 2
    %v3465 = vadd.f32 %v3463, %v3464
    %v3466 = vrot.slane %v3465, 1
    %v3467 = vadd.f32 %v3465, %v3466
    %v3468 = vrot.slane %v3430, 4
    %v3469 = vadd.f32 %v3430, %v3468
    %v3470 = vrot.slane %v3469, 2
    %v3471 = vadd.f32 %v3469, %v3470
    %v3472 = vrot.slane %v3471, 1
    %v3473 = vadd.f32 %v3471, %v3472
    %v3474 = vrot.slane %v3431, 4
    %v3475 = vadd.f32 %v3431, %v3474
    %v3476 = vrot.slane %v3475, 2
    %v3477 = vadd.f32 %v3475, %v3476
    %v3478 = vrot.slane %v3477, 1
    %v3479 = vadd.f32 %v3477, %v3478
    %v3480 = vmul.f32 %v3437, %v926
    %v3481 = vmul.f32 %v3443, %v926
    %v3482 = vmul.f32 %v3449, %v926
    %v3483 = vmul.f32 %v3455, %v926
    %v3484 = vmul.f32 %v3461, %v926
    %v3485 = vmul.f32 %v3467, %v926
    %v3486 = vmul.f32 %v3473, %v926
    %v3487 = vmul.f32 %v3479, %v926
    %v3496 = vrot.slane %v3481, 7
    %v3497 = vsel %vm757, %v3496, %v3480
    %v3498 = vrot.slane %v3482, 6
    %v3499 = vsel %vm759, %v3498, %v3497
    %v3500 = vrot.slane %v3483, 5
    %v3501 = vsel %vm761, %v3500, %v3499
    %v3502 = vrot.slane %v3484, 4
    %v3503 = vsel %vm763, %v3502, %v3501
    %v3504 = vrot.slane %v3485, 3
    %v3505 = vsel %vm765, %v3504, %v3503
    %v3506 = vrot.slane %v3486, 2
    %v3507 = vsel %vm767, %v3506, %v3505
    %v3508 = vrot.slane %v3487, 1
    %v3509 = vsel %vm769, %v3508, %v3507
    %3511 = vadd.xlane.f32.xlu0 %v3509
    %v3512 = vpop.xlane.xlu0 %3511
    %v3513 = vmul.f32 %v2888, %v961
    %v3514 = vadd.f32 %v3512, %v3513
    %v3515 = vadd.f32 %v3514, %v964
    %v3516 = vmul.f32 %v3515, %v970
    %v3517 = vmul.f32 %v3515, %v974
    %v3518 = vmul.f32 %v3515, %v978
    %v3519 = vmul.f32 %v3515, %v982
    %v3520 = vadd.f32 %v3516, %v2992
    %v3521 = vadd.f32 %v3517, %v2994
    %v3522 = vadd.f32 %v3518, %v3063
    %v3523 = vadd.f32 %v3519, %v3065
    %v3524 = vadd.f32 %v3520, %v999
    %v3525 = vadd.f32 %v3521, %v1003
    %v3526 = vadd.f32 %v3522, %v1007
    %v3527 = vadd.f32 %v3523, %v1011
    %v3528 = vxor.u32 %v3524, 2147483648
    %v3529 = vmul.f32 %v3528, 1.442695
    %v3530 = vpow.pop %v3529
    %v3531 = vadd.f32 %v3530, 1.0
    %v3532 = vrcp.pop %v3531
    %v3533 = vmul.f32 1.0, %v3532
    %v3534 = vxor.u32 %v3525, 2147483648
    %v3535 = vmul.f32 %v3534, 1.442695
    %v3536 = vpow.pop %v3535
    %v3537 = vadd.f32 %v3536, 1.0
    %v3538 = vrcp.pop %v3537
    %v3539 = vmul.f32 1.0, %v3538
    %v3540 = vtanh.pop %v3526
    %v3541 = vxor.u32 %v3527, 2147483648
    %v3542 = vmul.f32 %v3541, 1.442695
    %v3543 = vpow.pop %v3542
    %v3544 = vadd.f32 %v3543, 1.0
    %v3545 = vrcp.pop %v3544
    %v3546 = vmul.f32 1.0, %v3545
    %v3547 = vmul.f32 %v3539, %v2922
    %v3548 = vmul.f32 %v3533, %v3540
    %v3549 = vadd.f32 %v3547, %v3548
    %v3550 = vtanh.pop %v3549
    %v3551 = vmul.f32 %v3546, %v3550
    %3552 = vmatprep.subr.mxu0 %v256
    %3553 = vmatpush1.msra.mxu0 %v255
    %3554 = vmatprep.subr.mxu0 %v260
    %3555 = vmatpush1.msra.mxu0 %v259
    %3556 = vmatprep.subr.mxu0 %v264
    %3557 = vmatpush1.msra.mxu0 %v263
    %3558 = vmatprep.subr.mxu0 %v268
    %3559 = vmatpush1.msra.mxu0 %v267
    %3560 = vmatprep.subr.mxu0 %v272
    %3561 = vmatpush1.msra.mxu0 %v271
    %3562 = vmatprep.subr.mxu0 %v276
    %3563 = vmatpush1.msra.mxu0 %v275
    %3564 = vmatprep.subr.mxu0 %v280
    %3565 = vmatpush1.msra.mxu0 %v279
    %3566 = vmatprep.subr.mxu0 %v284
    %3567 = vmatpush1.msra.mxu0 %v283
    %3568 = vmatprep.subr.mxu0 %v288
    %3569 = vmatpush1.msra.mxu0 %v287
    %3570 = vmatprep.subr.mxu0 %v292
    %3571 = vmatpush1.msra.mxu0 %v291
    %3572 = vmatprep.subr.mxu0 %v296
    %3573 = vmatpush1.msra.mxu0 %v295
    %3574 = vmatprep.subr.mxu0 %v300
    %3575 = vmatpush1.msra.mxu0 %v299
    %3576 = vmatprep.subr.mxu0 %v304
    %3577 = vmatpush1.msra.mxu0 %v303
    %3578 = vmatprep.subr.mxu0 %v308
    %3579 = vmatpush1.msra.mxu0 %v307
    %3580 = vmatprep.subr.mxu0 %v312
    %3581 = vmatpush1.msra.mxu0 %v311
    %3582 = vmatprep.subr.mxu0 %v316
    %3583 = vmatpush1.msra.mxu0 %v315
    %3584 = vmatprep.subr.mxu0 0.0
    %3585 = vmatpush1.msra.mxu0 0.0
    %3586 = vmatprep.subr.mxu0 0.0
    %3587 = vmatpush1.msra.mxu0 0.0
    %3588 = vmatprep.subr.mxu0 0.0
    %3589 = vmatpush1.msra.mxu0 0.0
    %3590 = vmatprep.subr.mxu0 0.0
    %3591 = vmatpush1.msra.mxu0 0.0
    %3592 = vmatprep.subr.mxu0 0.0
    %3593 = vmatpush1.msra.mxu0 0.0
    %3594 = vmatprep.subr.mxu0 0.0
    %3595 = vmatpush1.msra.mxu0 0.0
    %3596 = vmatprep.subr.mxu0 0.0
    %3597 = vmatpush1.msra.mxu0 0.0
    %3598 = vmatprep.subr.mxu0 0.0
    %3599 = vmatpush1.msra.mxu0 0.0
    %3600 = vmatprep.subr.mxu0 0.0
    %3601 = vmatpush1.msra.mxu0 0.0
    %3602 = vmatprep.subr.mxu0 0.0
    %3603 = vmatpush1.msra.mxu0 0.0
    %3604 = vmatprep.subr.mxu0 0.0
    %3605 = vmatpush1.msra.mxu0 0.0
    %3606 = vmatprep.subr.mxu0 0.0
    %3607 = vmatpush1.msra.mxu0 0.0
    %3608 = vmatprep.subr.mxu0 0.0
    %3609 = vmatpush1.msra.mxu0 0.0
    %3610 = vmatprep.subr.mxu0 0.0
    %3611 = vmatpush1.msra.mxu0 0.0
    %3612 = vmatprep.subr.mxu0 0.0
    %3613 = vmatpush1.msra.mxu0 0.0
    %3614 = vmatprep.subr.mxu0 0.0
    %3615 = vmatpush1.msra.mxu0 0.0
    %3616 = vmatprep.mubr.f32.mxu0 0.0
    %3617 = vmatmul.mubr.f32.gmra.mrb[0].mxu0 %v3551
    %v3618 = vpop.f32.mrb[0].mxu0
    %v3619 = vadd.f32 0.0, %v3618
    %v3620 = vpop.f32.mrb[0].mxu0
    %v3621 = vadd.f32 0.0, %v3620
    %3622 = vdwg.mxu0
    %3623 = vmatprep.subr.mxu0 %v258
    %3624 = vmatpush1.msra.mxu0 %v257
    %3625 = vmatprep.subr.mxu0 %v262
    %3626 = vmatpush1.msra.mxu0 %v261
    %3627 = vmatprep.subr.mxu0 %v266
    %3628 = vmatpush1.msra.mxu0 %v265
    %3629 = vmatprep.subr.mxu0 %v270
    %3630 = vmatpush1.msra.mxu0 %v269
    %3631 = vmatprep.subr.mxu0 %v274
    %3632 = vmatpush1.msra.mxu0 %v273
    %3633 = vmatprep.subr.mxu0 %v278
    %3634 = vmatpush1.msra.mxu0 %v277
    %3635 = vmatprep.subr.mxu0 %v282
    %3636 = vmatpush1.msra.mxu0 %v281
    %3637 = vmatprep.subr.mxu0 %v286
    %3638 = vmatpush1.msra.mxu0 %v285
    %3639 = vmatprep.subr.mxu0 %v290
    %3640 = vmatpush1.msra.mxu0 %v289
    %3641 = vmatprep.subr.mxu0 %v294
    %3642 = vmatpush1.msra.mxu0 %v293
    %3643 = vmatprep.subr.mxu0 %v298
    %3644 = vmatpush1.msra.mxu0 %v297
    %3645 = vmatprep.subr.mxu0 %v302
    %3646 = vmatpush1.msra.mxu0 %v301
    %3647 = vmatprep.subr.mxu0 %v306
    %3648 = vmatpush1.msra.mxu0 %v305
    %3649 = vmatprep.subr.mxu0 %v310
    %3650 = vmatpush1.msra.mxu0 %v309
    %3651 = vmatprep.subr.mxu0 %v314
    %3652 = vmatpush1.msra.mxu0 %v313
    %3653 = vmatprep.subr.mxu0 %v318
    %3654 = vmatpush1.msra.mxu0 %v317
    %3655 = vmatprep.subr.mxu0 0.0
    %3656 = vmatpush1.msra.mxu0 0.0
    %3657 = vmatprep.subr.mxu0 0.0
    %3658 = vmatpush1.msra.mxu0 0.0
    %3659 = vmatprep.subr.mxu0 0.0
    %3660 = vmatpush1.msra.mxu0 0.0
    %3661 = vmatprep.subr.mxu0 0.0
    %3662 = vmatpush1.msra.mxu0 0.0
    %3663 = vmatprep.subr.mxu0 0.0
    %3664 = vmatpush1.msra.mxu0 0.0
    %3665 = vmatprep.subr.mxu0 0.0
    %3666 = vmatpush1.msra.mxu0 0.0
    %3667 = vmatprep.subr.mxu0 0.0
    %3668 = vmatpush1.msra.mxu0 0.0
    %3669 = vmatprep.subr.mxu0 0.0
    %3670 = vmatpush1.msra.mxu0 0.0
    %3671 = vmatprep.subr.mxu0 0.0
    %3672 = vmatpush1.msra.mxu0 0.0
    %3673 = vmatprep.subr.mxu0 0.0
    %3674 = vmatpush1.msra.mxu0 0.0
    %3675 = vmatprep.subr.mxu0 0.0
    %3676 = vmatpush1.msra.mxu0 0.0
    %3677 = vmatprep.subr.mxu0 0.0
    %3678 = vmatpush1.msra.mxu0 0.0
    %3679 = vmatprep.subr.mxu0 0.0
    %3680 = vmatpush1.msra.mxu0 0.0
    %3681 = vmatprep.subr.mxu0 0.0
    %3682 = vmatpush1.msra.mxu0 0.0
    %3683 = vmatprep.subr.mxu0 0.0
    %3684 = vmatpush1.msra.mxu0 0.0
    %3685 = vmatprep.subr.mxu0 0.0
    %3686 = vmatpush1.msra.mxu0 0.0
    %3687 = vmatprep.mubr.f32.mxu0 0.0
    %3688 = vmatmul.mubr.f32.gmra.mrb[0].mxu0 %v3551
    %v3689 = vpop.f32.mrb[0].mxu0
    %v3690 = vadd.f32 0.0, %v3689
    %v3691 = vpop.f32.mrb[0].mxu0
    %v3692 = vadd.f32 0.0, %v3691
    %3693 = vdwg.mxu0
    %3694 = vmatprep.subr.mxu0 0.0
    %3695 = vmatpush1.msra.mxu0 %v461
    %3696 = vmatprep.subr.mxu0 0.0
    %3697 = vmatpush1.msra.mxu0 %v462
    %3698 = vmatprep.subr.mxu0 0.0
    %3699 = vmatpush1.msra.mxu0 %v463
    %3700 = vmatprep.subr.mxu0 0.0
    %3701 = vmatpush1.msra.mxu0 %v464
    %3702 = vmatprep.subr.mxu0 0.0
    %3703 = vmatpush1.msra.mxu0 %v465
    %3704 = vmatprep.subr.mxu0 0.0
    %3705 = vmatpush1.msra.mxu0 %v466
    %3706 = vmatprep.subr.mxu0 0.0
    %3707 = vmatpush1.msra.mxu0 %v467
    %3708 = vmatprep.subr.mxu0 0.0
    %3709 = vmatpush1.msra.mxu0 %v468
    %3710 = vmatprep.subr.mxu0 0.0
    %3711 = vmatpush1.msra.mxu0 %v469
    %3712 = vmatprep.subr.mxu0 0.0
    %3713 = vmatpush1.msra.mxu0 %v470
    %3714 = vmatprep.subr.mxu0 0.0
    %3715 = vmatpush1.msra.mxu0 %v471
    %3716 = vmatprep.subr.mxu0 0.0
    %3717 = vmatpush1.msra.mxu0 %v472
    %3718 = vmatprep.subr.mxu0 0.0
    %3719 = vmatpush1.msra.mxu0 %v473
    %3720 = vmatprep.subr.mxu0 0.0
    %3721 = vmatpush1.msra.mxu0 %v474
    %3722 = vmatprep.subr.mxu0 0.0
    %3723 = vmatpush1.msra.mxu0 %v475
    %3724 = vmatprep.subr.mxu0 0.0
    %3725 = vmatpush1.msra.mxu0 %v476
    %3726 = vmatprep.subr.mxu0 0.0
    %3727 = vmatpush1.msra.mxu0 %v477
    %3728 = vmatprep.subr.mxu0 0.0
    %3729 = vmatpush1.msra.mxu0 %v478
    %3730 = vmatprep.subr.mxu0 0.0
    %3731 = vmatpush1.msra.mxu0 %v479
    %3732 = vmatprep.subr.mxu0 0.0
    %3733 = vmatpush1.msra.mxu0 %v480
    %3734 = vmatprep.subr.mxu0 0.0
    %3735 = vmatpush1.msra.mxu0 %v481
    %3736 = vmatprep.subr.mxu0 0.0
    %3737 = vmatpush1.msra.mxu0 %v482
    %3738 = vmatprep.subr.mxu0 0.0
    %3739 = vmatpush1.msra.mxu0 %v483
    %3740 = vmatprep.subr.mxu0 0.0
    %3741 = vmatpush1.msra.mxu0 %v484
    %3742 = vmatprep.subr.mxu0 0.0
    %3743 = vmatpush1.msra.mxu0 %v485
    %3744 = vmatprep.subr.mxu0 0.0
    %3745 = vmatpush1.msra.mxu0 %v486
    %3746 = vmatprep.subr.mxu0 0.0
    %3747 = vmatpush1.msra.mxu0 %v487
    %3748 = vmatprep.subr.mxu0 0.0
    %3749 = vmatpush1.msra.mxu0 %v488
    %3750 = vmatprep.subr.mxu0 0.0
    %3751 = vmatpush1.msra.mxu0 %v489
    %3752 = vmatprep.subr.mxu0 0.0
    %3753 = vmatpush1.msra.mxu0 %v490
    %3754 = vmatprep.subr.mxu0 0.0
    %3755 = vmatpush1.msra.mxu0 %v491
    %3756 = vmatprep.subr.mxu0 0.0
    %3757 = vmatpush1.msra.mxu0 %v492
    %3758 = vmatprep.mubr.f32.mxu0 %v3549
    %3759 = vmatmul.mubr.f32.gmra.mrb[0].mxu0 %v3551
    %v3760 = vpop.f32.mrb[0].mxu0
    %v3761 = vadd.f32 0.0, %v3760
    %v3762 = vpop.f32.mrb[0].mxu0
    %3763 = vdwg.mxu0
    %v3765 = vcombine.high %v3761, %v3761
    %v3767 = vunpack.c.l.s4 1966171168
    %v3768 = vunpack.c.0.s8 %v3767
    %v3769 = vlaneseq
    %v3770 = vshrl.u32 %v3769, 7
    %v3771 = vsub.s32 %v3768, %v3770
    %v3772 = vrot.slane %v3761, %v3771
    %v3774 = vunpack.c.l.s4 1966171168
    %v3775 = vunpack.c.0.s8 %v3774
    %v3776 = vlaneseq
    %v3777 = vshrl.u32 %v3776, 7
    %v3778 = vsub.s32 %v3775, %v3777
    %v3779 = vrot.slane %v3765, %v3778
    %v3780 = vcombine.high %v3772, %v3772
    %v3781 = vcombine.high %v3779, %v3779
    %v3783 = vunpack.c.l.s4 1966171168
    %v3784 = vunpack.c.0.s8 %v3783
    %v3785 = vlaneseq
    %v3786 = vshrl.u32 %v3785, 7
    %v3787 = vsub.s32 %v3784, %v3786
    %v3788 = vrot.slane %v3772, %v3787
    %v3790 = vunpack.c.l.s4 1966171168
    %v3791 = vunpack.c.0.s8 %v3790
    %v3792 = vlaneseq
    %v3793 = vshrl.u32 %v3792, 7
    %v3794 = vsub.s32 %v3791, %v3793
    %v3795 = vrot.slane %v3779, %v3794
    %v3797 = vunpack.c.l.s4 1966171168
    %v3798 = vunpack.c.0.s8 %v3797
    %v3799 = vlaneseq
    %v3800 = vshrl.u32 %v3799, 7
    %v3801 = vsub.s32 %v3798, %v3800
    %v3802 = vrot.slane %v3780, %v3801
    %v3804 = vunpack.c.l.s4 1966171168
    %v3805 = vunpack.c.0.s8 %v3804
    %v3806 = vlaneseq
    %v3807 = vshrl.u32 %v3806, 7
    %v3808 = vsub.s32 %v3805, %v3807
    %v3809 = vrot.slane %v3781, %v3808
    %v3810 = vcombine.high %v3788, %v3788
    %v3811 = vcombine.high %v3795, %v3795
    %v3812 = vcombine.high %v3802, %v3802
    %v3813 = vcombine.high %v3809, %v3809
    %v3814 = vlaneseq
    %v3815 = vshrl.u32 %v3814, 7
    %v3816 = vsub.s32 0, %v3815
    %v3817 = vrot.slane %v3788, %v3816
    %v3818 = vlaneseq
    %v3819 = vshrl.u32 %v3818, 7
    %v3820 = vsub.s32 0, %v3819
    %v3821 = vrot.slane %v3802, %v3820
    %v3822 = vlaneseq
    %v3823 = vshrl.u32 %v3822, 7
    %v3824 = vsub.s32 0, %v3823
    %v3825 = vrot.slane %v3810, %v3824
    %v3826 = vlaneseq
    %v3827 = vshrl.u32 %v3826, 7
    %v3828 = vsub.s32 0, %v3827
    %v3829 = vrot.slane %v3812, %v3828
    %v3830 = vlaneseq
    %v3831 = vshrl.u32 %v3830, 7
    %v3832 = vsub.s32 0, %v3831
    %v3833 = vrot.slane %v3795, %v3832
    %v3834 = vlaneseq
    %v3835 = vshrl.u32 %v3834, 7
    %v3836 = vsub.s32 0, %v3835
    %v3837 = vrot.slane %v3809, %v3836
    %v3838 = vlaneseq
    %v3839 = vshrl.u32 %v3838, 7
    %v3840 = vsub.s32 0, %v3839
    %v3841 = vrot.slane %v3811, %v3840
    %v3842 = vlaneseq
    %v3843 = vshrl.u32 %v3842, 7
    %v3844 = vsub.s32 0, %v3843
    %v3845 = vrot.slane %v3813, %v3844
    %v3854 = vadd.f32 %v3817, %v247
    %v3855 = vadd.f32 %v3821, %v248
    %v3856 = vadd.f32 %v3825, %v249
    %v3857 = vadd.f32 %v3829, %v250
    %v3858 = vadd.f32 %v3833, %v251
    %v3859 = vadd.f32 %v3837, %v252
    %v3860 = vadd.f32 %v3841, %v253
    %v3861 = vadd.f32 %v3845, %v254
    %v3862 = vtanh.pop %v3854
    %v3863 = vtanh.pop %v3855
    %v3864 = vtanh.pop %v3856
    %v3865 = vtanh.pop %v3857
    %v3866 = vtanh.pop %v3858
    %v3867 = vtanh.pop %v3859
    %v3868 = vtanh.pop %v3860
    %v3869 = vtanh.pop %v3861
    %v3870 = vmul.f32 %v3862, %v673
    %v3871 = vmul.f32 %v3863, %v673
    %v3872 = vmul.f32 %v3864, %v673
    %v3873 = vmul.f32 %v3865, %v673
    %v3874 = vmul.f32 %v3866, %v673
    %v3875 = vmul.f32 %v3867, %v673
    %v3876 = vmul.f32 %v3868, %v673
    %v3877 = vmul.f32 %v3869, %v673
    %3878 = vadd.xlane.f32.xlu0 %v3870
    %v3879 = vpop.xlane.xlu0 %3878
    %3880 = vadd.xlane.f32.xlu0 %v3871
    %v3881 = vpop.xlane.xlu0 %3880
    %3882 = vadd.xlane.f32.xlu0 %v3872
    %v3883 = vpop.xlane.xlu0 %3882
    %3884 = vadd.xlane.f32.xlu0 %v3873
    %v3885 = vpop.xlane.xlu0 %3884
    %3886 = vadd.xlane.f32.xlu0 %v3874
    %v3887 = vpop.xlane.xlu0 %3886
    %3888 = vadd.xlane.f32.xlu0 %v3875
    %v3889 = vpop.xlane.xlu0 %3888
    %3890 = vadd.xlane.f32.xlu0 %v3876
    %v3891 = vpop.xlane.xlu0 %3890
    %3892 = vadd.xlane.f32.xlu0 %v3877
    %v3893 = vpop.xlane.xlu0 %3892
    %v3894 = vmul.f32 %v3879, 1.442695
    %v3895 = vpow.pop %v3894
    %v3896 = vmul.f32 %v3881, 1.442695
    %v3897 = vpow.pop %v3896
    %v3898 = vmul.f32 %v3883, 1.442695
    %v3899 = vpow.pop %v3898
    %v3900 = vmul.f32 %v3885, 1.442695
    %v3901 = vpow.pop %v3900
    %v3902 = vmul.f32 %v3887, 1.442695
    %v3903 = vpow.pop %v3902
    %v3904 = vmul.f32 %v3889, 1.442695
    %v3905 = vpow.pop %v3904
    %v3906 = vmul.f32 %v3891, 1.442695
    %v3907 = vpow.pop %v3906
    %v3908 = vmul.f32 %v3893, 1.442695
    %v3909 = vpow.pop %v3908
    %v3918 = vlaneseq
    %v3919 = vshrl.u32 %v3918, 7
    %v3920 = vsub.s32 %v724, %v3919
    %v3921 = vrot.slane %v3895, %v3920
    %v3922 = vlaneseq
    %v3923 = vshrl.u32 %v3922, 7
    %v3924 = vsub.s32 %v724, %v3923
    %v3925 = vrot.slane %v3897, %v3924
    %v3926 = vlaneseq
    %v3927 = vshrl.u32 %v3926, 7
    %v3928 = vsub.s32 %v724, %v3927
    %v3929 = vrot.slane %v3899, %v3928
    %v3930 = vlaneseq
    %v3931 = vshrl.u32 %v3930, 7
    %v3932 = vsub.s32 %v724, %v3931
    %v3933 = vrot.slane %v3901, %v3932
    %v3934 = vlaneseq
    %v3935 = vshrl.u32 %v3934, 7
    %v3936 = vsub.s32 %v724, %v3935
    %v3937 = vrot.slane %v3903, %v3936
    %v3938 = vlaneseq
    %v3939 = vshrl.u32 %v3938, 7
    %v3940 = vsub.s32 %v724, %v3939
    %v3941 = vrot.slane %v3905, %v3940
    %v3942 = vlaneseq
    %v3943 = vshrl.u32 %v3942, 7
    %v3944 = vsub.s32 %v724, %v3943
    %v3945 = vrot.slane %v3907, %v3944
    %v3946 = vlaneseq
    %v3947 = vshrl.u32 %v3946, 7
    %v3948 = vsub.s32 %v724, %v3947
    %v3949 = vrot.slane %v3909, %v3948
    %v3950 = vsel %vm757, %v3925, %v3921
    %v3951 = vsel %vm759, %v3929, %v3950
    %v3952 = vsel %vm761, %v3933, %v3951
    %v3953 = vsel %vm763, %v3937, %v3952
    %v3954 = vsel %vm765, %v3941, %v3953
    %v3955 = vsel %vm767, %v3945, %v3954
    %v3956 = vsel %vm769, %v3949, %v3955
    %v3958 = vsel %vm772, %v3956, 0.0
    %3959 = vadd.xlane.f32.xlu0 %v3958
    %v3960 = vpop.xlane.xlu0 %3959
    %v3961 = vrcp.pop %v3960
    %v3963 = vlaneseq
    %v3964 = vshrl.u32 %v3963, 7
    %v3965 = vsub.s32 0, %v3964
    %v3966 = vrot.slane %v3961, %v3965
    %v3967 = vlaneseq
    %v3968 = vshrl.u32 %v3967, 7
    %v3969 = vsub.s32 1, %v3968
    %v3970 = vrot.slane %v3961, %v3969
    %v3971 = vlaneseq
    %v3972 = vshrl.u32 %v3971, 7
    %v3973 = vsub.s32 2, %v3972
    %v3974 = vrot.slane %v3961, %v3973
    %v3975 = vlaneseq
    %v3976 = vshrl.u32 %v3975, 7
    %v3977 = vsub.s32 3, %v3976
    %v3978 = vrot.slane %v3961, %v3977
    %v3979 = vlaneseq
    %v3980 = vshrl.u32 %v3979, 7
    %v3981 = vsub.s32 4, %v3980
    %v3982 = vrot.slane %v3961, %v3981
    %v3983 = vlaneseq
    %v3984 = vshrl.u32 %v3983, 7
    %v3985 = vsub.s32 5, %v3984
    %v3986 = vrot.slane %v3961, %v3985
    %v3987 = vlaneseq
    %v3988 = vshrl.u32 %v3987, 7
    %v3989 = vsub.s32 6, %v3988
    %v3990 = vrot.slane %v3961, %v3989
    %v3991 = vlaneseq
    %v3992 = vshrl.u32 %v3991, 7
    %v3993 = vsub.s32 7, %v3992
    %v3994 = vrot.slane %v3961, %v3993
    %v4003 = vmul.f32 %v3895, %v3966
    %v4004 = vmul.f32 %v3897, %v3970
    %v4005 = vmul.f32 %v3899, %v3974
    %v4006 = vmul.f32 %v3901, %v3978
    %v4007 = vmul.f32 %v3903, %v3982
    %v4008 = vmul.f32 %v3905, %v3986
    %v4009 = vmul.f32 %v3907, %v3990
    %v4010 = vmul.f32 %v3909, %v3994
    %4012 = vset.pattern.permute.xlu0 0
    %4013 = vperm.xlu0 %4012, %v4003
    %v4014 = vpop.permute.xlu0 %4013
    %4017 = vset.pattern.permute.xlu0 0
    %4018 = vperm.xlu0 %4017, %v4004
    %v4019 = vpop.permute.xlu0 %4018
    %4022 = vset.pattern.permute.xlu0 0
    %4023 = vperm.xlu0 %4022, %v4005
    %v4024 = vpop.permute.xlu0 %4023
    %4027 = vset.pattern.permute.xlu0 0
    %4028 = vperm.xlu0 %4027, %v4006
    %v4029 = vpop.permute.xlu0 %4028
    %4032 = vset.pattern.permute.xlu0 0
    %4033 = vperm.xlu0 %4032, %v4007
    %v4034 = vpop.permute.xlu0 %4033
    %4037 = vset.pattern.permute.xlu0 0
    %4038 = vperm.xlu0 %4037, %v4008
    %v4039 = vpop.permute.xlu0 %4038
    %4042 = vset.pattern.permute.xlu0 0
    %4043 = vperm.xlu0 %4042, %v4009
    %v4044 = vpop.permute.xlu0 %4043
    %4047 = vset.pattern.permute.xlu0 0
    %4048 = vperm.xlu0 %4047, %v4010
    %v4049 = vpop.permute.xlu0 %4048
    %v4051 = vmul.f32 %v4014, %v105
    %v4052 = vmul.f32 %v4019, %v106
    %v4053 = vmul.f32 %v4024, %v107
    %v4054 = vmul.f32 %v4029, %v108
    %v4055 = vmul.f32 %v4034, %v109
    %v4056 = vmul.f32 %v4039, %v110
    %v4057 = vmul.f32 %v4044, %v111
    %v4058 = vmul.f32 %v4049, %v112
    %v4059 = vrot.slane %v4051, 4
    %v4060 = vadd.f32 %v4051, %v4059
    %v4061 = vrot.slane %v4060, 2
    %v4062 = vadd.f32 %v4060, %v4061
    %v4063 = vrot.slane %v4062, 1
    %v4064 = vadd.f32 %v4062, %v4063
    %v4065 = vrot.slane %v4052, 4
    %v4066 = vadd.f32 %v4052, %v4065
    %v4067 = vrot.slane %v4066, 2
    %v4068 = vadd.f32 %v4066, %v4067
    %v4069 = vrot.slane %v4068, 1
    %v4070 = vadd.f32 %v4068, %v4069
    %v4071 = vrot.slane %v4053, 4
    %v4072 = vadd.f32 %v4053, %v4071
    %v4073 = vrot.slane %v4072, 2
    %v4074 = vadd.f32 %v4072, %v4073
    %v4075 = vrot.slane %v4074, 1
    %v4076 = vadd.f32 %v4074, %v4075
    %v4077 = vrot.slane %v4054, 4
    %v4078 = vadd.f32 %v4054, %v4077
    %v4079 = vrot.slane %v4078, 2
    %v4080 = vadd.f32 %v4078, %v4079
    %v4081 = vrot.slane %v4080, 1
    %v4082 = vadd.f32 %v4080, %v4081
    %v4083 = vrot.slane %v4055, 4
    %v4084 = vadd.f32 %v4055, %v4083
    %v4085 = vrot.slane %v4084, 2
    %v4086 = vadd.f32 %v4084, %v4085
    %v4087 = vrot.slane %v4086, 1
    %v4088 = vadd.f32 %v4086, %v4087
    %v4089 = vrot.slane %v4056, 4
    %v4090 = vadd.f32 %v4056, %v4089
    %v4091 = vrot.slane %v4090, 2
    %v4092 = vadd.f32 %v4090, %v4091
    %v4093 = vrot.slane %v4092, 1
    %v4094 = vadd.f32 %v4092, %v4093
    %v4095 = vrot.slane %v4057, 4
    %v4096 = vadd.f32 %v4057, %v4095
    %v4097 = vrot.slane %v4096, 2
    %v4098 = vadd.f32 %v4096, %v4097
    %v4099 = vrot.slane %v4098, 1
    %v4100 = vadd.f32 %v4098, %v4099
    %v4101 = vrot.slane %v4058, 4
    %v4102 = vadd.f32 %v4058, %v4101
    %v4103 = vrot.slane %v4102, 2
    %v4104 = vadd.f32 %v4102, %v4103
    %v4105 = vrot.slane %v4104, 1
    %v4106 = vadd.f32 %v4104, %v4105
    %v4107 = vmul.f32 %v4064, %v926
    %v4108 = vmul.f32 %v4070, %v926
    %v4109 = vmul.f32 %v4076, %v926
    %v4110 = vmul.f32 %v4082, %v926
    %v4111 = vmul.f32 %v4088, %v926
    %v4112 = vmul.f32 %v4094, %v926
    %v4113 = vmul.f32 %v4100, %v926
    %v4114 = vmul.f32 %v4106, %v926
    %v4123 = vrot.slane %v4108, 7
    %v4124 = vsel %vm757, %v4123, %v4107
    %v4125 = vrot.slane %v4109, 6
    %v4126 = vsel %vm759, %v4125, %v4124
    %v4127 = vrot.slane %v4110, 5
    %v4128 = vsel %vm761, %v4127, %v4126
    %v4129 = vrot.slane %v4111, 4
    %v4130 = vsel %vm763, %v4129, %v4128
    %v4131 = vrot.slane %v4112, 3
    %v4132 = vsel %vm765, %v4131, %v4130
    %v4133 = vrot.slane %v4113, 2
    %v4134 = vsel %vm767, %v4133, %v4132
    %v4135 = vrot.slane %v4114, 1
    %v4136 = vsel %vm769, %v4135, %v4134
    %4138 = vadd.xlane.f32.xlu0 %v4136
    %v4139 = vpop.xlane.xlu0 %4138
    %v4140 = vmul.f32 %v3515, %v961
    %v4141 = vadd.f32 %v4139, %v4140
    %v4142 = vadd.f32 %v4141, %v964
    %v4143 = vmul.f32 %v4142, %v970
    %v4144 = vmul.f32 %v4142, %v974
    %v4145 = vmul.f32 %v4142, %v978
    %v4146 = vmul.f32 %v4142, %v982
    %v4147 = vadd.f32 %v4143, %v3619
    %v4148 = vadd.f32 %v4144, %v3621
    %v4149 = vadd.f32 %v4145, %v3690
    %v4150 = vadd.f32 %v4146, %v3692
    %v4151 = vadd.f32 %v4147, %v999
    %v4152 = vadd.f32 %v4148, %v1003
    %v4153 = vadd.f32 %v4149, %v1007
    %v4154 = vadd.f32 %v4150, %v1011
    %v4155 = vxor.u32 %v4151, 2147483648
    %v4156 = vmul.f32 %v4155, 1.442695
    %v4157 = vpow.pop %v4156
    %v4158 = vadd.f32 %v4157, 1.0
    %v4159 = vrcp.pop %v4158
    %v4160 = vmul.f32 1.0, %v4159
    %v4161 = vxor.u32 %v4152, 2147483648
    %v4162 = vmul.f32 %v4161, 1.442695
    %v4163 = vpow.pop %v4162
    %v4164 = vadd.f32 %v4163, 1.0
    %v4165 = vrcp.pop %v4164
    %v4166 = vmul.f32 1.0, %v4165
    %v4167 = vtanh.pop %v4153
    %v4168 = vxor.u32 %v4154, 2147483648
    %v4169 = vmul.f32 %v4168, 1.442695
    %v4170 = vpow.pop %v4169
    %v4171 = vadd.f32 %v4170, 1.0
    %v4172 = vrcp.pop %v4171
    %v4173 = vmul.f32 1.0, %v4172
    %v4174 = vmul.f32 %v4166, %v3549
    %v4175 = vmul.f32 %v4160, %v4167
    %v4176 = vadd.f32 %v4174, %v4175
    %v4177 = vtanh.pop %v4176
    %v4178 = vmul.f32 %v4173, %v4177
    %4179 = vmatprep.subr.mxu0 %v256
    %4180 = vmatpush1.msra.mxu0 %v255
    %4181 = vmatprep.subr.mxu0 %v260
    %4182 = vmatpush1.msra.mxu0 %v259
    %4183 = vmatprep.subr.mxu0 %v264
    %4184 = vmatpush1.msra.mxu0 %v263
    %4185 = vmatprep.subr.mxu0 %v268
    %4186 = vmatpush1.msra.mxu0 %v267
    %4187 = vmatprep.subr.mxu0 %v272
    %4188 = vmatpush1.msra.mxu0 %v271
    %4189 = vmatprep.subr.mxu0 %v276
    %4190 = vmatpush1.msra.mxu0 %v275
    %4191 = vmatprep.subr.mxu0 %v280
    %4192 = vmatpush1.msra.mxu0 %v279
    %4193 = vmatprep.subr.mxu0 %v284
    %4194 = vmatpush1.msra.mxu0 %v283
    %4195 = vmatprep.subr.mxu0 %v288
    %4196 = vmatpush1.msra.mxu0 %v287
    %4197 = vmatprep.subr.mxu0 %v292
    %4198 = vmatpush1.msra.mxu0 %v291
    %4199 = vmatprep.subr.mxu0 %v296
    %4200 = vmatpush1.msra.mxu0 %v295
    %4201 = vmatprep.subr.mxu0 %v300
    %4202 = vmatpush1.msra.mxu0 %v299
    %4203 = vmatprep.subr.mxu0 %v304
    %4204 = vmatpush1.msra.mxu0 %v303
    %4205 = vmatprep.subr.mxu0 %v308
    %4206 = vmatpush1.msra.mxu0 %v307
    %4207 = vmatprep.subr.mxu0 %v312
    %4208 = vmatpush1.msra.mxu0 %v311
    %4209 = vmatprep.subr.mxu0 %v316
    %4210 = vmatpush1.msra.mxu0 %v315
    %4211 = vmatprep.subr.mxu0 0.0
    %4212 = vmatpush1.msra.mxu0 0.0
    %4213 = vmatprep.subr.mxu0 0.0
    %4214 = vmatpush1.msra.mxu0 0.0
    %4215 = vmatprep.subr.mxu0 0.0
    %4216 = vmatpush1.msra.mxu0 0.0
    %4217 = vmatprep.subr.mxu0 0.0
    %4218 = vmatpush1.msra.mxu0 0.0
    %4219 = vmatprep.subr.mxu0 0.0
    %4220 = vmatpush1.msra.mxu0 0.0
    %4221 = vmatprep.subr.mxu0 0.0
    %4222 = vmatpush1.msra.mxu0 0.0
    %4223 = vmatprep.subr.mxu0 0.0
    %4224 = vmatpush1.msra.mxu0 0.0
    %4225 = vmatprep.subr.mxu0 0.0
    %4226 = vmatpush1.msra.mxu0 0.0
    %4227 = vmatprep.subr.mxu0 0.0
    %4228 = vmatpush1.msra.mxu0 0.0
    %4229 = vmatprep.subr.mxu0 0.0
    %4230 = vmatpush1.msra.mxu0 0.0
    %4231 = vmatprep.subr.mxu0 0.0
    %4232 = vmatpush1.msra.mxu0 0.0
    %4233 = vmatprep.subr.mxu0 0.0
    %4234 = vmatpush1.msra.mxu0 0.0
    %4235 = vmatprep.subr.mxu0 0.0
    %4236 = vmatpush1.msra.mxu0 0.0
    %4237 = vmatprep.subr.mxu0 0.0
    %4238 = vmatpush1.msra.mxu0 0.0
    %4239 = vmatprep.subr.mxu0 0.0
    %4240 = vmatpush1.msra.mxu0 0.0
    %4241 = vmatprep.subr.mxu0 0.0
    %4242 = vmatpush1.msra.mxu0 0.0
    %4243 = vmatprep.mubr.f32.mxu0 0.0
    %4244 = vmatmul.mubr.f32.gmra.mrb[0].mxu0 %v4178
    %v4245 = vpop.f32.mrb[0].mxu0
    %v4246 = vadd.f32 0.0, %v4245
    %v4247 = vpop.f32.mrb[0].mxu0
    %v4248 = vadd.f32 0.0, %v4247
    %4249 = vdwg.mxu0
    %4250 = vmatprep.subr.mxu0 %v258
    %4251 = vmatpush1.msra.mxu0 %v257
    %4252 = vmatprep.subr.mxu0 %v262
    %4253 = vmatpush1.msra.mxu0 %v261
    %4254 = vmatprep.subr.mxu0 %v266
    %4255 = vmatpush1.msra.mxu0 %v265
    %4256 = vmatprep.subr.mxu0 %v270
    %4257 = vmatpush1.msra.mxu0 %v269
    %4258 = vmatprep.subr.mxu0 %v274
    %4259 = vmatpush1.msra.mxu0 %v273
    %4260 = vmatprep.subr.mxu0 %v278
    %4261 = vmatpush1.msra.mxu0 %v277
    %4262 = vmatprep.subr.mxu0 %v282
    %4263 = vmatpush1.msra.mxu0 %v281
    %4264 = vmatprep.subr.mxu0 %v286
    %4265 = vmatpush1.msra.mxu0 %v285
    %4266 = vmatprep.subr.mxu0 %v290
    %4267 = vmatpush1.msra.mxu0 %v289
    %4268 = vmatprep.subr.mxu0 %v294
    %4269 = vmatpush1.msra.mxu0 %v293
    %4270 = vmatprep.subr.mxu0 %v298
    %4271 = vmatpush1.msra.mxu0 %v297
    %4272 = vmatprep.subr.mxu0 %v302
    %4273 = vmatpush1.msra.mxu0 %v301
    %4274 = vmatprep.subr.mxu0 %v306
    %4275 = vmatpush1.msra.mxu0 %v305
    %4276 = vmatprep.subr.mxu0 %v310
    %4277 = vmatpush1.msra.mxu0 %v309
    %4278 = vmatprep.subr.mxu0 %v314
    %4279 = vmatpush1.msra.mxu0 %v313
    %4280 = vmatprep.subr.mxu0 %v318
    %4281 = vmatpush1.msra.mxu0 %v317
    %4282 = vmatprep.subr.mxu0 0.0
    %4283 = vmatpush1.msra.mxu0 0.0
    %4284 = vmatprep.subr.mxu0 0.0
    %4285 = vmatpush1.msra.mxu0 0.0
    %4286 = vmatprep.subr.mxu0 0.0
    %4287 = vmatpush1.msra.mxu0 0.0
    %4288 = vmatprep.subr.mxu0 0.0
    %4289 = vmatpush1.msra.mxu0 0.0
    %4290 = vmatprep.subr.mxu0 0.0
    %4291 = vmatpush1.msra.mxu0 0.0
    %4292 = vmatprep.subr.mxu0 0.0
    %4293 = vmatpush1.msra.mxu0 0.0
    %4294 = vmatprep.subr.mxu0 0.0
    %4295 = vmatpush1.msra.mxu0 0.0
    %4296 = vmatprep.subr.mxu0 0.0
    %4297 = vmatpush1.msra.mxu0 0.0
    %4298 = vmatprep.subr.mxu0 0.0
    %4299 = vmatpush1.msra.mxu0 0.0
    %4300 = vmatprep.subr.mxu0 0.0
    %4301 = vmatpush1.msra.mxu0 0.0
    %4302 = vmatprep.subr.mxu0 0.0
    %4303 = vmatpush1.msra.mxu0 0.0
    %4304 = vmatprep.subr.mxu0 0.0
    %4305 = vmatpush1.msra.mxu0 0.0
    %4306 = vmatprep.subr.mxu0 0.0
    %4307 = vmatpush1.msra.mxu0 0.0
    %4308 = vmatprep.subr.mxu0 0.0
    %4309 = vmatpush1.msra.mxu0 0.0
    %4310 = vmatprep.subr.mxu0 0.0
    %4311 = vmatpush1.msra.mxu0 0.0
    %4312 = vmatprep.subr.mxu0 0.0
    %4313 = vmatpush1.msra.mxu0 0.0
    %4314 = vmatprep.mubr.f32.mxu0 0.0
    %4315 = vmatmul.mubr.f32.gmra.mrb[0].mxu0 %v4178
    %v4316 = vpop.f32.mrb[0].mxu0
    %v4317 = vadd.f32 0.0, %v4316
    %v4318 = vpop.f32.mrb[0].mxu0
    %v4319 = vadd.f32 0.0, %v4318
    %4320 = vdwg.mxu0
    %4321 = vmatprep.subr.mxu0 0.0
    %4322 = vmatpush1.msra.mxu0 %v461
    %4323 = vmatprep.subr.mxu0 0.0
    %4324 = vmatpush1.msra.mxu0 %v462
    %4325 = vmatprep.subr.mxu0 0.0
    %4326 = vmatpush1.msra.mxu0 %v463
    %4327 = vmatprep.subr.mxu0 0.0
    %4328 = vmatpush1.msra.mxu0 %v464
    %4329 = vmatprep.subr.mxu0 0.0
    %4330 = vmatpush1.msra.mxu0 %v465
    %4331 = vmatprep.subr.mxu0 0.0
    %4332 = vmatpush1.msra.mxu0 %v466
    %4333 = vmatprep.subr.mxu0 0.0
    %4334 = vmatpush1.msra.mxu0 %v467
    %4335 = vmatprep.subr.mxu0 0.0
    %4336 = vmatpush1.msra.mxu0 %v468
    %4337 = vmatprep.subr.mxu0 0.0
    %4338 = vmatpush1.msra.mxu0 %v469
    %4339 = vmatprep.subr.mxu0 0.0
    %4340 = vmatpush1.msra.mxu0 %v470
    %4341 = vmatprep.subr.mxu0 0.0
    %4342 = vmatpush1.msra.mxu0 %v471
    %4343 = vmatprep.subr.mxu0 0.0
    %4344 = vmatpush1.msra.mxu0 %v472
    %4345 = vmatprep.subr.mxu0 0.0
    %4346 = vmatpush1.msra.mxu0 %v473
    %4347 = vmatprep.subr.mxu0 0.0
    %4348 = vmatpush1.msra.mxu0 %v474
    %4349 = vmatprep.subr.mxu0 0.0
    %4350 = vmatpush1.msra.mxu0 %v475
    %4351 = vmatprep.subr.mxu0 0.0
    %4352 = vmatpush1.msra.mxu0 %v476
    %4353 = vmatprep.subr.mxu0 0.0
    %4354 = vmatpush1.msra.mxu0 %v477
    %4355 = vmatprep.subr.mxu0 0.0
    %4356 = vmatpush1.msra.mxu0 %v478
    %4357 = vmatprep.subr.mxu0 0.0
    %4358 = vmatpush1.msra.mxu0 %v479
    %4359 = vmatprep.subr.mxu0 0.0
    %4360 = vmatpush1.msra.mxu0 %v480
    %4361 = vmatprep.subr.mxu0 0.0
    %4362 = vmatpush1.msra.mxu0 %v481
    %4363 = vmatprep.subr.mxu0 0.0
    %4364 = vmatpush1.msra.mxu0 %v482
    %4365 = vmatprep.subr.mxu0 0.0
    %4366 = vmatpush1.msra.mxu0 %v483
    %4367 = vmatprep.subr.mxu0 0.0
    %4368 = vmatpush1.msra.mxu0 %v484
    %4369 = vmatprep.subr.mxu0 0.0
    %4370 = vmatpush1.msra.mxu0 %v485
    %4371 = vmatprep.subr.mxu0 0.0
    %4372 = vmatpush1.msra.mxu0 %v486
    %4373 = vmatprep.subr.mxu0 0.0
    %4374 = vmatpush1.msra.mxu0 %v487
    %4375 = vmatprep.subr.mxu0 0.0
    %4376 = vmatpush1.msra.mxu0 %v488
    %4377 = vmatprep.subr.mxu0 0.0
    %4378 = vmatpush1.msra.mxu0 %v489
    %4379 = vmatprep.subr.mxu0 0.0
    %4380 = vmatpush1.msra.mxu0 %v490
    %4381 = vmatprep.subr.mxu0 0.0
    %4382 = vmatpush1.msra.mxu0 %v491
    %4383 = vmatprep.subr.mxu0 0.0
    %4384 = vmatpush1.msra.mxu0 %v492
    %4385 = vmatprep.mubr.f32.mxu0 %v4176
    %4386 = vmatmul.mubr.f32.gmra.mrb[0].mxu0 %v4178
    %v4387 = vpop.f32.mrb[0].mxu0
    %v4388 = vadd.f32 0.0, %v4387
    %v4389 = vpop.f32.mrb[0].mxu0
    %4390 = vdwg.mxu0
    %v4392 = vcombine.high %v4388, %v4388
    %v4394 = vunpack.c.l.s4 1966171168
    %v4395 = vunpack.c.0.s8 %v4394
    %v4396 = vlaneseq
    %v4397 = vshrl.u32 %v4396, 7
    %v4398 = vsub.s32 %v4395, %v4397
    %v4399 = vrot.slane %v4388, %v4398
    %v4401 = vunpack.c.l.s4 1966171168
    %v4402 = vunpack.c.0.s8 %v4401
    %v4403 = vlaneseq
    %v4404 = vshrl.u32 %v4403, 7
    %v4405 = vsub.s32 %v4402, %v4404
    %v4406 = vrot.slane %v4392, %v4405
    %v4407 = vcombine.high %v4399, %v4399
    %v4408 = vcombine.high %v4406, %v4406
    %v4410 = vunpack.c.l.s4 1966171168
    %v4411 = vunpack.c.0.s8 %v4410
    %v4412 = vlaneseq
    %v4413 = vshrl.u32 %v4412, 7
    %v4414 = vsub.s32 %v4411, %v4413
    %v4415 = vrot.slane %v4399, %v4414
    %v4417 = vunpack.c.l.s4 1966171168
    %v4418 = vunpack.c.0.s8 %v4417
    %v4419 = vlaneseq
    %v4420 = vshrl.u32 %v4419, 7
    %v4421 = vsub.s32 %v4418, %v4420
    %v4422 = vrot.slane %v4406, %v4421
    %v4424 = vunpack.c.l.s4 1966171168
    %v4425 = vunpack.c.0.s8 %v4424
    %v4426 = vlaneseq
    %v4427 = vshrl.u32 %v4426, 7
    %v4428 = vsub.s32 %v4425, %v4427
    %v4429 = vrot.slane %v4407, %v4428
    %v4431 = vunpack.c.l.s4 1966171168
    %v4432 = vunpack.c.0.s8 %v4431
    %v4433 = vlaneseq
    %v4434 = vshrl.u32 %v4433, 7
    %v4435 = vsub.s32 %v4432, %v4434
    %v4436 = vrot.slane %v4408, %v4435
    %v4437 = vcombine.high %v4415, %v4415
    %v4438 = vcombine.high %v4422, %v4422
    %v4439 = vcombine.high %v4429, %v4429
    %v4440 = vcombine.high %v4436, %v4436
    %v4441 = vlaneseq
    %v4442 = vshrl.u32 %v4441, 7
    %v4443 = vsub.s32 0, %v4442
    %v4444 = vrot.slane %v4415, %v4443
    %v4445 = vlaneseq
    %v4446 = vshrl.u32 %v4445, 7
    %v4447 = vsub.s32 0, %v4446
    %v4448 = vrot.slane %v4429, %v4447
    %v4449 = vlaneseq
    %v4450 = vshrl.u32 %v4449, 7
    %v4451 = vsub.s32 0, %v4450
    %v4452 = vrot.slane %v4437, %v4451
    %v4453 = vlaneseq
    %v4454 = vshrl.u32 %v4453, 7
    %v4455 = vsub.s32 0, %v4454
    %v4456 = vrot.slane %v4439, %v4455
    %v4457 = vlaneseq
    %v4458 = vshrl.u32 %v4457, 7
    %v4459 = vsub.s32 0, %v4458
    %v4460 = vrot.slane %v4422, %v4459
    %v4461 = vlaneseq
    %v4462 = vshrl.u32 %v4461, 7
    %v4463 = vsub.s32 0, %v4462
    %v4464 = vrot.slane %v4436, %v4463
    %v4465 = vlaneseq
    %v4466 = vshrl.u32 %v4465, 7
    %v4467 = vsub.s32 0, %v4466
    %v4468 = vrot.slane %v4438, %v4467
    %v4469 = vlaneseq
    %v4470 = vshrl.u32 %v4469, 7
    %v4471 = vsub.s32 0, %v4470
    %v4472 = vrot.slane %v4440, %v4471
    %v4481 = vadd.f32 %v4444, %v247
    %v4482 = vadd.f32 %v4448, %v248
    %v4483 = vadd.f32 %v4452, %v249
    %v4484 = vadd.f32 %v4456, %v250
    %v4485 = vadd.f32 %v4460, %v251
    %v4486 = vadd.f32 %v4464, %v252
    %v4487 = vadd.f32 %v4468, %v253
    %v4488 = vadd.f32 %v4472, %v254
    %v4489 = vtanh.pop %v4481
    %v4490 = vtanh.pop %v4482
    %v4491 = vtanh.pop %v4483
    %v4492 = vtanh.pop %v4484
    %v4493 = vtanh.pop %v4485
    %v4494 = vtanh.pop %v4486
    %v4495 = vtanh.pop %v4487
    %v4496 = vtanh.pop %v4488
    %v4497 = vmul.f32 %v4489, %v673
    %v4498 = vmul.f32 %v4490, %v673
    %v4499 = vmul.f32 %v4491, %v673
    %v4500 = vmul.f32 %v4492, %v673
    %v4501 = vmul.f32 %v4493, %v673
    %v4502 = vmul.f32 %v4494, %v673
    %v4503 = vmul.f32 %v4495, %v673
    %v4504 = vmul.f32 %v4496, %v673
    %4505 = vadd.xlane.f32.xlu0 %v4497
    %v4506 = vpop.xlane.xlu0 %4505
    %4507 = vadd.xlane.f32.xlu0 %v4498
    %v4508 = vpop.xlane.xlu0 %4507
    %4509 = vadd.xlane.f32.xlu0 %v4499
    %v4510 = vpop.xlane.xlu0 %4509
    %4511 = vadd.xlane.f32.xlu0 %v4500
    %v4512 = vpop.xlane.xlu0 %4511
    %4513 = vadd.xlane.f32.xlu0 %v4501
    %v4514 = vpop.xlane.xlu0 %4513
    %4515 = vadd.xlane.f32.xlu0 %v4502
    %v4516 = vpop.xlane.xlu0 %4515
    %4517 = vadd.xlane.f32.xlu0 %v4503
    %v4518 = vpop.xlane.xlu0 %4517
    %4519 = vadd.xlane.f32.xlu0 %v4504
    %v4520 = vpop.xlane.xlu0 %4519
    %v4521 = vmul.f32 %v4506, 1.442695
    %v4522 = vpow.pop %v4521
    %v4523 = vmul.f32 %v4508, 1.442695
    %v4524 = vpow.pop %v4523
    %v4525 = vmul.f32 %v4510, 1.442695
    %v4526 = vpow.pop %v4525
    %v4527 = vmul.f32 %v4512, 1.442695
    %v4528 = vpow.pop %v4527
    %v4529 = vmul.f32 %v4514, 1.442695
    %v4530 = vpow.pop %v4529
    %v4531 = vmul.f32 %v4516, 1.442695
    %v4532 = vpow.pop %v4531
    %v4533 = vmul.f32 %v4518, 1.442695
    %v4534 = vpow.pop %v4533
    %v4535 = vmul.f32 %v4520, 1.442695
    %v4536 = vpow.pop %v4535
    %v4545 = vlaneseq
    %v4546 = vshrl.u32 %v4545, 7
    %v4547 = vsub.s32 %v724, %v4546
    %v4548 = vrot.slane %v4522, %v4547
    %v4549 = vlaneseq
    %v4550 = vshrl.u32 %v4549, 7
    %v4551 = vsub.s32 %v724, %v4550
    %v4552 = vrot.slane %v4524, %v4551
    %v4553 = vlaneseq
    %v4554 = vshrl.u32 %v4553, 7
    %v4555 = vsub.s32 %v724, %v4554
    %v4556 = vrot.slane %v4526, %v4555
    %v4557 = vlaneseq
    %v4558 = vshrl.u32 %v4557, 7
    %v4559 = vsub.s32 %v724, %v4558
    %v4560 = vrot.slane %v4528, %v4559
    %v4561 = vlaneseq
    %v4562 = vshrl.u32 %v4561, 7
    %v4563 = vsub.s32 %v724, %v4562
    %v4564 = vrot.slane %v4530, %v4563
    %v4565 = vlaneseq
    %v4566 = vshrl.u32 %v4565, 7
    %v4567 = vsub.s32 %v724, %v4566
    %v4568 = vrot.slane %v4532, %v4567
    %v4569 = vlaneseq
    %v4570 = vshrl.u32 %v4569, 7
    %v4571 = vsub.s32 %v724, %v4570
    %v4572 = vrot.slane %v4534, %v4571
    %v4573 = vlaneseq
    %v4574 = vshrl.u32 %v4573, 7
    %v4575 = vsub.s32 %v724, %v4574
    %v4576 = vrot.slane %v4536, %v4575
    %v4577 = vsel %vm757, %v4552, %v4548
    %v4578 = vsel %vm759, %v4556, %v4577
    %v4579 = vsel %vm761, %v4560, %v4578
    %v4580 = vsel %vm763, %v4564, %v4579
    %v4581 = vsel %vm765, %v4568, %v4580
    %v4582 = vsel %vm767, %v4572, %v4581
    %v4583 = vsel %vm769, %v4576, %v4582
    %v4585 = vsel %vm772, %v4583, 0.0
    %4586 = vadd.xlane.f32.xlu0 %v4585
    %v4587 = vpop.xlane.xlu0 %4586
    %v4588 = vrcp.pop %v4587
    %v4590 = vlaneseq
    %v4591 = vshrl.u32 %v4590, 7
    %v4592 = vsub.s32 0, %v4591
    %v4593 = vrot.slane %v4588, %v4592
    %v4594 = vlaneseq
    %v4595 = vshrl.u32 %v4594, 7
    %v4596 = vsub.s32 1, %v4595
    %v4597 = vrot.slane %v4588, %v4596
    %v4598 = vlaneseq
    %v4599 = vshrl.u32 %v4598, 7
    %v4600 = vsub.s32 2, %v4599
    %v4601 = vrot.slane %v4588, %v4600
    %v4602 = vlaneseq
    %v4603 = vshrl.u32 %v4602, 7
    %v4604 = vsub.s32 3, %v4603
    %v4605 = vrot.slane %v4588, %v4604
    %v4606 = vlaneseq
    %v4607 = vshrl.u32 %v4606, 7
    %v4608 = vsub.s32 4, %v4607
    %v4609 = vrot.slane %v4588, %v4608
    %v4610 = vlaneseq
    %v4611 = vshrl.u32 %v4610, 7
    %v4612 = vsub.s32 5, %v4611
    %v4613 = vrot.slane %v4588, %v4612
    %v4614 = vlaneseq
    %v4615 = vshrl.u32 %v4614, 7
    %v4616 = vsub.s32 6, %v4615
    %v4617 = vrot.slane %v4588, %v4616
    %v4618 = vlaneseq
    %v4619 = vshrl.u32 %v4618, 7
    %v4620 = vsub.s32 7, %v4619
    %v4621 = vrot.slane %v4588, %v4620
    %v4630 = vmul.f32 %v4522, %v4593
    %v4631 = vmul.f32 %v4524, %v4597
    %v4632 = vmul.f32 %v4526, %v4601
    %v4633 = vmul.f32 %v4528, %v4605
    %v4634 = vmul.f32 %v4530, %v4609
    %v4635 = vmul.f32 %v4532, %v4613
    %v4636 = vmul.f32 %v4534, %v4617
    %v4637 = vmul.f32 %v4536, %v4621
    %4639 = vset.pattern.permute.xlu0 0
    %4640 = vperm.xlu0 %4639, %v4630
    %v4641 = vpop.permute.xlu0 %4640
    %4644 = vset.pattern.permute.xlu0 0
    %4645 = vperm.xlu0 %4644, %v4631
    %v4646 = vpop.permute.xlu0 %4645
    %4649 = vset.pattern.permute.xlu0 0
    %4650 = vperm.xlu0 %4649, %v4632
    %v4651 = vpop.permute.xlu0 %4650
    %4654 = vset.pattern.permute.xlu0 0
    %4655 = vperm.xlu0 %4654, %v4633
    %v4656 = vpop.permute.xlu0 %4655
    %4659 = vset.pattern.permute.xlu0 0
    %4660 = vperm.xlu0 %4659, %v4634
    %v4661 = vpop.permute.xlu0 %4660
    %4664 = vset.pattern.permute.xlu0 0
    %4665 = vperm.xlu0 %4664, %v4635
    %v4666 = vpop.permute.xlu0 %4665
    %4669 = vset.pattern.permute.xlu0 0
    %4670 = vperm.xlu0 %4669, %v4636
    %v4671 = vpop.permute.xlu0 %4670
    %4674 = vset.pattern.permute.xlu0 0
    %4675 = vperm.xlu0 %4674, %v4637
    %v4676 = vpop.permute.xlu0 %4675
    %v4678 = vmul.f32 %v4641, %v105
    %v4679 = vmul.f32 %v4646, %v106
    %v4680 = vmul.f32 %v4651, %v107
    %v4681 = vmul.f32 %v4656, %v108
    %v4682 = vmul.f32 %v4661, %v109
    %v4683 = vmul.f32 %v4666, %v110
    %v4684 = vmul.f32 %v4671, %v111
    %v4685 = vmul.f32 %v4676, %v112
    %v4686 = vrot.slane %v4678, 4
    %v4687 = vadd.f32 %v4678, %v4686
    %v4688 = vrot.slane %v4687, 2
    %v4689 = vadd.f32 %v4687, %v4688
    %v4690 = vrot.slane %v4689, 1
    %v4691 = vadd.f32 %v4689, %v4690
    %v4692 = vrot.slane %v4679, 4
    %v4693 = vadd.f32 %v4679, %v4692
    %v4694 = vrot.slane %v4693, 2
    %v4695 = vadd.f32 %v4693, %v4694
    %v4696 = vrot.slane %v4695, 1
    %v4697 = vadd.f32 %v4695, %v4696
    %v4698 = vrot.slane %v4680, 4
    %v4699 = vadd.f32 %v4680, %v4698
    %v4700 = vrot.slane %v4699, 2
    %v4701 = vadd.f32 %v4699, %v4700
    %v4702 = vrot.slane %v4701, 1
    %v4703 = vadd.f32 %v4701, %v4702
    %v4704 = vrot.slane %v4681, 4
    %v4705 = vadd.f32 %v4681, %v4704
    %v4706 = vrot.slane %v4705, 2
    %v4707 = vadd.f32 %v4705, %v4706
    %v4708 = vrot.slane %v4707, 1
    %v4709 = vadd.f32 %v4707, %v4708
    %v4710 = vrot.slane %v4682, 4
    %v4711 = vadd.f32 %v4682, %v4710
    %v4712 = vrot.slane %v4711, 2
    %v4713 = vadd.f32 %v4711, %v4712
    %v4714 = vrot.slane %v4713, 1
    %v4715 = vadd.f32 %v4713, %v4714
    %v4716 = vrot.slane %v4683, 4
    %v4717 = vadd.f32 %v4683, %v4716
    %v4718 = vrot.slane %v4717, 2
    %v4719 = vadd.f32 %v4717, %v4718
    %v4720 = vrot.slane %v4719, 1
    %v4721 = vadd.f32 %v4719, %v4720
    %v4722 = vrot.slane %v4684, 4
    %v4723 = vadd.f32 %v4684, %v4722
    %v4724 = vrot.slane %v4723, 2
    %v4725 = vadd.f32 %v4723, %v4724
    %v4726 = vrot.slane %v4725, 1
    %v4727 = vadd.f32 %v4725, %v4726
    %v4728 = vrot.slane %v4685, 4
    %v4729 = vadd.f32 %v4685, %v4728
    %v4730 = vrot.slane %v4729, 2
    %v4731 = vadd.f32 %v4729, %v4730
    %v4732 = vrot.slane %v4731, 1
    %v4733 = vadd.f32 %v4731, %v4732
    %v4734 = vmul.f32 %v4691, %v926
    %v4735 = vmul.f32 %v4697, %v926
    %v4736 = vmul.f32 %v4703, %v926
    %v4737 = vmul.f32 %v4709, %v926
    %v4738 = vmul.f32 %v4715, %v926
    %v4739 = vmul.f32 %v4721, %v926
    %v4740 = vmul.f32 %v4727, %v926
    %v4741 = vmul.f32 %v4733, %v926
    %v4750 = vrot.slane %v4735, 7
    %v4751 = vsel %vm757, %v4750, %v4734
    %v4752 = vrot.slane %v4736, 6
    %v4753 = vsel %vm759, %v4752, %v4751
    %v4754 = vrot.slane %v4737, 5
    %v4755 = vsel %vm761, %v4754, %v4753
    %v4756 = vrot.slane %v4738, 4
    %v4757 = vsel %vm763, %v4756, %v4755
    %v4758 = vrot.slane %v4739, 3
    %v4759 = vsel %vm765, %v4758, %v4757
    %v4760 = vrot.slane %v4740, 2
    %v4761 = vsel %vm767, %v4760, %v4759
    %v4762 = vrot.slane %v4741, 1
    %v4763 = vsel %vm769, %v4762, %v4761
    %4765 = vadd.xlane.f32.xlu0 %v4763
    %v4766 = vpop.xlane.xlu0 %4765
    %v4767 = vmul.f32 %v4142, %v961
    %v4768 = vadd.f32 %v4766, %v4767
    %v4769 = vadd.f32 %v4768, %v964
    %v4770 = vmul.f32 %v4769, %v970
    %v4771 = vmul.f32 %v4769, %v974
    %v4772 = vmul.f32 %v4769, %v978
    %v4773 = vmul.f32 %v4769, %v982
    %v4774 = vadd.f32 %v4770, %v4246
    %v4775 = vadd.f32 %v4771, %v4248
    %v4776 = vadd.f32 %v4772, %v4317
    %v4777 = vadd.f32 %v4773, %v4319
    %v4778 = vadd.f32 %v4774, %v999
    %v4779 = vadd.f32 %v4775, %v1003
    %v4780 = vadd.f32 %v4776, %v1007
    %v4781 = vadd.f32 %v4777, %v1011
    %v4782 = vxor.u32 %v4778, 2147483648
    %v4783 = vmul.f32 %v4782, 1.442695
    %v4784 = vpow.pop %v4783
    %v4785 = vadd.f32 %v4784, 1.0
    %v4786 = vrcp.pop %v4785
    %v4787 = vmul.f32 1.0, %v4786
    %v4788 = vxor.u32 %v4779, 2147483648
    %v4789 = vmul.f32 %v4788, 1.442695
    %v4790 = vpow.pop %v4789
    %v4791 = vadd.f32 %v4790, 1.0
    %v4792 = vrcp.pop %v4791
    %v4793 = vmul.f32 1.0, %v4792
    %v4794 = vtanh.pop %v4780
    %v4795 = vxor.u32 %v4781, 2147483648
    %v4796 = vmul.f32 %v4795, 1.442695
    %v4797 = vpow.pop %v4796
    %v4798 = vadd.f32 %v4797, 1.0
    %v4799 = vrcp.pop %v4798
    %v4800 = vmul.f32 1.0, %v4799
    %v4801 = vmul.f32 %v4793, %v4176
    %v4802 = vmul.f32 %v4787, %v4794
    %v4803 = vadd.f32 %v4801, %v4802
    %v4804 = vtanh.pop %v4803
    %v4805 = vmul.f32 %v4800, %v4804
    %4806 = vmatprep.subr.mxu0 %v256
    %4807 = vmatpush1.msra.mxu0 %v255
    %4808 = vmatprep.subr.mxu0 %v260
    %4809 = vmatpush1.msra.mxu0 %v259
    %4810 = vmatprep.subr.mxu0 %v264
    %4811 = vmatpush1.msra.mxu0 %v263
    %4812 = vmatprep.subr.mxu0 %v268
    %4813 = vmatpush1.msra.mxu0 %v267
    %4814 = vmatprep.subr.mxu0 %v272
    %4815 = vmatpush1.msra.mxu0 %v271
    %4816 = vmatprep.subr.mxu0 %v276
    %4817 = vmatpush1.msra.mxu0 %v275
    %4818 = vmatprep.subr.mxu0 %v280
    %4819 = vmatpush1.msra.mxu0 %v279
    %4820 = vmatprep.subr.mxu0 %v284
    %4821 = vmatpush1.msra.mxu0 %v283
    %4822 = vmatprep.subr.mxu0 %v288
    %4823 = vmatpush1.msra.mxu0 %v287
    %4824 = vmatprep.subr.mxu0 %v292
    %4825 = vmatpush1.msra.mxu0 %v291
    %4826 = vmatprep.subr.mxu0 %v296
    %4827 = vmatpush1.msra.mxu0 %v295
    %4828 = vmatprep.subr.mxu0 %v300
    %4829 = vmatpush1.msra.mxu0 %v299
    %4830 = vmatprep.subr.mxu0 %v304
    %4831 = vmatpush1.msra.mxu0 %v303
    %4832 = vmatprep.subr.mxu0 %v308
    %4833 = vmatpush1.msra.mxu0 %v307
    %4834 = vmatprep.subr.mxu0 %v312
    %4835 = vmatpush1.msra.mxu0 %v311
    %4836 = vmatprep.subr.mxu0 %v316
    %4837 = vmatpush1.msra.mxu0 %v315
    %4838 = vmatprep.subr.mxu0 0.0
    %4839 = vmatpush1.msra.mxu0 0.0
    %4840 = vmatprep.subr.mxu0 0.0
    %4841 = vmatpush1.msra.mxu0 0.0
    %4842 = vmatprep.subr.mxu0 0.0
    %4843 = vmatpush1.msra.mxu0 0.0
    %4844 = vmatprep.subr.mxu0 0.0
    %4845 = vmatpush1.msra.mxu0 0.0
    %4846 = vmatprep.subr.mxu0 0.0
    %4847 = vmatpush1.msra.mxu0 0.0
    %4848 = vmatprep.subr.mxu0 0.0
    %4849 = vmatpush1.msra.mxu0 0.0
    %4850 = vmatprep.subr.mxu0 0.0
    %4851 = vmatpush1.msra.mxu0 0.0
    %4852 = vmatprep.subr.mxu0 0.0
    %4853 = vmatpush1.msra.mxu0 0.0
    %4854 = vmatprep.subr.mxu0 0.0
    %4855 = vmatpush1.msra.mxu0 0.0
    %4856 = vmatprep.subr.mxu0 0.0
    %4857 = vmatpush1.msra.mxu0 0.0
    %4858 = vmatprep.subr.mxu0 0.0
    %4859 = vmatpush1.msra.mxu0 0.0
    %4860 = vmatprep.subr.mxu0 0.0
    %4861 = vmatpush1.msra.mxu0 0.0
    %4862 = vmatprep.subr.mxu0 0.0
    %4863 = vmatpush1.msra.mxu0 0.0
    %4864 = vmatprep.subr.mxu0 0.0
    %4865 = vmatpush1.msra.mxu0 0.0
    %4866 = vmatprep.subr.mxu0 0.0
    %4867 = vmatpush1.msra.mxu0 0.0
    %4868 = vmatprep.subr.mxu0 0.0
    %4869 = vmatpush1.msra.mxu0 0.0
    %4870 = vmatprep.mubr.f32.mxu0 0.0
    %4871 = vmatmul.mubr.f32.gmra.mrb[0].mxu0 %v4805
    %v4872 = vpop.f32.mrb[0].mxu0
    %v4873 = vadd.f32 0.0, %v4872
    %v4874 = vpop.f32.mrb[0].mxu0
    %v4875 = vadd.f32 0.0, %v4874
    %4876 = vdwg.mxu0
    %4877 = vmatprep.subr.mxu0 %v258
    %4878 = vmatpush1.msra.mxu0 %v257
    %4879 = vmatprep.subr.mxu0 %v262
    %4880 = vmatpush1.msra.mxu0 %v261
    %4881 = vmatprep.subr.mxu0 %v266
    %4882 = vmatpush1.msra.mxu0 %v265
    %4883 = vmatprep.subr.mxu0 %v270
    %4884 = vmatpush1.msra.mxu0 %v269
    %4885 = vmatprep.subr.mxu0 %v274
    %4886 = vmatpush1.msra.mxu0 %v273
    %4887 = vmatprep.subr.mxu0 %v278
    %4888 = vmatpush1.msra.mxu0 %v277
    %4889 = vmatprep.subr.mxu0 %v282
    %4890 = vmatpush1.msra.mxu0 %v281
    %4891 = vmatprep.subr.mxu0 %v286
    %4892 = vmatpush1.msra.mxu0 %v285
    %4893 = vmatprep.subr.mxu0 %v290
    %4894 = vmatpush1.msra.mxu0 %v289
    %4895 = vmatprep.subr.mxu0 %v294
    %4896 = vmatpush1.msra.mxu0 %v293
    %4897 = vmatprep.subr.mxu0 %v298
    %4898 = vmatpush1.msra.mxu0 %v297
    %4899 = vmatprep.subr.mxu0 %v302
    %4900 = vmatpush1.msra.mxu0 %v301
    %4901 = vmatprep.subr.mxu0 %v306
    %4902 = vmatpush1.msra.mxu0 %v305
    %4903 = vmatprep.subr.mxu0 %v310
    %4904 = vmatpush1.msra.mxu0 %v309
    %4905 = vmatprep.subr.mxu0 %v314
    %4906 = vmatpush1.msra.mxu0 %v313
    %4907 = vmatprep.subr.mxu0 %v318
    %4908 = vmatpush1.msra.mxu0 %v317
    %4909 = vmatprep.subr.mxu0 0.0
    %4910 = vmatpush1.msra.mxu0 0.0
    %4911 = vmatprep.subr.mxu0 0.0
    %4912 = vmatpush1.msra.mxu0 0.0
    %4913 = vmatprep.subr.mxu0 0.0
    %4914 = vmatpush1.msra.mxu0 0.0
    %4915 = vmatprep.subr.mxu0 0.0
    %4916 = vmatpush1.msra.mxu0 0.0
    %4917 = vmatprep.subr.mxu0 0.0
    %4918 = vmatpush1.msra.mxu0 0.0
    %4919 = vmatprep.subr.mxu0 0.0
    %4920 = vmatpush1.msra.mxu0 0.0
    %4921 = vmatprep.subr.mxu0 0.0
    %4922 = vmatpush1.msra.mxu0 0.0
    %4923 = vmatprep.subr.mxu0 0.0
    %4924 = vmatpush1.msra.mxu0 0.0
    %4925 = vmatprep.subr.mxu0 0.0
    %4926 = vmatpush1.msra.mxu0 0.0
    %4927 = vmatprep.subr.mxu0 0.0
    %4928 = vmatpush1.msra.mxu0 0.0
    %4929 = vmatprep.subr.mxu0 0.0
    %4930 = vmatpush1.msra.mxu0 0.0
    %4931 = vmatprep.subr.mxu0 0.0
    %4932 = vmatpush1.msra.mxu0 0.0
    %4933 = vmatprep.subr.mxu0 0.0
    %4934 = vmatpush1.msra.mxu0 0.0
    %4935 = vmatprep.subr.mxu0 0.0
    %4936 = vmatpush1.msra.mxu0 0.0
    %4937 = vmatprep.subr.mxu0 0.0
    %4938 = vmatpush1.msra.mxu0 0.0
    %4939 = vmatprep.subr.mxu0 0.0
    %4940 = vmatpush1.msra.mxu0 0.0
    %4941 = vmatprep.mubr.f32.mxu0 0.0
    %4942 = vmatmul.mubr.f32.gmra.mrb[0].mxu0 %v4805
    %v4943 = vpop.f32.mrb[0].mxu0
    %v4944 = vadd.f32 0.0, %v4943
    %v4945 = vpop.f32.mrb[0].mxu0
    %v4946 = vadd.f32 0.0, %v4945
    %4947 = vdwg.mxu0
    %4948 = vmatprep.subr.mxu0 0.0
    %4949 = vmatpush1.msra.mxu0 %v461
    %4950 = vmatprep.subr.mxu0 0.0
    %4951 = vmatpush1.msra.mxu0 %v462
    %4952 = vmatprep.subr.mxu0 0.0
    %4953 = vmatpush1.msra.mxu0 %v463
    %4954 = vmatprep.subr.mxu0 0.0
    %4955 = vmatpush1.msra.mxu0 %v464
    %4956 = vmatprep.subr.mxu0 0.0
    %4957 = vmatpush1.msra.mxu0 %v465
    %4958 = vmatprep.subr.mxu0 0.0
    %4959 = vmatpush1.msra.mxu0 %v466
    %4960 = vmatprep.subr.mxu0 0.0
    %4961 = vmatpush1.msra.mxu0 %v467
    %4962 = vmatprep.subr.mxu0 0.0
    %4963 = vmatpush1.msra.mxu0 %v468
    %4964 = vmatprep.subr.mxu0 0.0
    %4965 = vmatpush1.msra.mxu0 %v469
    %4966 = vmatprep.subr.mxu0 0.0
    %4967 = vmatpush1.msra.mxu0 %v470
    %4968 = vmatprep.subr.mxu0 0.0
    %4969 = vmatpush1.msra.mxu0 %v471
    %4970 = vmatprep.subr.mxu0 0.0
    %4971 = vmatpush1.msra.mxu0 %v472
    %4972 = vmatprep.subr.mxu0 0.0
    %4973 = vmatpush1.msra.mxu0 %v473
    %4974 = vmatprep.subr.mxu0 0.0
    %4975 = vmatpush1.msra.mxu0 %v474
    %4976 = vmatprep.subr.mxu0 0.0
    %4977 = vmatpush1.msra.mxu0 %v475
    %4978 = vmatprep.subr.mxu0 0.0
    %4979 = vmatpush1.msra.mxu0 %v476
    %4980 = vmatprep.subr.mxu0 0.0
    %4981 = vmatpush1.msra.mxu0 %v477
    %4982 = vmatprep.subr.mxu0 0.0
    %4983 = vmatpush1.msra.mxu0 %v478
    %4984 = vmatprep.subr.mxu0 0.0
    %4985 = vmatpush1.msra.mxu0 %v479
    %4986 = vmatprep.subr.mxu0 0.0
    %4987 = vmatpush1.msra.mxu0 %v480
    %4988 = vmatprep.subr.mxu0 0.0
    %4989 = vmatpush1.msra.mxu0 %v481
    %4990 = vmatprep.subr.mxu0 0.0
    %4991 = vmatpush1.msra.mxu0 %v482
    %4992 = vmatprep.subr.mxu0 0.0
    %4993 = vmatpush1.msra.mxu0 %v483
    %4994 = vmatprep.subr.mxu0 0.0
    %4995 = vmatpush1.msra.mxu0 %v484
    %4996 = vmatprep.subr.mxu0 0.0
    %4997 = vmatpush1.msra.mxu0 %v485
    %4998 = vmatprep.subr.mxu0 0.0
    %4999 = vmatpush1.msra.mxu0 %v486
    %5000 = vmatprep.subr.mxu0 0.0
    %5001 = vmatpush1.msra.mxu0 %v487
    %5002 = vmatprep.subr.mxu0 0.0
    %5003 = vmatpush1.msra.mxu0 %v488
    %5004 = vmatprep.subr.mxu0 0.0
    %5005 = vmatpush1.msra.mxu0 %v489
    %5006 = vmatprep.subr.mxu0 0.0
    %5007 = vmatpush1.msra.mxu0 %v490
    %5008 = vmatprep.subr.mxu0 0.0
    %5009 = vmatpush1.msra.mxu0 %v491
    %5010 = vmatprep.subr.mxu0 0.0
    %5011 = vmatpush1.msra.mxu0 %v492
    %5012 = vmatprep.mubr.f32.mxu0 %v4803
    %5013 = vmatmul.mubr.f32.gmra.mrb[0].mxu0 %v4805
    %v5014 = vpop.f32.mrb[0].mxu0
    %v5015 = vadd.f32 0.0, %v5014
    %v5016 = vpop.f32.mrb[0].mxu0
    %5017 = vdwg.mxu0
    %v5019 = vcombine.high %v5015, %v5015
    %v5021 = vunpack.c.l.s4 1966171168
    %v5022 = vunpack.c.0.s8 %v5021
    %v5023 = vlaneseq
    %v5024 = vshrl.u32 %v5023, 7
    %v5025 = vsub.s32 %v5022, %v5024
    %v5026 = vrot.slane %v5015, %v5025
    %v5028 = vunpack.c.l.s4 1966171168
    %v5029 = vunpack.c.0.s8 %v5028
    %v5030 = vlaneseq
    %v5031 = vshrl.u32 %v5030, 7
    %v5032 = vsub.s32 %v5029, %v5031
    %v5033 = vrot.slane %v5019, %v5032
    %v5034 = vcombine.high %v5026, %v5026
    %v5035 = vcombine.high %v5033, %v5033
    %v5037 = vunpack.c.l.s4 1966171168
    %v5038 = vunpack.c.0.s8 %v5037
    %v5039 = vlaneseq
    %v5040 = vshrl.u32 %v5039, 7
    %v5041 = vsub.s32 %v5038, %v5040
    %v5042 = vrot.slane %v5026, %v5041
    %v5044 = vunpack.c.l.s4 1966171168
    %v5045 = vunpack.c.0.s8 %v5044
    %v5046 = vlaneseq
    %v5047 = vshrl.u32 %v5046, 7
    %v5048 = vsub.s32 %v5045, %v5047
    %v5049 = vrot.slane %v5033, %v5048
    %v5051 = vunpack.c.l.s4 1966171168
    %v5052 = vunpack.c.0.s8 %v5051
    %v5053 = vlaneseq
    %v5054 = vshrl.u32 %v5053, 7
    %v5055 = vsub.s32 %v5052, %v5054
    %v5056 = vrot.slane %v5034, %v5055
    %v5058 = vunpack.c.l.s4 1966171168
    %v5059 = vunpack.c.0.s8 %v5058
    %v5060 = vlaneseq
    %v5061 = vshrl.u32 %v5060, 7
    %v5062 = vsub.s32 %v5059, %v5061
    %v5063 = vrot.slane %v5035, %v5062
    %v5064 = vcombine.high %v5042, %v5042
    %v5065 = vcombine.high %v5049, %v5049
    %v5066 = vcombine.high %v5056, %v5056
    %v5067 = vcombine.high %v5063, %v5063
    %v5068 = vlaneseq
    %v5069 = vshrl.u32 %v5068, 7
    %v5070 = vsub.s32 0, %v5069
    %v5071 = vrot.slane %v5042, %v5070
    %v5072 = vlaneseq
    %v5073 = vshrl.u32 %v5072, 7
    %v5074 = vsub.s32 0, %v5073
    %v5075 = vrot.slane %v5056, %v5074
    %v5076 = vlaneseq
    %v5077 = vshrl.u32 %v5076, 7
    %v5078 = vsub.s32 0, %v5077
    %v5079 = vrot.slane %v5064, %v5078
    %v5080 = vlaneseq
    %v5081 = vshrl.u32 %v5080, 7
    %v5082 = vsub.s32 0, %v5081
    %v5083 = vrot.slane %v5066, %v5082
    %v5084 = vlaneseq
    %v5085 = vshrl.u32 %v5084, 7
    %v5086 = vsub.s32 0, %v5085
    %v5087 = vrot.slane %v5049, %v5086
    %v5088 = vlaneseq
    %v5089 = vshrl.u32 %v5088, 7
    %v5090 = vsub.s32 0, %v5089
    %v5091 = vrot.slane %v5063, %v5090
    %v5092 = vlaneseq
    %v5093 = vshrl.u32 %v5092, 7
    %v5094 = vsub.s32 0, %v5093
    %v5095 = vrot.slane %v5065, %v5094
    %v5096 = vlaneseq
    %v5097 = vshrl.u32 %v5096, 7
    %v5098 = vsub.s32 0, %v5097
    %v5099 = vrot.slane %v5067, %v5098
    %v5108 = vadd.f32 %v5071, %v247
    %v5109 = vadd.f32 %v5075, %v248
    %v5110 = vadd.f32 %v5079, %v249
    %v5111 = vadd.f32 %v5083, %v250
    %v5112 = vadd.f32 %v5087, %v251
    %v5113 = vadd.f32 %v5091, %v252
    %v5114 = vadd.f32 %v5095, %v253
    %v5115 = vadd.f32 %v5099, %v254
    %v5116 = vtanh.pop %v5108
    %v5117 = vtanh.pop %v5109
    %v5118 = vtanh.pop %v5110
    %v5119 = vtanh.pop %v5111
    %v5120 = vtanh.pop %v5112
    %v5121 = vtanh.pop %v5113
    %v5122 = vtanh.pop %v5114
    %v5123 = vtanh.pop %v5115
    %v5124 = vmul.f32 %v5116, %v673
    %v5125 = vmul.f32 %v5117, %v673
    %v5126 = vmul.f32 %v5118, %v673
    %v5127 = vmul.f32 %v5119, %v673
    %v5128 = vmul.f32 %v5120, %v673
    %v5129 = vmul.f32 %v5121, %v673
    %v5130 = vmul.f32 %v5122, %v673
    %v5131 = vmul.f32 %v5123, %v673
    %5132 = vadd.xlane.f32.xlu0 %v5124
    %v5133 = vpop.xlane.xlu0 %5132
    %5134 = vadd.xlane.f32.xlu0 %v5125
    %v5135 = vpop.xlane.xlu0 %5134
    %5136 = vadd.xlane.f32.xlu0 %v5126
    %v5137 = vpop.xlane.xlu0 %5136
    %5138 = vadd.xlane.f32.xlu0 %v5127
    %v5139 = vpop.xlane.xlu0 %5138
    %5140 = vadd.xlane.f32.xlu0 %v5128
    %v5141 = vpop.xlane.xlu0 %5140
    %5142 = vadd.xlane.f32.xlu0 %v5129
    %v5143 = vpop.xlane.xlu0 %5142
    %5144 = vadd.xlane.f32.xlu0 %v5130
    %v5145 = vpop.xlane.xlu0 %5144
    %5146 = vadd.xlane.f32.xlu0 %v5131
    %v5147 = vpop.xlane.xlu0 %5146
    %v5148 = vmul.f32 %v5133, 1.442695
    %v5149 = vpow.pop %v5148
    %v5150 = vmul.f32 %v5135, 1.442695
    %v5151 = vpow.pop %v5150
    %v5152 = vmul.f32 %v5137, 1.442695
    %v5153 = vpow.pop %v5152
    %v5154 = vmul.f32 %v5139, 1.442695
    %v5155 = vpow.pop %v5154
    %v5156 = vmul.f32 %v5141, 1.442695
    %v5157 = vpow.pop %v5156
    %v5158 = vmul.f32 %v5143, 1.442695
    %v5159 = vpow.pop %v5158
    %v5160 = vmul.f32 %v5145, 1.442695
    %v5161 = vpow.pop %v5160
    %v5162 = vmul.f32 %v5147, 1.442695
    %v5163 = vpow.pop %v5162
    %v5172 = vlaneseq
    %v5173 = vshrl.u32 %v5172, 7
    %v5174 = vsub.s32 %v724, %v5173
    %v5175 = vrot.slane %v5149, %v5174
    %v5176 = vlaneseq
    %v5177 = vshrl.u32 %v5176, 7
    %v5178 = vsub.s32 %v724, %v5177
    %v5179 = vrot.slane %v5151, %v5178
    %v5180 = vlaneseq
    %v5181 = vshrl.u32 %v5180, 7
    %v5182 = vsub.s32 %v724, %v5181
    %v5183 = vrot.slane %v5153, %v5182
    %v5184 = vlaneseq
    %v5185 = vshrl.u32 %v5184, 7
    %v5186 = vsub.s32 %v724, %v5185
    %v5187 = vrot.slane %v5155, %v5186
    %v5188 = vlaneseq
    %v5189 = vshrl.u32 %v5188, 7
    %v5190 = vsub.s32 %v724, %v5189
    %v5191 = vrot.slane %v5157, %v5190
    %v5192 = vlaneseq
    %v5193 = vshrl.u32 %v5192, 7
    %v5194 = vsub.s32 %v724, %v5193
    %v5195 = vrot.slane %v5159, %v5194
    %v5196 = vlaneseq
    %v5197 = vshrl.u32 %v5196, 7
    %v5198 = vsub.s32 %v724, %v5197
    %v5199 = vrot.slane %v5161, %v5198
    %v5200 = vlaneseq
    %v5201 = vshrl.u32 %v5200, 7
    %v5202 = vsub.s32 %v724, %v5201
    %v5203 = vrot.slane %v5163, %v5202
    %v5204 = vsel %vm757, %v5179, %v5175
    %v5205 = vsel %vm759, %v5183, %v5204
    %v5206 = vsel %vm761, %v5187, %v5205
    %v5207 = vsel %vm763, %v5191, %v5206
    %v5208 = vsel %vm765, %v5195, %v5207
    %v5209 = vsel %vm767, %v5199, %v5208
    %v5210 = vsel %vm769, %v5203, %v5209
    %v5212 = vsel %vm772, %v5210, 0.0
    %5213 = vadd.xlane.f32.xlu0 %v5212
    %v5214 = vpop.xlane.xlu0 %5213
    %v5215 = vrcp.pop %v5214
    %v5217 = vlaneseq
    %v5218 = vshrl.u32 %v5217, 7
    %v5219 = vsub.s32 0, %v5218
    %v5220 = vrot.slane %v5215, %v5219
    %v5221 = vlaneseq
    %v5222 = vshrl.u32 %v5221, 7
    %v5223 = vsub.s32 1, %v5222
    %v5224 = vrot.slane %v5215, %v5223
    %v5225 = vlaneseq
    %v5226 = vshrl.u32 %v5225, 7
    %v5227 = vsub.s32 2, %v5226
    %v5228 = vrot.slane %v5215, %v5227
    %v5229 = vlaneseq
    %v5230 = vshrl.u32 %v5229, 7
    %v5231 = vsub.s32 3, %v5230
    %v5232 = vrot.slane %v5215, %v5231
    %v5233 = vlaneseq
    %v5234 = vshrl.u32 %v5233, 7
    %v5235 = vsub.s32 4, %v5234
    %v5236 = vrot.slane %v5215, %v5235
    %v5237 = vlaneseq
    %v5238 = vshrl.u32 %v5237, 7
    %v5239 = vsub.s32 5, %v5238
    %v5240 = vrot.slane %v5215, %v5239
    %v5241 = vlaneseq
    %v5242 = vshrl.u32 %v5241, 7
    %v5243 = vsub.s32 6, %v5242
    %v5244 = vrot.slane %v5215, %v5243
    %v5245 = vlaneseq
    %v5246 = vshrl.u32 %v5245, 7
    %v5247 = vsub.s32 7, %v5246
    %v5248 = vrot.slane %v5215, %v5247
    %v5257 = vmul.f32 %v5149, %v5220
    %v5258 = vmul.f32 %v5151, %v5224
    %v5259 = vmul.f32 %v5153, %v5228
    %v5260 = vmul.f32 %v5155, %v5232
    %v5261 = vmul.f32 %v5157, %v5236
    %v5262 = vmul.f32 %v5159, %v5240
    %v5263 = vmul.f32 %v5161, %v5244
    %v5264 = vmul.f32 %v5163, %v5248
    %5266 = vset.pattern.permute.xlu0 0
    %5267 = vperm.xlu0 %5266, %v5257
    %v5268 = vpop.permute.xlu0 %5267
    %5271 = vset.pattern.permute.xlu0 0
    %5272 = vperm.xlu0 %5271, %v5258
    %v5273 = vpop.permute.xlu0 %5272
    %5276 = vset.pattern.permute.xlu0 0
    %5277 = vperm.xlu0 %5276, %v5259
    %v5278 = vpop.permute.xlu0 %5277
    %5281 = vset.pattern.permute.xlu0 0
    %5282 = vperm.xlu0 %5281, %v5260
    %v5283 = vpop.permute.xlu0 %5282
    %5286 = vset.pattern.permute.xlu0 0
    %5287 = vperm.xlu0 %5286, %v5261
    %v5288 = vpop.permute.xlu0 %5287
    %5291 = vset.pattern.permute.xlu0 0
    %5292 = vperm.xlu0 %5291, %v5262
    %v5293 = vpop.permute.xlu0 %5292
    %5296 = vset.pattern.permute.xlu0 0
    %5297 = vperm.xlu0 %5296, %v5263
    %v5298 = vpop.permute.xlu0 %5297
    %5301 = vset.pattern.permute.xlu0 0
    %5302 = vperm.xlu0 %5301, %v5264
    %v5303 = vpop.permute.xlu0 %5302
    %v5305 = vmul.f32 %v5268, %v105
    %v5306 = vmul.f32 %v5273, %v106
    %v5307 = vmul.f32 %v5278, %v107
    %v5308 = vmul.f32 %v5283, %v108
    %v5309 = vmul.f32 %v5288, %v109
    %v5310 = vmul.f32 %v5293, %v110
    %v5311 = vmul.f32 %v5298, %v111
    %v5312 = vmul.f32 %v5303, %v112
    %v5313 = vrot.slane %v5305, 4
    %v5314 = vadd.f32 %v5305, %v5313
    %v5315 = vrot.slane %v5314, 2
    %v5316 = vadd.f32 %v5314, %v5315
    %v5317 = vrot.slane %v5316, 1
    %v5318 = vadd.f32 %v5316, %v5317
    %v5319 = vrot.slane %v5306, 4
    %v5320 = vadd.f32 %v5306, %v5319
    %v5321 = vrot.slane %v5320, 2
    %v5322 = vadd.f32 %v5320, %v5321
    %v5323 = vrot.slane %v5322, 1
    %v5324 = vadd.f32 %v5322, %v5323
    %v5325 = vrot.slane %v5307, 4
    %v5326 = vadd.f32 %v5307, %v5325
    %v5327 = vrot.slane %v5326, 2
    %v5328 = vadd.f32 %v5326, %v5327
    %v5329 = vrot.slane %v5328, 1
    %v5330 = vadd.f32 %v5328, %v5329
    %v5331 = vrot.slane %v5308, 4
    %v5332 = vadd.f32 %v5308, %v5331
    %v5333 = vrot.slane %v5332, 2
    %v5334 = vadd.f32 %v5332, %v5333
    %v5335 = vrot.slane %v5334, 1
    %v5336 = vadd.f32 %v5334, %v5335
    %v5337 = vrot.slane %v5309, 4
    %v5338 = vadd.f32 %v5309, %v5337
    %v5339 = vrot.slane %v5338, 2
    %v5340 = vadd.f32 %v5338, %v5339
    %v5341 = vrot.slane %v5340, 1
    %v5342 = vadd.f32 %v5340, %v5341
    %v5343 = vrot.slane %v5310, 4
    %v5344 = vadd.f32 %v5310, %v5343
    %v5345 = vrot.slane %v5344, 2
    %v5346 = vadd.f32 %v5344, %v5345
    %v5347 = vrot.slane %v5346, 1
    %v5348 = vadd.f32 %v5346, %v5347
    %v5349 = vrot.slane %v5311, 4
    %v5350 = vadd.f32 %v5311, %v5349
    %v5351 = vrot.slane %v5350, 2
    %v5352 = vadd.f32 %v5350, %v5351
    %v5353 = vrot.slane %v5352, 1
    %v5354 = vadd.f32 %v5352, %v5353
    %v5355 = vrot.slane %v5312, 4
    %v5356 = vadd.f32 %v5312, %v5355
    %v5357 = vrot.slane %v5356, 2
    %v5358 = vadd.f32 %v5356, %v5357
    %v5359 = vrot.slane %v5358, 1
    %v5360 = vadd.f32 %v5358, %v5359
    %v5361 = vmul.f32 %v5318, %v926
    %v5362 = vmul.f32 %v5324, %v926
    %v5363 = vmul.f32 %v5330, %v926
    %v5364 = vmul.f32 %v5336, %v926
    %v5365 = vmul.f32 %v5342, %v926
    %v5366 = vmul.f32 %v5348, %v926
    %v5367 = vmul.f32 %v5354, %v926
    %v5368 = vmul.f32 %v5360, %v926
    %v5377 = vrot.slane %v5362, 7
    %v5378 = vsel %vm757, %v5377, %v5361
    %v5379 = vrot.slane %v5363, 6
    %v5380 = vsel %vm759, %v5379, %v5378
    %v5381 = vrot.slane %v5364, 5
    %v5382 = vsel %vm761, %v5381, %v5380
    %v5383 = vrot.slane %v5365, 4
    %v5384 = vsel %vm763, %v5383, %v5382
    %v5385 = vrot.slane %v5366, 3
    %v5386 = vsel %vm765, %v5385, %v5384
    %v5387 = vrot.slane %v5367, 2
    %v5388 = vsel %vm767, %v5387, %v5386
    %v5389 = vrot.slane %v5368, 1
    %v5390 = vsel %vm769, %v5389, %v5388
    %5392 = vadd.xlane.f32.xlu0 %v5390
    %v5393 = vpop.xlane.xlu0 %5392
    %v5394 = vmul.f32 %v4769, %v961
    %v5395 = vadd.f32 %v5393, %v5394
    %v5396 = vadd.f32 %v5395, %v964
    %v5397 = vmul.f32 %v5396, %v970
    %v5398 = vmul.f32 %v5396, %v974
    %v5399 = vmul.f32 %v5396, %v978
    %v5400 = vmul.f32 %v5396, %v982
    %v5401 = vadd.f32 %v5397, %v4873
    %v5402 = vadd.f32 %v5398, %v4875
    %v5403 = vadd.f32 %v5399, %v4944
    %v5404 = vadd.f32 %v5400, %v4946
    %v5405 = vadd.f32 %v5401, %v999
    %v5406 = vadd.f32 %v5402, %v1003
    %v5407 = vadd.f32 %v5403, %v1007
    %v5408 = vadd.f32 %v5404, %v1011
    %v5409 = vxor.u32 %v5405, 2147483648
    %v5410 = vmul.f32 %v5409, 1.442695
    %v5411 = vpow.pop %v5410
    %v5412 = vadd.f32 %v5411, 1.0
    %v5413 = vrcp.pop %v5412
    %v5414 = vmul.f32 1.0, %v5413
    %v5415 = vxor.u32 %v5406, 2147483648
    %v5416 = vmul.f32 %v5415, 1.442695
    %v5417 = vpow.pop %v5416
    %v5418 = vadd.f32 %v5417, 1.0
    %v5419 = vrcp.pop %v5418
    %v5420 = vmul.f32 1.0, %v5419
    %v5421 = vtanh.pop %v5407
    %v5422 = vxor.u32 %v5408, 2147483648
    %v5423 = vmul.f32 %v5422, 1.442695
    %v5424 = vpow.pop %v5423
    %v5425 = vadd.f32 %v5424, 1.0
    %v5426 = vrcp.pop %v5425
    %v5427 = vmul.f32 1.0, %v5426
    %v5428 = vmul.f32 %v5420, %v4803
    %v5429 = vmul.f32 %v5414, %v5421
    %v5430 = vadd.f32 %v5428, %v5429
    %v5431 = vtanh.pop %v5430
    %v5432 = vmul.f32 %v5427, %v5431
    %v5433 = vld [vmem:[%s9] sm:$0x1]
    %v5435 = vlaneseq
    %v5436 = vshrl.u32 %v5435, 7
    %v5437 = vsub.s32 0, %v5436
    %v5438 = vrot.slane %v5433, %v5437
    %v5440 = vmul.f32 %v5432, %v5438
    %5441 = vadd.xlane.f32.xlu0 %v5440
    %v5442 = vpop.xlane.xlu0 %5441
    %v5443 = vld [vmem:[%s10] sm:$0x1]
    %v5445 = vlaneseq
    %v5446 = vshrl.u32 %v5445, 7
    %v5447 = vsub.s32 0, %v5446
    %v5448 = vrot.slane %v5443, %v5447
    %v5450 = vmul.f32 %v5318, %v5448
    %v5451 = vmul.f32 %v5324, %v5448
    %v5452 = vmul.f32 %v5330, %v5448
    %v5453 = vmul.f32 %v5336, %v5448
    %v5454 = vmul.f32 %v5342, %v5448
    %v5455 = vmul.f32 %v5348, %v5448
    %v5456 = vmul.f32 %v5354, %v5448
    %v5457 = vmul.f32 %v5360, %v5448
    %v5466 = vrot.slane %v5451, 7
    %v5467 = vsel %vm757, %v5466, %v5450
    %v5468 = vrot.slane %v5452, 6
    %v5469 = vsel %vm759, %v5468, %v5467
    %v5470 = vrot.slane %v5453, 5
    %v5471 = vsel %vm761, %v5470, %v5469
    %v5472 = vrot.slane %v5454, 4
    %v5473 = vsel %vm763, %v5472, %v5471
    %v5474 = vrot.slane %v5455, 3
    %v5475 = vsel %vm765, %v5474, %v5473
    %v5476 = vrot.slane %v5456, 2
    %v5477 = vsel %vm767, %v5476, %v5475
    %v5478 = vrot.slane %v5457, 1
    %v5479 = vsel %vm769, %v5478, %v5477
    %5481 = vadd.xlane.f32.xlu0 %v5479
    %v5482 = vpop.xlane.xlu0 %5481
    %v5483 = vadd.f32 %v5442, %v5482
    %s5484 = sld [smem:[#allocation4]]
    %v5485 = vstv %s5484
    %v5486 = vadd.f32 %v5483, %v5485
    %vm5487 = vcmask 7168
    %5488 = vst.msk [vmem:[%s14] sm:$0xff] %vm5487, %v5486
    // Predicated region
    $region74: #{tpu_custom_call.1} parent=1 // pred_check
      _
    $region75: #{tpu_custom_call.1} parent=1 // pred_check_branch
      %5490 = sbr.rel (0) target = $region77
    $region76: #{tpu_custom_call.1} parent=1 // pred_region
      _
    $region77: #{tpu_custom_call.1} parent=1 // pred_fallthru
      _
    // Predicated region
    $region78: #{tpu_custom_call.1} parent=1 // pred_check
      _
    $region79: #{tpu_custom_call.1} parent=1 // pred_check_branch
      %5492 = sbr.rel (0) target = $region81
    $region80: #{tpu_custom_call.1} parent=1 // pred_region
      _
    $region81: #{tpu_custom_call.1} parent=1 // pred_fallthru
      _
    %5493 = vsyncpa [#allocation6], 1
    %5494 = vsyncpa [#allocation8], 1
    %5495 = vsyncpa [#allocation11], 1

</llo_original>
